<compile_context>
chip_gen: v6e
topology: v6e:2x2x1
jax: 0.10.0
libtpu: 0.0.40
codegen_flags: <defaults>
</compile_context>

<pallas_src>
import functools

import jax
import jax.numpy as jnp
from jax.experimental import pallas as pl
from jax.experimental.pallas import tpu as pltpu

INPUT_DIM = 16384   # matches the PyTorch module
OUTPUT_DIM = 100


def _linear_kernel(x_ref, w_ref, b_ref, o_ref):
    """Grid = (K-steps,). Accumulate (M, tk) @ (tk, N) into the resident o_ref."""
    k = pl.program_id(0)

    @pl.when(k == 0)
    def _():
        # Fold the bias into the init of the resident output accumulator.
        o_ref[...] = jnp.broadcast_to(b_ref[...], o_ref.shape)

    o_ref[...] += jnp.dot(
        x_ref[...], w_ref[...], preferred_element_type=jnp.float32
    )


@functools.partial(jax.jit, static_argnames=("tk",))
def linear_forward(x, w, b, *, tk=8192):
    """x: (M, K) f32, w: (K, N) f32 (pre-transposed), b: (N,) f32 -> (M, N) f32."""
    M, K = x.shape
    K2, N = w.shape
    assert K == K2

    # Fall back gracefully if tk doesn't divide K (trace-time only).
    while K % tk != 0 and tk > 128:
        tk //= 2
    kb = K // tk

    b2 = b.reshape(1, N)  # (1, N) bias block, resident in VMEM (negligible bytes)

    cost = pl.CostEstimate(
        flops=2 * M * K * N,
        transcendentals=0,
        bytes_accessed=M * K * 4 + K * N * 4 + M * N * 4 + N * 4,
    )

    out = pl.pallas_call(
        _linear_kernel,
        out_shape=jax.ShapeDtypeStruct((M, N), jnp.float32),
        grid=(kb,),
        in_specs=[
            # x tile: all batch rows, one tk-slice of in-features
            pl.BlockSpec((M, tk), lambda k: (0, k)),
            # w tile: tk-slice of in-features, full (unpadded) out-features
            pl.BlockSpec((tk, N), lambda k: (k, 0)),
            # bias: constant-index block, stays resident in VMEM
            pl.BlockSpec((1, N), lambda k: (0, 0)),
        ],
        # Output block resident across the K reduction (accumulator).
        out_specs=pl.BlockSpec((M, N), lambda k: (0, 0)),
        compiler_params=pltpu.CompilerParams(
            dimension_semantics=("arbitrary",),
        ),
        cost_estimate=cost,
    )(x, w, b2)

    return out.astype(x.dtype)


if __name__ == "__main__":
    key = jax.random.PRNGKey(0)
    kx, kw, kb = jax.random.split(key, 3)

    batch = 8
    # Deterministic parameter init (mimics nn.Linear's uniform(-1/sqrt(K), 1/sqrt(K))).
    bound = 1.0 / (INPUT_DIM ** 0.5)
    # PyTorch stores weight as (out, in); we keep the transposed (in, out) layout,
    # prepared once at parameter-prep time (no per-call layout/pad work).
    w = jax.random.uniform(
        kw, (INPUT_DIM, OUTPUT_DIM), jnp.float32, minval=-bound, maxval=bound
    )
    b = jax.random.uniform(
        kb, (OUTPUT_DIM,), jnp.float32, minval=-bound, maxval=bound
    )
    x = jax.random.normal(kx, (batch, INPUT_DIM), jnp.float32)

    out = jax.block_until_ready(linear_forward(x, w, b))

    # Sanity check against plain JAX reference.
    ref = x @ w + b
    assert out.shape == (batch, OUTPUT_DIM)
    assert jnp.allclose(out, ref, atol=2e-4, rtol=2e-4)

    print("KERNEL_OK")
</pallas_src>

<mosaic_0001>
module attributes {stable_mosaic.version = 11 : i64} {
  func.func @_linear_kernel(%arg0: i32, %arg1: memref<8x8192xf32, #tpu.memory_space<vmem>>, %arg2: memref<8192x100xf32, #tpu.memory_space<vmem>>, %arg3: memref<1x100xf32, #tpu.memory_space<vmem>>, %arg4: memref<8x100xf32, #tpu.memory_space<vmem>>) attributes {dimension_semantics = [#tpu.dimension_semantics<arbitrary>], iteration_bounds = array<i64: 2>, scalar_prefetch = 0 : i64, scratch_operands = 0 : i64, tpu.core_type = #tpu.core_type<tc>, window_params = [{transform_indices = @transform_0, window_bounds = array<i64: 8, 8192>}, {transform_indices = @transform_1, window_bounds = array<i64: 8192, 100>}, {pipeline_mode = #tpu.pipeline_mode<synchronous>, transform_indices = @transform_2, window_bounds = array<i64: 1, 100>}, {pipeline_mode = #tpu.pipeline_mode<synchronous>, transform_indices = @transform_3, window_bounds = array<i64: 8, 100>}]} {
    %c0_i32 = arith.constant 0 : i32
    %0 = arith.cmpi eq, %arg0, %c0_i32 : i32
    %1 = arith.extui %0 : i1 to i32
    %c0_i32_0 = arith.constant 0 : i32
    %2 = arith.cmpi ne, %1, %c0_i32_0 : i32
    scf.if %2 {
      %c0_8 = arith.constant 0 : index
      %c0_9 = arith.constant 0 : index
      %9 = vector.load %arg3[%c0_8, %c0_9] : memref<1x100xf32, #tpu.memory_space<vmem>>, vector<1x100xf32>
      %10 = vector.shape_cast %9 : vector<1x100xf32> to vector<1x100xf32>
      %11 = vector.broadcast %10 : vector<1x100xf32> to vector<8x100xf32>
      %c0_10 = arith.constant 0 : index
      %c0_11 = arith.constant 0 : index
      %12 = vector.load %arg4[%c0_10, %c0_11] : memref<8x100xf32, #tpu.memory_space<vmem>>, vector<8x100xf32>
      tpu.vector_store %arg4[%c0_10, %c0_11], %11 {strides = array<i32>} : memref<8x100xf32, #tpu.memory_space<vmem>>, vector<8x100xf32>,
    } else {
    }
    %c0 = arith.constant 0 : index
    %c0_1 = arith.constant 0 : index
    %3 = vector.load %arg4[%c0, %c0_1] : memref<8x100xf32, #tpu.memory_space<vmem>>, vector<8x100xf32>
    %c0_2 = arith.constant 0 : index
    %c0_3 = arith.constant 0 : index
    %4 = vector.load %arg1[%c0_2, %c0_3] : memref<8x8192xf32, #tpu.memory_space<vmem>>, vector<8x8192xf32>
    %c0_4 = arith.constant 0 : index
    %c0_5 = arith.constant 0 : index
    %5 = vector.load %arg2[%c0_4, %c0_5] : memref<8192x100xf32, #tpu.memory_space<vmem>>, vector<8192x100xf32>
    %cst = arith.constant dense<0.000000e+00> : vector<8x100xf32>
    %6 = tpu.matmul %4, %5, %cst {dimension_numbers = #tpu.dot_dimension_numbers<[1], [0], [0], [1], [0, 0, 1, 1], [], []>} : vector<8x8192xf32>, vector<8192x100xf32>, vector<8x100xf32> -> vector<8x100xf32>
    %7 = arith.addf %3, %6 : vector<8x100xf32>
    %c0_6 = arith.constant 0 : index
    %c0_7 = arith.constant 0 : index
    %8 = vector.load %arg4[%c0_6, %c0_7] : memref<8x100xf32, #tpu.memory_space<vmem>>, vector<8x100xf32>
    tpu.vector_store %arg4[%c0_6, %c0_7], %7 {strides = array<i32>} : memref<8x100xf32, #tpu.memory_space<vmem>>, vector<8x100xf32>,
    return
  }
  func.func @transform_0(%arg0: i32) -> (i32, i32) {
    %c0_i32 = arith.constant 0 : i32
    %c0_i32_0 = arith.constant 0 : i32
    return %c0_i32, %arg0 : i32, i32
  }
  func.func @transform_1(%arg0: i32) -> (i32, i32) {
    %c0_i32 = arith.constant 0 : i32
    %c0_i32_0 = arith.constant 0 : i32
    return %arg0, %c0_i32 : i32, i32
  }
  func.func @transform_2(%arg0: i32) -> (i32, i32) {
    %c0_i32 = arith.constant 0 : i32
    %c0_i32_0 = arith.constant 0 : i32
    %c0_i32_1 = arith.constant 0 : i32
    return %c0_i32, %c0_i32_0 : i32, i32
  }
  func.func @transform_3(%arg0: i32) -> (i32, i32) {
    %c0_i32 = arith.constant 0 : i32
    %c0_i32_0 = arith.constant 0 : i32
    %c0_i32_1 = arith.constant 0 : i32
    return %c0_i32, %c0_i32_0 : i32, i32
  }
}

</mosaic_0001>

<llo_original>
// kernel: linear_forward.1
$region0: #{linear_forward.1}
  #allocation0 [shape = 'u32[]', space=smem, size = 0x4, offset = 0x4, fixed_abs, tag = 'smem constant byte address 0x4 - core index']
  #allocation1 [shape = 'u32[144,128]{1,0:T(1,128)}', space=vmem, size = 0x12000, scoped, tag = 'internal scratch']
  %s0 = inlined_call_operand.vmem [shape: f32[8,16384], index: 0, kind: input, shape index: {}]
  %s1 = inlined_call_operand.vmem [shape: f32[16384,100], index: 1, kind: input, shape index: {}]
  %s2 = inlined_call_operand.vmem [shape: f32[1,100], index: 2, kind: input, shape index: {}]
  %s3 = inlined_call_operand.hbm [shape: f32[8,100], index: 3, kind: output, shape index: {}]
  %s4 = sld [smem:[#allocation0]]
  $region49: #{linear_forward.1} parent=0
    _
  %s6 = ssub.s32 1, %s4
  %s7 = scalar_select 0, %s6, %s4
  $region1: #{linear_forward.1} parent=0
    #allocation2 [shape = 'u8[4096]{0}', space=vmem, size = 0x1000, scoped, tag = 'output window, operand 0, single buffered']
    #allocation3 [shape = 's32[2]{0}', space=sflag, size = 0x8, scoped, tag = 'scoped memory for linear_forward.1']
    %8 = vsyncpa [#allocation3], 0
    loop: start=0, step=1, limit=4
    $region2: #{linear_forward.1} parent=1 // loop_pre_header
      _
    $region3: #{linear_forward.1} parent=1 // loop_header
      %s10 = sphi 0, %s14
      %p11 = scmp.ge.s32.totalorder %s10, 4
      %s20 = sphi 0, %s22
      %s23 = sphi 0, %s20
      %s24 = sphi 0, %s23
      %s40 = sphi 0, %s24
      %s46 = sphi 0, %s48
      %s49 = sphi 0, %s46
      %s50 = sphi 0, %s49
      %s66 = sphi 0, %s50
      %s70 = sphi 0, %s70
      %s72 = sphi 0, %s70
      %s73 = sphi 0, %s72
      %s87 = sphi 0, %s73
      %s91 = sphi 0, %s91
      %s93 = sphi 0, %s91
      %s94 = sphi 0, %s93
      %s108 = sphi 0, %s94
    $region4: #{linear_forward.1} parent=1 // loop_header_branch
      %13 = sbr.rel (%p11) target = $region8
    $region5: #{linear_forward.1} parent=1 // loop_body
      %s15 = ssub.s32 %s10, 1
      %s16 = ssub.s32 %s10, 2
      %s17 = sadd.s32 %s10, 1
      %s18 = ssub.s32 %s10, %s17
      %p19 = scmp.eq.s32.totalorder %s18, 0
      %s21 = sadd.s32 %s20, 1
      %s22 = scalar_select %p19, %s20, %s21
      %p25 = pneg %p19
      %p26 = scmp.eq.s32.totalorder %s10, 1
      %p27 = por %p25, %p26
      %p28 = scmp.ne.s32.totalorder %s20, %s23
      %p29 = scmp.eq.s32.totalorder %s10, 0
      %p30 = por %p28, %p29
      %p31 = scmp.ne.s32.totalorder %s20, %s23
      %p32 = scmp.eq.s32.totalorder %s15, 1
      %p33 = por %p31, %p32
      %p34 = scmp.ne.s32.totalorder %s23, %s24
      %p35 = scmp.eq.s32.totalorder %s15, 0
      %p36 = por %p34, %p35
      %p37 = scmp.ne.s32.totalorder %s23, %s24
      %p38 = scmp.eq.s32.totalorder %s16, 1
      %p39 = por %p37, %p38
      %p41 = scmp.ne.s32.totalorder %s24, %s40
      %p42 = scmp.eq.s32.totalorder %s16, 0
      %p43 = por %p41, %p42
      %s44 = ssub.s32 %s10, %s17
      %p45 = scmp.eq.s32.totalorder %s44, 0
      %s47 = sadd.s32 %s46, 1
      %s48 = scalar_select %p45, %s46, %s47
      %p51 = pneg %p45
      %p52 = scmp.eq.s32.totalorder %s10, 1
      %p53 = por %p51, %p52
      %p54 = scmp.ne.s32.totalorder %s46, %s49
      %p55 = scmp.eq.s32.totalorder %s10, 0
      %p56 = por %p54, %p55
      %p57 = scmp.ne.s32.totalorder %s46, %s49
      %p58 = scmp.eq.s32.totalorder %s15, 1
      %p59 = por %p57, %p58
      %p60 = scmp.ne.s32.totalorder %s49, %s50
      %p61 = scmp.eq.s32.totalorder %s15, 0
      %p62 = por %p60, %p61
      %p63 = scmp.ne.s32.totalorder %s49, %s50
      %p64 = scmp.eq.s32.totalorder %s16, 1
      %p65 = por %p63, %p64
      %p67 = scmp.ne.s32.totalorder %s50, %s66
      %p68 = scmp.eq.s32.totalorder %s16, 0
      %p69 = por %p67, %p68
      %s71 = sadd.s32 %s70, 1
      %p74 = scmp.eq.s32.totalorder %s10, 1
      %p75 = scmp.ne.s32.totalorder %s70, %s72
      %p76 = scmp.eq.s32.totalorder %s10, 0
      %p77 = por %p75, %p76
      %p78 = scmp.ne.s32.totalorder %s70, %s72
      %p79 = scmp.eq.s32.totalorder %s15, 1
      %p80 = por %p78, %p79
      %p81 = scmp.ne.s32.totalorder %s72, %s73
      %p82 = scmp.eq.s32.totalorder %s15, 0
      %p83 = por %p81, %p82
      %p84 = scmp.ne.s32.totalorder %s72, %s73
      %p85 = scmp.eq.s32.totalorder %s16, 1
      %p86 = por %p84, %p85
      %p88 = scmp.ne.s32.totalorder %s73, %s87
      %p89 = scmp.eq.s32.totalorder %s16, 0
      %p90 = por %p88, %p89
      %s92 = sadd.s32 %s91, 1
      %p95 = scmp.eq.s32.totalorder %s10, 1
      %p96 = scmp.ne.s32.totalorder %s91, %s93
      %p97 = scmp.eq.s32.totalorder %s10, 0
      %p98 = por %p96, %p97
      %p99 = scmp.ne.s32.totalorder %s91, %s93
      %p100 = scmp.eq.s32.totalorder %s15, 1
      %p101 = por %p99, %p100
      %p102 = scmp.ne.s32.totalorder %s93, %s94
      %p103 = scmp.eq.s32.totalorder %s15, 0
      %p104 = por %p102, %p103
      %p105 = scmp.ne.s32.totalorder %s93, %s94
      %p106 = scmp.eq.s32.totalorder %s16, 1
      %p107 = por %p105, %p106
      %p109 = scmp.ne.s32.totalorder %s94, %s108
      %p110 = scmp.eq.s32.totalorder %s16, 0
      %p111 = por %p109, %p110
      %p112 = scmp.le.s32.totalorder 1, %s10
      %p113 = scmp.lt.s32.totalorder %s10, 3
      %p114 = pnand %p112, %p113
      %p115 = pneg %p114
      // Predicated region
      $region9: #{linear_forward.1} parent=5 // pred_check
        _
      $region10: #{linear_forward.1} parent=5 // pred_check_branch
        %117 = sbr.rel (%p114) target = $region12
      $region11: #{linear_forward.1} parent=5 // pred_region
        %s118 = ssub.s32 %s10, 1
        // Predicated region
        $region13: #{linear_forward.1} parent=11 // pred_check
          %p119 = pneg %p83
        $region14: #{linear_forward.1} parent=11 // pred_check_branch
          %121 = sbr.rel (%p119) target = $region16
        $region15: #{linear_forward.1} parent=11 // pred_region
          _
        $region16: #{linear_forward.1} parent=11 // pred_fallthru
          _
      $region12: #{linear_forward.1} parent=5 // pred_fallthru
        _
      %p122 = scmp.lt.s32.totalorder %s10, 2
      // Predicated region
      $region17: #{linear_forward.1} parent=5 // pred_check
        %p123 = pneg %p122
      $region18: #{linear_forward.1} parent=5 // pred_check_branch
        %125 = sbr.rel (%p123) target = $region20
      $region19: #{linear_forward.1} parent=5 // pred_region
        // Predicated region
        $region21: #{linear_forward.1} parent=19 // pred_check
          %p126 = pneg %p30
        $region22: #{linear_forward.1} parent=19 // pred_check_branch
          %128 = sbr.rel (%p126) target = $region24
        $region23: #{linear_forward.1} parent=19 // pred_region
          %s129 = smul.u32 64, %s10
          %p130 = scmp.lt.s32.totalorder %s129, 127
          %s131 = scalar_select %p130, %s129, 127
          %s132 = smul.addr %s131, 8
          %s133 = scalar_lea.vmem %s0, %s132
          %s134 = smul.u32 64, %s10
        $region24: #{linear_forward.1} parent=19 // pred_fallthru
          _
        // Predicated region
        $region25: #{linear_forward.1} parent=19 // pred_check
          %p135 = pneg %p56
        $region26: #{linear_forward.1} parent=19 // pred_check_branch
          %137 = sbr.rel (%p135) target = $region28
        $region27: #{linear_forward.1} parent=19 // pred_region
          %s138 = smul.u32 1024, %s10
          %p139 = scmp.lt.s32.totalorder %s138, 2047
          %s140 = scalar_select %p139, %s138, 2047
          %s141 = smul.addr %s140, 8
          %s142 = scalar_lea.vmem %s1, %s141
          %s143 = smul.u32 1024, %s10
        $region28: #{linear_forward.1} parent=19 // pred_fallthru
          _
      $region20: #{linear_forward.1} parent=5 // pred_fallthru
        _
      %p144 = scmp.le.s32.totalorder 1, %s10
      %p145 = scmp.lt.s32.totalorder %s10, 3
      %p146 = pnand %p144, %p145
      %p147 = pneg %p146
      // Predicated region
      $region29: #{linear_forward.1} parent=5 // pred_check
        _
      $region30: #{linear_forward.1} parent=5 // pred_check_branch
        %149 = sbr.rel (%p146) target = $region32
      $region31: #{linear_forward.1} parent=5 // pred_region
        %s150 = ssub.s32 %s10, 1
        %s151 = smul.u32 64, %s15
        %p152 = scmp.lt.s32.totalorder %s151, 127
        %s153 = scalar_select %p152, %s151, 127
        %s154 = smul.addr %s153, 8
        %s155 = scalar_lea.vmem %s0, %s154
        %p156 = pneg %p36
        %p157 = pneg %p33
        %s158 = smul.u32 1024, %s15
        %p159 = scmp.lt.s32.totalorder %s158, 2047
        %s160 = scalar_select %p159, %s158, 2047
        %s161 = smul.addr %s160, 8
        %s162 = scalar_lea.vmem %s1, %s161
        %p163 = pneg %p62
        %p164 = pneg %p59
        %p165 = pneg %p83
        %p166 = pneg %p80
        %p167 = pneg %p104
        %p168 = pneg %p101
        %s169 = smul.u32 64, %s15
        %p170 = scmp.lt.s32.totalorder %s169, 127
        %s171 = scalar_select %p170, %s169, 127
        %s172 = smul.addr %s171, 8
        %s173 = scalar_lea.vmem %s0, %s172
        %s174 = smul.u32 64, %s15
        %s175 = smul.u32 1024, %s15
        %p176 = scmp.lt.s32.totalorder %s175, 2047
        %s177 = scalar_select %p176, %s175, 2047
        %s178 = smul.addr %s177, 8
        %s179 = scalar_lea.vmem %s1, %s178
        %s180 = smul.u32 1024, %s15
        %p181 = scmp.eq.s32.totalorder %s15, 0
        // Predicated region
        $region33: #{linear_forward.1} parent=31 // pred_check
          %p182 = pneg %p181
        $region34: #{linear_forward.1} parent=31 // pred_check_branch
          %184 = sbr.rel (%p182) target = $region36
        $region35: #{linear_forward.1} parent=31 // pred_region
          %v185 = vld [vmem:[%s2] sm:$0x1]
          %v187 = vlaneseq
          %v188 = vshrl.u32 %v187, 7
          %v189 = vsub.s32 0, %v188
          %v190 = vrot.slane %v185, %v189
          %vm192 = vcmask 818176
          %193 = vst.msk [vmem:[#allocation2] sm:$0xff] %vm192, %v190
        $region36: #{linear_forward.1} parent=31 // pred_fallthru
          _
        %v194 = vld [vmem:[#allocation2] sm:$0xff]
        %v195 = vld [vmem:[%s173] sm:$0xff]
        %v196 = vld [vmem:[%s173 + $0x8] sm:$0xff]
        %v197 = vld [vmem:[%s173 + $0x10] sm:$0xff]
        %v198 = vld [vmem:[%s173 + $0x18] sm:$0xff]
        %v199 = vld [vmem:[%s173 + $0x20] sm:$0xff]
        %v200 = vld [vmem:[%s173 + $0x28] sm:$0xff]
        %v201 = vld [vmem:[%s173 + $0x30] sm:$0xff]
        %v202 = vld [vmem:[%s173 + $0x38] sm:$0xff]
        %v203 = vld [vmem:[%s173 + $0x40] sm:$0xff]
        %v204 = vld [vmem:[%s173 + $0x48] sm:$0xff]
        %v205 = vld [vmem:[%s173 + $0x50] sm:$0xff]
        %v206 = vld [vmem:[%s173 + $0x58] sm:$0xff]
        %v207 = vld [vmem:[%s173 + $0x60] sm:$0xff]
        %v208 = vld [vmem:[%s173 + $0x68] sm:$0xff]
        %v209 = vld [vmem:[%s173 + $0x70] sm:$0xff]
        %v210 = vld [vmem:[%s173 + $0x78] sm:$0xff]
        %v211 = vld [vmem:[%s173 + $0x80] sm:$0xff]
        %v212 = vld [vmem:[%s173 + $0x88] sm:$0xff]
        %v213 = vld [vmem:[%s173 + $0x90] sm:$0xff]
        %v214 = vld [vmem:[%s173 + $0x98] sm:$0xff]
        %v215 = vld [vmem:[%s173 + $0xa0] sm:$0xff]
        %v216 = vld [vmem:[%s173 + $0xa8] sm:$0xff]
        %v217 = vld [vmem:[%s173 + $0xb0] sm:$0xff]
        %v218 = vld [vmem:[%s173 + $0xb8] sm:$0xff]
        %v219 = vld [vmem:[%s173 + $0xc0] sm:$0xff]
        %v220 = vld [vmem:[%s173 + $0xc8] sm:$0xff]
        %v221 = vld [vmem:[%s173 + $0xd0] sm:$0xff]
        %v222 = vld [vmem:[%s173 + $0xd8] sm:$0xff]
        %v223 = vld [vmem:[%s173 + $0xe0] sm:$0xff]
        %v224 = vld [vmem:[%s173 + $0xe8] sm:$0xff]
        %v225 = vld [vmem:[%s173 + $0xf0] sm:$0xff]
        %v226 = vld [vmem:[%s173 + $0xf8] sm:$0xff]
        %v227 = vld [vmem:[%s173 + $0x100] sm:$0xff]
        %v228 = vld [vmem:[%s173 + $0x108] sm:$0xff]
        %v229 = vld [vmem:[%s173 + $0x110] sm:$0xff]
        %v230 = vld [vmem:[%s173 + $0x118] sm:$0xff]
        %v231 = vld [vmem:[%s173 + $0x120] sm:$0xff]
        %v232 = vld [vmem:[%s173 + $0x128] sm:$0xff]
        %v233 = vld [vmem:[%s173 + $0x130] sm:$0xff]
        %v234 = vld [vmem:[%s173 + $0x138] sm:$0xff]
        %v235 = vld [vmem:[%s173 + $0x140] sm:$0xff]
        %v236 = vld [vmem:[%s173 + $0x148] sm:$0xff]
        %v237 = vld [vmem:[%s173 + $0x150] sm:$0xff]
        %v238 = vld [vmem:[%s173 + $0x158] sm:$0xff]
        %v239 = vld [vmem:[%s173 + $0x160] sm:$0xff]
        %v240 = vld [vmem:[%s173 + $0x168] sm:$0xff]
        %v241 = vld [vmem:[%s173 + $0x170] sm:$0xff]
        %v242 = vld [vmem:[%s173 + $0x178] sm:$0xff]
        %v243 = vld [vmem:[%s173 + $0x180] sm:$0xff]
        %v244 = vld [vmem:[%s173 + $0x188] sm:$0xff]
        %v245 = vld [vmem:[%s173 + $0x190] sm:$0xff]
        %v246 = vld [vmem:[%s173 + $0x198] sm:$0xff]
        %v247 = vld [vmem:[%s173 + $0x1a0] sm:$0xff]
        %v248 = vld [vmem:[%s173 + $0x1a8] sm:$0xff]
        %v249 = vld [vmem:[%s173 + $0x1b0] sm:$0xff]
        %v250 = vld [vmem:[%s173 + $0x1b8] sm:$0xff]
        %v251 = vld [vmem:[%s173 + $0x1c0] sm:$0xff]
        %v252 = vld [vmem:[%s173 + $0x1c8] sm:$0xff]
        %v253 = vld [vmem:[%s173 + $0x1d0] sm:$0xff]
        %v254 = vld [vmem:[%s173 + $0x1d8] sm:$0xff]
        %v255 = vld [vmem:[%s173 + $0x1e0] sm:$0xff]
        %v256 = vld [vmem:[%s173 + $0x1e8] sm:$0xff]
        %v257 = vld [vmem:[%s173 + $0x1f0] sm:$0xff]
        %v258 = vld [vmem:[%s173 + $0x1f8] sm:$0xff]
        %v259 = vld [vmem:[%s179] sm:$0xff]
        %v260 = vld [vmem:[%s179 + $0x8] sm:$0xff]
        %v261 = vld [vmem:[%s179 + $0x10] sm:$0xff]
        %v262 = vld [vmem:[%s179 + $0x18] sm:$0xff]
        %v263 = vld [vmem:[%s179 + $0x20] sm:$0xff]
        %v264 = vld [vmem:[%s179 + $0x28] sm:$0xff]
        %v265 = vld [vmem:[%s179 + $0x30] sm:$0xff]
        %v266 = vld [vmem:[%s179 + $0x38] sm:$0xff]
        %v267 = vld [vmem:[%s179 + $0x40] sm:$0xff]
        %v268 = vld [vmem:[%s179 + $0x48] sm:$0xff]
        %v269 = vld [vmem:[%s179 + $0x50] sm:$0xff]
        %v270 = vld [vmem:[%s179 + $0x58] sm:$0xff]
        %v271 = vld [vmem:[%s179 + $0x60] sm:$0xff]
        %v272 = vld [vmem:[%s179 + $0x68] sm:$0xff]
        %v273 = vld [vmem:[%s179 + $0x70] sm:$0xff]
        %v274 = vld [vmem:[%s179 + $0x78] sm:$0xff]
        %v275 = vld [vmem:[%s179 + $0x80] sm:$0xff]
        %v276 = vld [vmem:[%s179 + $0x88] sm:$0xff]
        %v277 = vld [vmem:[%s179 + $0x90] sm:$0xff]
        %v278 = vld [vmem:[%s179 + $0x98] sm:$0xff]
        %v279 = vld [vmem:[%s179 + $0xa0] sm:$0xff]
        %v280 = vld [vmem:[%s179 + $0xa8] sm:$0xff]
        %v281 = vld [vmem:[%s179 + $0xb0] sm:$0xff]
        %v282 = vld [vmem:[%s179 + $0xb8] sm:$0xff]
        %v283 = vld [vmem:[%s179 + $0xc0] sm:$0xff]
        %v284 = vld [vmem:[%s179 + $0xc8] sm:$0xff]
        %v285 = vld [vmem:[%s179 + $0xd0] sm:$0xff]
        %v286 = vld [vmem:[%s179 + $0xd8] sm:$0xff]
        %v287 = vld [vmem:[%s179 + $0xe0] sm:$0xff]
        %v288 = vld [vmem:[%s179 + $0xe8] sm:$0xff]
        %v289 = vld [vmem:[%s179 + $0xf0] sm:$0xff]
        %v290 = vld [vmem:[%s179 + $0xf8] sm:$0xff]
        %v291 = vld [vmem:[%s179 + $0x100] sm:$0xff]
        %v292 = vld [vmem:[%s179 + $0x108] sm:$0xff]
        %v293 = vld [vmem:[%s179 + $0x110] sm:$0xff]
        %v294 = vld [vmem:[%s179 + $0x118] sm:$0xff]
        %v295 = vld [vmem:[%s179 + $0x120] sm:$0xff]
        %v296 = vld [vmem:[%s179 + $0x128] sm:$0xff]
        %v297 = vld [vmem:[%s179 + $0x130] sm:$0xff]
        %v298 = vld [vmem:[%s179 + $0x138] sm:$0xff]
        %v299 = vld [vmem:[%s179 + $0x140] sm:$0xff]
        %v300 = vld [vmem:[%s179 + $0x148] sm:$0xff]
        %v301 = vld [vmem:[%s179 + $0x150] sm:$0xff]
        %v302 = vld [vmem:[%s179 + $0x158] sm:$0xff]
        %v303 = vld [vmem:[%s179 + $0x160] sm:$0xff]
        %v304 = vld [vmem:[%s179 + $0x168] sm:$0xff]
        %v305 = vld [vmem:[%s179 + $0x170] sm:$0xff]
        %v306 = vld [vmem:[%s179 + $0x178] sm:$0xff]
        %v307 = vld [vmem:[%s179 + $0x180] sm:$0xff]
        %v308 = vld [vmem:[%s179 + $0x188] sm:$0xff]
        %v309 = vld [vmem:[%s179 + $0x190] sm:$0xff]
        %v310 = vld [vmem:[%s179 + $0x198] sm:$0xff]
        %v311 = vld [vmem:[%s179 + $0x1a0] sm:$0xff]
        %v312 = vld [vmem:[%s179 + $0x1a8] sm:$0xff]
        %v313 = vld [vmem:[%s179 + $0x1b0] sm:$0xff]
        %v314 = vld [vmem:[%s179 + $0x1b8] sm:$0xff]
        %v315 = vld [vmem:[%s179 + $0x1c0] sm:$0xff]
        %v316 = vld [vmem:[%s179 + $0x1c8] sm:$0xff]
        %v317 = vld [vmem:[%s179 + $0x1d0] sm:$0xff]
        %v318 = vld [vmem:[%s179 + $0x1d8] sm:$0xff]
        %v319 = vld [vmem:[%s179 + $0x1e0] sm:$0xff]
        %v320 = vld [vmem:[%s179 + $0x1e8] sm:$0xff]
        %v321 = vld [vmem:[%s179 + $0x1f0] sm:$0xff]
        %v322 = vld [vmem:[%s179 + $0x1f8] sm:$0xff]
        %v323 = vld [vmem:[%s179 + $0x200] sm:$0xff]
        %v324 = vld [vmem:[%s179 + $0x208] sm:$0xff]
        %v325 = vld [vmem:[%s179 + $0x210] sm:$0xff]
        %v326 = vld [vmem:[%s179 + $0x218] sm:$0xff]
        %v327 = vld [vmem:[%s179 + $0x220] sm:$0xff]
        %v328 = vld [vmem:[%s179 + $0x228] sm:$0xff]
        %v329 = vld [vmem:[%s179 + $0x230] sm:$0xff]
        %v330 = vld [vmem:[%s179 + $0x238] sm:$0xff]
        %v331 = vld [vmem:[%s179 + $0x240] sm:$0xff]
        %v332 = vld [vmem:[%s179 + $0x248] sm:$0xff]
        %v333 = vld [vmem:[%s179 + $0x250] sm:$0xff]
        %v334 = vld [vmem:[%s179 + $0x258] sm:$0xff]
        %v335 = vld [vmem:[%s179 + $0x260] sm:$0xff]
        %v336 = vld [vmem:[%s179 + $0x268] sm:$0xff]
        %v337 = vld [vmem:[%s179 + $0x270] sm:$0xff]
        %v338 = vld [vmem:[%s179 + $0x278] sm:$0xff]
        %v339 = vld [vmem:[%s179 + $0x280] sm:$0xff]
        %v340 = vld [vmem:[%s179 + $0x288] sm:$0xff]
        %v341 = vld [vmem:[%s179 + $0x290] sm:$0xff]
        %v342 = vld [vmem:[%s179 + $0x298] sm:$0xff]
        %v343 = vld [vmem:[%s179 + $0x2a0] sm:$0xff]
        %v344 = vld [vmem:[%s179 + $0x2a8] sm:$0xff]
        %v345 = vld [vmem:[%s179 + $0x2b0] sm:$0xff]
        %v346 = vld [vmem:[%s179 + $0x2b8] sm:$0xff]
        %v347 = vld [vmem:[%s179 + $0x2c0] sm:$0xff]
        %v348 = vld [vmem:[%s179 + $0x2c8] sm:$0xff]
        %v349 = vld [vmem:[%s179 + $0x2d0] sm:$0xff]
        %v350 = vld [vmem:[%s179 + $0x2d8] sm:$0xff]
        %v351 = vld [vmem:[%s179 + $0x2e0] sm:$0xff]
        %v352 = vld [vmem:[%s179 + $0x2e8] sm:$0xff]
        %v353 = vld [vmem:[%s179 + $0x2f0] sm:$0xff]
        %v354 = vld [vmem:[%s179 + $0x2f8] sm:$0xff]
        %v355 = vld [vmem:[%s179 + $0x300] sm:$0xff]
        %v356 = vld [vmem:[%s179 + $0x308] sm:$0xff]
        %v357 = vld [vmem:[%s179 + $0x310] sm:$0xff]
        %v358 = vld [vmem:[%s179 + $0x318] sm:$0xff]
        %v359 = vld [vmem:[%s179 + $0x320] sm:$0xff]
        %v360 = vld [vmem:[%s179 + $0x328] sm:$0xff]
        %v361 = vld [vmem:[%s179 + $0x330] sm:$0xff]
        %v362 = vld [vmem:[%s179 + $0x338] sm:$0xff]
        %v363 = vld [vmem:[%s179 + $0x340] sm:$0xff]
        %v364 = vld [vmem:[%s179 + $0x348] sm:$0xff]
        %v365 = vld [vmem:[%s179 + $0x350] sm:$0xff]
        %v366 = vld [vmem:[%s179 + $0x358] sm:$0xff]
        %v367 = vld [vmem:[%s179 + $0x360] sm:$0xff]
        %v368 = vld [vmem:[%s179 + $0x368] sm:$0xff]
        %v369 = vld [vmem:[%s179 + $0x370] sm:$0xff]
        %v370 = vld [vmem:[%s179 + $0x378] sm:$0xff]
        %v371 = vld [vmem:[%s179 + $0x380] sm:$0xff]
        %v372 = vld [vmem:[%s179 + $0x388] sm:$0xff]
        %v373 = vld [vmem:[%s179 + $0x390] sm:$0xff]
        %v374 = vld [vmem:[%s179 + $0x398] sm:$0xff]
        %v375 = vld [vmem:[%s179 + $0x3a0] sm:$0xff]
        %v376 = vld [vmem:[%s179 + $0x3a8] sm:$0xff]
        %v377 = vld [vmem:[%s179 + $0x3b0] sm:$0xff]
        %v378 = vld [vmem:[%s179 + $0x3b8] sm:$0xff]
        %v379 = vld [vmem:[%s179 + $0x3c0] sm:$0xff]
        %v380 = vld [vmem:[%s179 + $0x3c8] sm:$0xff]
        %v381 = vld [vmem:[%s179 + $0x3d0] sm:$0xff]
        %v382 = vld [vmem:[%s179 + $0x3d8] sm:$0xff]
        %v383 = vld [vmem:[%s179 + $0x3e0] sm:$0xff]
        %v384 = vld [vmem:[%s179 + $0x3e8] sm:$0xff]
        %v385 = vld [vmem:[%s179 + $0x3f0] sm:$0xff]
        %v386 = vld [vmem:[%s179 + $0x3f8] sm:$0xff]
        %v387 = vld [vmem:[%s179 + $0x400] sm:$0xff]
        %v388 = vld [vmem:[%s179 + $0x408] sm:$0xff]
        %v389 = vld [vmem:[%s179 + $0x410] sm:$0xff]
        %v390 = vld [vmem:[%s179 + $0x418] sm:$0xff]
        %v391 = vld [vmem:[%s179 + $0x420] sm:$0xff]
        %v392 = vld [vmem:[%s179 + $0x428] sm:$0xff]
        %v393 = vld [vmem:[%s179 + $0x430] sm:$0xff]
        %v394 = vld [vmem:[%s179 + $0x438] sm:$0xff]
        %v395 = vld [vmem:[%s179 + $0x440] sm:$0xff]
        %v396 = vld [vmem:[%s179 + $0x448] sm:$0xff]
        %v397 = vld [vmem:[%s179 + $0x450] sm:$0xff]
        %v398 = vld [vmem:[%s179 + $0x458] sm:$0xff]
        %v399 = vld [vmem:[%s179 + $0x460] sm:$0xff]
        %v400 = vld [vmem:[%s179 + $0x468] sm:$0xff]
        %v401 = vld [vmem:[%s179 + $0x470] sm:$0xff]
        %v402 = vld [vmem:[%s179 + $0x478] sm:$0xff]
        %v403 = vld [vmem:[%s179 + $0x480] sm:$0xff]
        %v404 = vld [vmem:[%s179 + $0x488] sm:$0xff]
        %v405 = vld [vmem:[%s179 + $0x490] sm:$0xff]
        %v406 = vld [vmem:[%s179 + $0x498] sm:$0xff]
        %v407 = vld [vmem:[%s179 + $0x4a0] sm:$0xff]
        %v408 = vld [vmem:[%s179 + $0x4a8] sm:$0xff]
        %v409 = vld [vmem:[%s179 + $0x4b0] sm:$0xff]
        %v410 = vld [vmem:[%s179 + $0x4b8] sm:$0xff]
        %v411 = vld [vmem:[%s179 + $0x4c0] sm:$0xff]
        %v412 = vld [vmem:[%s179 + $0x4c8] sm:$0xff]
        %v413 = vld [vmem:[%s179 + $0x4d0] sm:$0xff]
        %v414 = vld [vmem:[%s179 + $0x4d8] sm:$0xff]
        %v415 = vld [vmem:[%s179 + $0x4e0] sm:$0xff]
        %v416 = vld [vmem:[%s179 + $0x4e8] sm:$0xff]
        %v417 = vld [vmem:[%s179 + $0x4f0] sm:$0xff]
        %v418 = vld [vmem:[%s179 + $0x4f8] sm:$0xff]
        %v419 = vld [vmem:[%s179 + $0x500] sm:$0xff]
        %v420 = vld [vmem:[%s179 + $0x508] sm:$0xff]
        %v421 = vld [vmem:[%s179 + $0x510] sm:$0xff]
        %v422 = vld [vmem:[%s179 + $0x518] sm:$0xff]
        %v423 = vld [vmem:[%s179 + $0x520] sm:$0xff]
        %v424 = vld [vmem:[%s179 + $0x528] sm:$0xff]
        %v425 = vld [vmem:[%s179 + $0x530] sm:$0xff]
        %v426 = vld [vmem:[%s179 + $0x538] sm:$0xff]
        %v427 = vld [vmem:[%s179 + $0x540] sm:$0xff]
        %v428 = vld [vmem:[%s179 + $0x548] sm:$0xff]
        %v429 = vld [vmem:[%s179 + $0x550] sm:$0xff]
        %v430 = vld [vmem:[%s179 + $0x558] sm:$0xff]
        %v431 = vld [vmem:[%s179 + $0x560] sm:$0xff]
        %v432 = vld [vmem:[%s179 + $0x568] sm:$0xff]
        %v433 = vld [vmem:[%s179 + $0x570] sm:$0xff]
        %v434 = vld [vmem:[%s179 + $0x578] sm:$0xff]
        %v435 = vld [vmem:[%s179 + $0x580] sm:$0xff]
        %v436 = vld [vmem:[%s179 + $0x588] sm:$0xff]
        %v437 = vld [vmem:[%s179 + $0x590] sm:$0xff]
        %v438 = vld [vmem:[%s179 + $0x598] sm:$0xff]
        %v439 = vld [vmem:[%s179 + $0x5a0] sm:$0xff]
        %v440 = vld [vmem:[%s179 + $0x5a8] sm:$0xff]
        %v441 = vld [vmem:[%s179 + $0x5b0] sm:$0xff]
        %v442 = vld [vmem:[%s179 + $0x5b8] sm:$0xff]
        %v443 = vld [vmem:[%s179 + $0x5c0] sm:$0xff]
        %v444 = vld [vmem:[%s179 + $0x5c8] sm:$0xff]
        %v445 = vld [vmem:[%s179 + $0x5d0] sm:$0xff]
        %v446 = vld [vmem:[%s179 + $0x5d8] sm:$0xff]
        %v447 = vld [vmem:[%s179 + $0x5e0] sm:$0xff]
        %v448 = vld [vmem:[%s179 + $0x5e8] sm:$0xff]
        %v449 = vld [vmem:[%s179 + $0x5f0] sm:$0xff]
        %v450 = vld [vmem:[%s179 + $0x5f8] sm:$0xff]
        %v451 = vld [vmem:[%s179 + $0x600] sm:$0xff]
        %v452 = vld [vmem:[%s179 + $0x608] sm:$0xff]
        %v453 = vld [vmem:[%s179 + $0x610] sm:$0xff]
        %v454 = vld [vmem:[%s179 + $0x618] sm:$0xff]
        %v455 = vld [vmem:[%s179 + $0x620] sm:$0xff]
        %v456 = vld [vmem:[%s179 + $0x628] sm:$0xff]
        %v457 = vld [vmem:[%s179 + $0x630] sm:$0xff]
        %v458 = vld [vmem:[%s179 + $0x638] sm:$0xff]
        %v459 = vld [vmem:[%s179 + $0x640] sm:$0xff]
        %v460 = vld [vmem:[%s179 + $0x648] sm:$0xff]
        %v461 = vld [vmem:[%s179 + $0x650] sm:$0xff]
        %v462 = vld [vmem:[%s179 + $0x658] sm:$0xff]
        %v463 = vld [vmem:[%s179 + $0x660] sm:$0xff]
        %v464 = vld [vmem:[%s179 + $0x668] sm:$0xff]
        %v465 = vld [vmem:[%s179 + $0x670] sm:$0xff]
        %v466 = vld [vmem:[%s179 + $0x678] sm:$0xff]
        %v467 = vld [vmem:[%s179 + $0x680] sm:$0xff]
        %v468 = vld [vmem:[%s179 + $0x688] sm:$0xff]
        %v469 = vld [vmem:[%s179 + $0x690] sm:$0xff]
        %v470 = vld [vmem:[%s179 + $0x698] sm:$0xff]
        %v471 = vld [vmem:[%s179 + $0x6a0] sm:$0xff]
        %v472 = vld [vmem:[%s179 + $0x6a8] sm:$0xff]
        %v473 = vld [vmem:[%s179 + $0x6b0] sm:$0xff]
        %v474 = vld [vmem:[%s179 + $0x6b8] sm:$0xff]
        %v475 = vld [vmem:[%s179 + $0x6c0] sm:$0xff]
        %v476 = vld [vmem:[%s179 + $0x6c8] sm:$0xff]
        %v477 = vld [vmem:[%s179 + $0x6d0] sm:$0xff]
        %v478 = vld [vmem:[%s179 + $0x6d8] sm:$0xff]
        %v479 = vld [vmem:[%s179 + $0x6e0] sm:$0xff]
        %v480 = vld [vmem:[%s179 + $0x6e8] sm:$0xff]
        %v481 = vld [vmem:[%s179 + $0x6f0] sm:$0xff]
        %v482 = vld [vmem:[%s179 + $0x6f8] sm:$0xff]
        %v483 = vld [vmem:[%s179 + $0x700] sm:$0xff]
        %v484 = vld [vmem:[%s179 + $0x708] sm:$0xff]
        %v485 = vld [vmem:[%s179 + $0x710] sm:$0xff]
        %v486 = vld [vmem:[%s179 + $0x718] sm:$0xff]
        %v487 = vld [vmem:[%s179 + $0x720] sm:$0xff]
        %v488 = vld [vmem:[%s179 + $0x728] sm:$0xff]
        %v489 = vld [vmem:[%s179 + $0x730] sm:$0xff]
        %v490 = vld [vmem:[%s179 + $0x738] sm:$0xff]
        %v491 = vld [vmem:[%s179 + $0x740] sm:$0xff]
        %v492 = vld [vmem:[%s179 + $0x748] sm:$0xff]
        %v493 = vld [vmem:[%s179 + $0x750] sm:$0xff]
        %v494 = vld [vmem:[%s179 + $0x758] sm:$0xff]
        %v495 = vld [vmem:[%s179 + $0x760] sm:$0xff]
        %v496 = vld [vmem:[%s179 + $0x768] sm:$0xff]
        %v497 = vld [vmem:[%s179 + $0x770] sm:$0xff]
        %v498 = vld [vmem:[%s179 + $0x778] sm:$0xff]
        %v499 = vld [vmem:[%s179 + $0x780] sm:$0xff]
        %v500 = vld [vmem:[%s179 + $0x788] sm:$0xff]
        %v501 = vld [vmem:[%s179 + $0x790] sm:$0xff]
        %v502 = vld [vmem:[%s179 + $0x798] sm:$0xff]
        %v503 = vld [vmem:[%s179 + $0x7a0] sm:$0xff]
        %v504 = vld [vmem:[%s179 + $0x7a8] sm:$0xff]
        %v505 = vld [vmem:[%s179 + $0x7b0] sm:$0xff]
        %v506 = vld [vmem:[%s179 + $0x7b8] sm:$0xff]
        %v507 = vld [vmem:[%s179 + $0x7c0] sm:$0xff]
        %v508 = vld [vmem:[%s179 + $0x7c8] sm:$0xff]
        %v509 = vld [vmem:[%s179 + $0x7d0] sm:$0xff]
        %v510 = vld [vmem:[%s179 + $0x7d8] sm:$0xff]
        %v511 = vld [vmem:[%s179 + $0x7e0] sm:$0xff]
        %v512 = vld [vmem:[%s179 + $0x7e8] sm:$0xff]
        %v513 = vld [vmem:[%s179 + $0x7f0] sm:$0xff]
        %v514 = vld [vmem:[%s179 + $0x7f8] sm:$0xff]
        %v515 = vld [vmem:[%s179 + $0x800] sm:$0xff]
        %v516 = vld [vmem:[%s179 + $0x808] sm:$0xff]
        %v517 = vld [vmem:[%s179 + $0x810] sm:$0xff]
        %v518 = vld [vmem:[%s179 + $0x818] sm:$0xff]
        %v519 = vld [vmem:[%s179 + $0x820] sm:$0xff]
        %v520 = vld [vmem:[%s179 + $0x828] sm:$0xff]
        %v521 = vld [vmem:[%s179 + $0x830] sm:$0xff]
        %v522 = vld [vmem:[%s179 + $0x838] sm:$0xff]
        %v523 = vld [vmem:[%s179 + $0x840] sm:$0xff]
        %v524 = vld [vmem:[%s179 + $0x848] sm:$0xff]
        %v525 = vld [vmem:[%s179 + $0x850] sm:$0xff]
        %v526 = vld [vmem:[%s179 + $0x858] sm:$0xff]
        %v527 = vld [vmem:[%s179 + $0x860] sm:$0xff]
        %v528 = vld [vmem:[%s179 + $0x868] sm:$0xff]
        %v529 = vld [vmem:[%s179 + $0x870] sm:$0xff]
        %v530 = vld [vmem:[%s179 + $0x878] sm:$0xff]
        %v531 = vld [vmem:[%s179 + $0x880] sm:$0xff]
        %v532 = vld [vmem:[%s179 + $0x888] sm:$0xff]
        %v533 = vld [vmem:[%s179 + $0x890] sm:$0xff]
        %v534 = vld [vmem:[%s179 + $0x898] sm:$0xff]
        %v535 = vld [vmem:[%s179 + $0x8a0] sm:$0xff]
        %v536 = vld [vmem:[%s179 + $0x8a8] sm:$0xff]
        %v537 = vld [vmem:[%s179 + $0x8b0] sm:$0xff]
        %v538 = vld [vmem:[%s179 + $0x8b8] sm:$0xff]
        %v539 = vld [vmem:[%s179 + $0x8c0] sm:$0xff]
        %v540 = vld [vmem:[%s179 + $0x8c8] sm:$0xff]
        %v541 = vld [vmem:[%s179 + $0x8d0] sm:$0xff]
        %v542 = vld [vmem:[%s179 + $0x8d8] sm:$0xff]
        %v543 = vld [vmem:[%s179 + $0x8e0] sm:$0xff]
        %v544 = vld [vmem:[%s179 + $0x8e8] sm:$0xff]
        %v545 = vld [vmem:[%s179 + $0x8f0] sm:$0xff]
        %v546 = vld [vmem:[%s179 + $0x8f8] sm:$0xff]
        %v547 = vld [vmem:[%s179 + $0x900] sm:$0xff]
        %v548 = vld [vmem:[%s179 + $0x908] sm:$0xff]
        %v549 = vld [vmem:[%s179 + $0x910] sm:$0xff]
        %v550 = vld [vmem:[%s179 + $0x918] sm:$0xff]
        %v551 = vld [vmem:[%s179 + $0x920] sm:$0xff]
        %v552 = vld [vmem:[%s179 + $0x928] sm:$0xff]
        %v553 = vld [vmem:[%s179 + $0x930] sm:$0xff]
        %v554 = vld [vmem:[%s179 + $0x938] sm:$0xff]
        %v555 = vld [vmem:[%s179 + $0x940] sm:$0xff]
        %v556 = vld [vmem:[%s179 + $0x948] sm:$0xff]
        %v557 = vld [vmem:[%s179 + $0x950] sm:$0xff]
        %v558 = vld [vmem:[%s179 + $0x958] sm:$0xff]
        %v559 = vld [vmem:[%s179 + $0x960] sm:$0xff]
        %v560 = vld [vmem:[%s179 + $0x968] sm:$0xff]
        %v561 = vld [vmem:[%s179 + $0x970] sm:$0xff]
        %v562 = vld [vmem:[%s179 + $0x978] sm:$0xff]
        %v563 = vld [vmem:[%s179 + $0x980] sm:$0xff]
        %v564 = vld [vmem:[%s179 + $0x988] sm:$0xff]
        %v565 = vld [vmem:[%s179 + $0x990] sm:$0xff]
        %v566 = vld [vmem:[%s179 + $0x998] sm:$0xff]
        %v567 = vld [vmem:[%s179 + $0x9a0] sm:$0xff]
        %v568 = vld [vmem:[%s179 + $0x9a8] sm:$0xff]
        %v569 = vld [vmem:[%s179 + $0x9b0] sm:$0xff]
        %v570 = vld [vmem:[%s179 + $0x9b8] sm:$0xff]
        %v571 = vld [vmem:[%s179 + $0x9c0] sm:$0xff]
        %v572 = vld [vmem:[%s179 + $0x9c8] sm:$0xff]
        %v573 = vld [vmem:[%s179 + $0x9d0] sm:$0xff]
        %v574 = vld [vmem:[%s179 + $0x9d8] sm:$0xff]
        %v575 = vld [vmem:[%s179 + $0x9e0] sm:$0xff]
        %v576 = vld [vmem:[%s179 + $0x9e8] sm:$0xff]
        %v577 = vld [vmem:[%s179 + $0x9f0] sm:$0xff]
        %v578 = vld [vmem:[%s179 + $0x9f8] sm:$0xff]
        %v579 = vld [vmem:[%s179 + $0xa00] sm:$0xff]
        %v580 = vld [vmem:[%s179 + $0xa08] sm:$0xff]
        %v581 = vld [vmem:[%s179 + $0xa10] sm:$0xff]
        %v582 = vld [vmem:[%s179 + $0xa18] sm:$0xff]
        %v583 = vld [vmem:[%s179 + $0xa20] sm:$0xff]
        %v584 = vld [vmem:[%s179 + $0xa28] sm:$0xff]
        %v585 = vld [vmem:[%s179 + $0xa30] sm:$0xff]
        %v586 = vld [vmem:[%s179 + $0xa38] sm:$0xff]
        %v587 = vld [vmem:[%s179 + $0xa40] sm:$0xff]
        %v588 = vld [vmem:[%s179 + $0xa48] sm:$0xff]
        %v589 = vld [vmem:[%s179 + $0xa50] sm:$0xff]
        %v590 = vld [vmem:[%s179 + $0xa58] sm:$0xff]
        %v591 = vld [vmem:[%s179 + $0xa60] sm:$0xff]
        %v592 = vld [vmem:[%s179 + $0xa68] sm:$0xff]
        %v593 = vld [vmem:[%s179 + $0xa70] sm:$0xff]
        %v594 = vld [vmem:[%s179 + $0xa78] sm:$0xff]
        %v595 = vld [vmem:[%s179 + $0xa80] sm:$0xff]
        %v596 = vld [vmem:[%s179 + $0xa88] sm:$0xff]
        %v597 = vld [vmem:[%s179 + $0xa90] sm:$0xff]
        %v598 = vld [vmem:[%s179 + $0xa98] sm:$0xff]
        %v599 = vld [vmem:[%s179 + $0xaa0] sm:$0xff]
        %v600 = vld [vmem:[%s179 + $0xaa8] sm:$0xff]
        %v601 = vld [vmem:[%s179 + $0xab0] sm:$0xff]
        %v602 = vld [vmem:[%s179 + $0xab8] sm:$0xff]
        %v603 = vld [vmem:[%s179 + $0xac0] sm:$0xff]
        %v604 = vld [vmem:[%s179 + $0xac8] sm:$0xff]
        %v605 = vld [vmem:[%s179 + $0xad0] sm:$0xff]
        %v606 = vld [vmem:[%s179 + $0xad8] sm:$0xff]
        %v607 = vld [vmem:[%s179 + $0xae0] sm:$0xff]
        %v608 = vld [vmem:[%s179 + $0xae8] sm:$0xff]
        %v609 = vld [vmem:[%s179 + $0xaf0] sm:$0xff]
        %v610 = vld [vmem:[%s179 + $0xaf8] sm:$0xff]
        %v611 = vld [vmem:[%s179 + $0xb00] sm:$0xff]
        %v612 = vld [vmem:[%s179 + $0xb08] sm:$0xff]
        %v613 = vld [vmem:[%s179 + $0xb10] sm:$0xff]
        %v614 = vld [vmem:[%s179 + $0xb18] sm:$0xff]
        %v615 = vld [vmem:[%s179 + $0xb20] sm:$0xff]
        %v616 = vld [vmem:[%s179 + $0xb28] sm:$0xff]
        %v617 = vld [vmem:[%s179 + $0xb30] sm:$0xff]
        %v618 = vld [vmem:[%s179 + $0xb38] sm:$0xff]
        %v619 = vld [vmem:[%s179 + $0xb40] sm:$0xff]
        %v620 = vld [vmem:[%s179 + $0xb48] sm:$0xff]
        %v621 = vld [vmem:[%s179 + $0xb50] sm:$0xff]
        %v622 = vld [vmem:[%s179 + $0xb58] sm:$0xff]
        %v623 = vld [vmem:[%s179 + $0xb60] sm:$0xff]
        %v624 = vld [vmem:[%s179 + $0xb68] sm:$0xff]
        %v625 = vld [vmem:[%s179 + $0xb70] sm:$0xff]
        %v626 = vld [vmem:[%s179 + $0xb78] sm:$0xff]
        %v627 = vld [vmem:[%s179 + $0xb80] sm:$0xff]
        %v628 = vld [vmem:[%s179 + $0xb88] sm:$0xff]
        %v629 = vld [vmem:[%s179 + $0xb90] sm:$0xff]
        %v630 = vld [vmem:[%s179 + $0xb98] sm:$0xff]
        %v631 = vld [vmem:[%s179 + $0xba0] sm:$0xff]
        %v632 = vld [vmem:[%s179 + $0xba8] sm:$0xff]
        %v633 = vld [vmem:[%s179 + $0xbb0] sm:$0xff]
        %v634 = vld [vmem:[%s179 + $0xbb8] sm:$0xff]
        %v635 = vld [vmem:[%s179 + $0xbc0] sm:$0xff]
        %v636 = vld [vmem:[%s179 + $0xbc8] sm:$0xff]
        %v637 = vld [vmem:[%s179 + $0xbd0] sm:$0xff]
        %v638 = vld [vmem:[%s179 + $0xbd8] sm:$0xff]
        %v639 = vld [vmem:[%s179 + $0xbe0] sm:$0xff]
        %v640 = vld [vmem:[%s179 + $0xbe8] sm:$0xff]
        %v641 = vld [vmem:[%s179 + $0xbf0] sm:$0xff]
        %v642 = vld [vmem:[%s179 + $0xbf8] sm:$0xff]
        %v643 = vld [vmem:[%s179 + $0xc00] sm:$0xff]
        %v644 = vld [vmem:[%s179 + $0xc08] sm:$0xff]
        %v645 = vld [vmem:[%s179 + $0xc10] sm:$0xff]
        %v646 = vld [vmem:[%s179 + $0xc18] sm:$0xff]
        %v647 = vld [vmem:[%s179 + $0xc20] sm:$0xff]
        %v648 = vld [vmem:[%s179 + $0xc28] sm:$0xff]
        %v649 = vld [vmem:[%s179 + $0xc30] sm:$0xff]
        %v650 = vld [vmem:[%s179 + $0xc38] sm:$0xff]
        %v651 = vld [vmem:[%s179 + $0xc40] sm:$0xff]
        %v652 = vld [vmem:[%s179 + $0xc48] sm:$0xff]
        %v653 = vld [vmem:[%s179 + $0xc50] sm:$0xff]
        %v654 = vld [vmem:[%s179 + $0xc58] sm:$0xff]
        %v655 = vld [vmem:[%s179 + $0xc60] sm:$0xff]
        %v656 = vld [vmem:[%s179 + $0xc68] sm:$0xff]
        %v657 = vld [vmem:[%s179 + $0xc70] sm:$0xff]
        %v658 = vld [vmem:[%s179 + $0xc78] sm:$0xff]
        %v659 = vld [vmem:[%s179 + $0xc80] sm:$0xff]
        %v660 = vld [vmem:[%s179 + $0xc88] sm:$0xff]
        %v661 = vld [vmem:[%s179 + $0xc90] sm:$0xff]
        %v662 = vld [vmem:[%s179 + $0xc98] sm:$0xff]
        %v663 = vld [vmem:[%s179 + $0xca0] sm:$0xff]
        %v664 = vld [vmem:[%s179 + $0xca8] sm:$0xff]
        %v665 = vld [vmem:[%s179 + $0xcb0] sm:$0xff]
        %v666 = vld [vmem:[%s179 + $0xcb8] sm:$0xff]
        %v667 = vld [vmem:[%s179 + $0xcc0] sm:$0xff]
        %v668 = vld [vmem:[%s179 + $0xcc8] sm:$0xff]
        %v669 = vld [vmem:[%s179 + $0xcd0] sm:$0xff]
        %v670 = vld [vmem:[%s179 + $0xcd8] sm:$0xff]
        %v671 = vld [vmem:[%s179 + $0xce0] sm:$0xff]
        %v672 = vld [vmem:[%s179 + $0xce8] sm:$0xff]
        %v673 = vld [vmem:[%s179 + $0xcf0] sm:$0xff]
        %v674 = vld [vmem:[%s179 + $0xcf8] sm:$0xff]
        %v675 = vld [vmem:[%s179 + $0xd00] sm:$0xff]
        %v676 = vld [vmem:[%s179 + $0xd08] sm:$0xff]
        %v677 = vld [vmem:[%s179 + $0xd10] sm:$0xff]
        %v678 = vld [vmem:[%s179 + $0xd18] sm:$0xff]
        %v679 = vld [vmem:[%s179 + $0xd20] sm:$0xff]
        %v680 = vld [vmem:[%s179 + $0xd28] sm:$0xff]
        %v681 = vld [vmem:[%s179 + $0xd30] sm:$0xff]
        %v682 = vld [vmem:[%s179 + $0xd38] sm:$0xff]
        %v683 = vld [vmem:[%s179 + $0xd40] sm:$0xff]
        %v684 = vld [vmem:[%s179 + $0xd48] sm:$0xff]
        %v685 = vld [vmem:[%s179 + $0xd50] sm:$0xff]
        %v686 = vld [vmem:[%s179 + $0xd58] sm:$0xff]
        %v687 = vld [vmem:[%s179 + $0xd60] sm:$0xff]
        %v688 = vld [vmem:[%s179 + $0xd68] sm:$0xff]
        %v689 = vld [vmem:[%s179 + $0xd70] sm:$0xff]
        %v690 = vld [vmem:[%s179 + $0xd78] sm:$0xff]
        %v691 = vld [vmem:[%s179 + $0xd80] sm:$0xff]
        %v692 = vld [vmem:[%s179 + $0xd88] sm:$0xff]
        %v693 = vld [vmem:[%s179 + $0xd90] sm:$0xff]
        %v694 = vld [vmem:[%s179 + $0xd98] sm:$0xff]
        %v695 = vld [vmem:[%s179 + $0xda0] sm:$0xff]
        %v696 = vld [vmem:[%s179 + $0xda8] sm:$0xff]
        %v697 = vld [vmem:[%s179 + $0xdb0] sm:$0xff]
        %v698 = vld [vmem:[%s179 + $0xdb8] sm:$0xff]
        %v699 = vld [vmem:[%s179 + $0xdc0] sm:$0xff]
        %v700 = vld [vmem:[%s179 + $0xdc8] sm:$0xff]
        %v701 = vld [vmem:[%s179 + $0xdd0] sm:$0xff]
        %v702 = vld [vmem:[%s179 + $0xdd8] sm:$0xff]
        %v703 = vld [vmem:[%s179 + $0xde0] sm:$0xff]
        %v704 = vld [vmem:[%s179 + $0xde8] sm:$0xff]
        %v705 = vld [vmem:[%s179 + $0xdf0] sm:$0xff]
        %v706 = vld [vmem:[%s179 + $0xdf8] sm:$0xff]
        %v707 = vld [vmem:[%s179 + $0xe00] sm:$0xff]
        %v708 = vld [vmem:[%s179 + $0xe08] sm:$0xff]
        %v709 = vld [vmem:[%s179 + $0xe10] sm:$0xff]
        %v710 = vld [vmem:[%s179 + $0xe18] sm:$0xff]
        %v711 = vld [vmem:[%s179 + $0xe20] sm:$0xff]
        %v712 = vld [vmem:[%s179 + $0xe28] sm:$0xff]
        %v713 = vld [vmem:[%s179 + $0xe30] sm:$0xff]
        %v714 = vld [vmem:[%s179 + $0xe38] sm:$0xff]
        %v715 = vld [vmem:[%s179 + $0xe40] sm:$0xff]
        %v716 = vld [vmem:[%s179 + $0xe48] sm:$0xff]
        %v717 = vld [vmem:[%s179 + $0xe50] sm:$0xff]
        %v718 = vld [vmem:[%s179 + $0xe58] sm:$0xff]
        %v719 = vld [vmem:[%s179 + $0xe60] sm:$0xff]
        %v720 = vld [vmem:[%s179 + $0xe68] sm:$0xff]
        %v721 = vld [vmem:[%s179 + $0xe70] sm:$0xff]
        %v722 = vld [vmem:[%s179 + $0xe78] sm:$0xff]
        %v723 = vld [vmem:[%s179 + $0xe80] sm:$0xff]
        %v724 = vld [vmem:[%s179 + $0xe88] sm:$0xff]
        %v725 = vld [vmem:[%s179 + $0xe90] sm:$0xff]
        %v726 = vld [vmem:[%s179 + $0xe98] sm:$0xff]
        %v727 = vld [vmem:[%s179 + $0xea0] sm:$0xff]
        %v728 = vld [vmem:[%s179 + $0xea8] sm:$0xff]
        %v729 = vld [vmem:[%s179 + $0xeb0] sm:$0xff]
        %v730 = vld [vmem:[%s179 + $0xeb8] sm:$0xff]
        %v731 = vld [vmem:[%s179 + $0xec0] sm:$0xff]
        %v732 = vld [vmem:[%s179 + $0xec8] sm:$0xff]
        %v733 = vld [vmem:[%s179 + $0xed0] sm:$0xff]
        %v734 = vld [vmem:[%s179 + $0xed8] sm:$0xff]
        %v735 = vld [vmem:[%s179 + $0xee0] sm:$0xff]
        %v736 = vld [vmem:[%s179 + $0xee8] sm:$0xff]
        %v737 = vld [vmem:[%s179 + $0xef0] sm:$0xff]
        %v738 = vld [vmem:[%s179 + $0xef8] sm:$0xff]
        %v739 = vld [vmem:[%s179 + $0xf00] sm:$0xff]
        %v740 = vld [vmem:[%s179 + $0xf08] sm:$0xff]
        %v741 = vld [vmem:[%s179 + $0xf10] sm:$0xff]
        %v742 = vld [vmem:[%s179 + $0xf18] sm:$0xff]
        %v743 = vld [vmem:[%s179 + $0xf20] sm:$0xff]
        %v744 = vld [vmem:[%s179 + $0xf28] sm:$0xff]
        %v745 = vld [vmem:[%s179 + $0xf30] sm:$0xff]
        %v746 = vld [vmem:[%s179 + $0xf38] sm:$0xff]
        %v747 = vld [vmem:[%s179 + $0xf40] sm:$0xff]
        %v748 = vld [vmem:[%s179 + $0xf48] sm:$0xff]
        %v749 = vld [vmem:[%s179 + $0xf50] sm:$0xff]
        %v750 = vld [vmem:[%s179 + $0xf58] sm:$0xff]
        %v751 = vld [vmem:[%s179 + $0xf60] sm:$0xff]
        %v752 = vld [vmem:[%s179 + $0xf68] sm:$0xff]
        %v753 = vld [vmem:[%s179 + $0xf70] sm:$0xff]
        %v754 = vld [vmem:[%s179 + $0xf78] sm:$0xff]
        %v755 = vld [vmem:[%s179 + $0xf80] sm:$0xff]
        %v756 = vld [vmem:[%s179 + $0xf88] sm:$0xff]
        %v757 = vld [vmem:[%s179 + $0xf90] sm:$0xff]
        %v758 = vld [vmem:[%s179 + $0xf98] sm:$0xff]
        %v759 = vld [vmem:[%s179 + $0xfa0] sm:$0xff]
        %v760 = vld [vmem:[%s179 + $0xfa8] sm:$0xff]
        %v761 = vld [vmem:[%s179 + $0xfb0] sm:$0xff]
        %v762 = vld [vmem:[%s179 + $0xfb8] sm:$0xff]
        %v763 = vld [vmem:[%s179 + $0xfc0] sm:$0xff]
        %v764 = vld [vmem:[%s179 + $0xfc8] sm:$0xff]
        %v765 = vld [vmem:[%s179 + $0xfd0] sm:$0xff]
        %v766 = vld [vmem:[%s179 + $0xfd8] sm:$0xff]
        %v767 = vld [vmem:[%s179 + $0xfe0] sm:$0xff]
        %v768 = vld [vmem:[%s179 + $0xfe8] sm:$0xff]
        %v769 = vld [vmem:[%s179 + $0xff0] sm:$0xff]
        %v770 = vld [vmem:[%s179 + $0xff8] sm:$0xff]
        %v771 = vld [vmem:[%s179 + $0x1000] sm:$0xff]
        %v772 = vld [vmem:[%s179 + $0x1008] sm:$0xff]
        %v773 = vld [vmem:[%s179 + $0x1010] sm:$0xff]
        %v774 = vld [vmem:[%s179 + $0x1018] sm:$0xff]
        %v775 = vld [vmem:[%s179 + $0x1020] sm:$0xff]
        %v776 = vld [vmem:[%s179 + $0x1028] sm:$0xff]
        %v777 = vld [vmem:[%s179 + $0x1030] sm:$0xff]
        %v778 = vld [vmem:[%s179 + $0x1038] sm:$0xff]
        %v779 = vld [vmem:[%s179 + $0x1040] sm:$0xff]
        %v780 = vld [vmem:[%s179 + $0x1048] sm:$0xff]
        %v781 = vld [vmem:[%s179 + $0x1050] sm:$0xff]
        %v782 = vld [vmem:[%s179 + $0x1058] sm:$0xff]
        %v783 = vld [vmem:[%s179 + $0x1060] sm:$0xff]
        %v784 = vld [vmem:[%s179 + $0x1068] sm:$0xff]
        %v785 = vld [vmem:[%s179 + $0x1070] sm:$0xff]
        %v786 = vld [vmem:[%s179 + $0x1078] sm:$0xff]
        %v787 = vld [vmem:[%s179 + $0x1080] sm:$0xff]
        %v788 = vld [vmem:[%s179 + $0x1088] sm:$0xff]
        %v789 = vld [vmem:[%s179 + $0x1090] sm:$0xff]
        %v790 = vld [vmem:[%s179 + $0x1098] sm:$0xff]
        %v791 = vld [vmem:[%s179 + $0x10a0] sm:$0xff]
        %v792 = vld [vmem:[%s179 + $0x10a8] sm:$0xff]
        %v793 = vld [vmem:[%s179 + $0x10b0] sm:$0xff]
        %v794 = vld [vmem:[%s179 + $0x10b8] sm:$0xff]
        %v795 = vld [vmem:[%s179 + $0x10c0] sm:$0xff]
        %v796 = vld [vmem:[%s179 + $0x10c8] sm:$0xff]
        %v797 = vld [vmem:[%s179 + $0x10d0] sm:$0xff]
        %v798 = vld [vmem:[%s179 + $0x10d8] sm:$0xff]
        %v799 = vld [vmem:[%s179 + $0x10e0] sm:$0xff]
        %v800 = vld [vmem:[%s179 + $0x10e8] sm:$0xff]
        %v801 = vld [vmem:[%s179 + $0x10f0] sm:$0xff]
        %v802 = vld [vmem:[%s179 + $0x10f8] sm:$0xff]
        %v803 = vld [vmem:[%s179 + $0x1100] sm:$0xff]
        %v804 = vld [vmem:[%s179 + $0x1108] sm:$0xff]
        %v805 = vld [vmem:[%s179 + $0x1110] sm:$0xff]
        %v806 = vld [vmem:[%s179 + $0x1118] sm:$0xff]
        %v807 = vld [vmem:[%s179 + $0x1120] sm:$0xff]
        %v808 = vld [vmem:[%s179 + $0x1128] sm:$0xff]
        %v809 = vld [vmem:[%s179 + $0x1130] sm:$0xff]
        %v810 = vld [vmem:[%s179 + $0x1138] sm:$0xff]
        %v811 = vld [vmem:[%s179 + $0x1140] sm:$0xff]
        %v812 = vld [vmem:[%s179 + $0x1148] sm:$0xff]
        %v813 = vld [vmem:[%s179 + $0x1150] sm:$0xff]
        %v814 = vld [vmem:[%s179 + $0x1158] sm:$0xff]
        %v815 = vld [vmem:[%s179 + $0x1160] sm:$0xff]
        %v816 = vld [vmem:[%s179 + $0x1168] sm:$0xff]
        %v817 = vld [vmem:[%s179 + $0x1170] sm:$0xff]
        %v818 = vld [vmem:[%s179 + $0x1178] sm:$0xff]
        %v819 = vld [vmem:[%s179 + $0x1180] sm:$0xff]
        %v820 = vld [vmem:[%s179 + $0x1188] sm:$0xff]
        %v821 = vld [vmem:[%s179 + $0x1190] sm:$0xff]
        %v822 = vld [vmem:[%s179 + $0x1198] sm:$0xff]
        %v823 = vld [vmem:[%s179 + $0x11a0] sm:$0xff]
        %v824 = vld [vmem:[%s179 + $0x11a8] sm:$0xff]
        %v825 = vld [vmem:[%s179 + $0x11b0] sm:$0xff]
        %v826 = vld [vmem:[%s179 + $0x11b8] sm:$0xff]
        %v827 = vld [vmem:[%s179 + $0x11c0] sm:$0xff]
        %v828 = vld [vmem:[%s179 + $0x11c8] sm:$0xff]
        %v829 = vld [vmem:[%s179 + $0x11d0] sm:$0xff]
        %v830 = vld [vmem:[%s179 + $0x11d8] sm:$0xff]
        %v831 = vld [vmem:[%s179 + $0x11e0] sm:$0xff]
        %v832 = vld [vmem:[%s179 + $0x11e8] sm:$0xff]
        %v833 = vld [vmem:[%s179 + $0x11f0] sm:$0xff]
        %v834 = vld [vmem:[%s179 + $0x11f8] sm:$0xff]
        %v835 = vld [vmem:[%s179 + $0x1200] sm:$0xff]
        %v836 = vld [vmem:[%s179 + $0x1208] sm:$0xff]
        %v837 = vld [vmem:[%s179 + $0x1210] sm:$0xff]
        %v838 = vld [vmem:[%s179 + $0x1218] sm:$0xff]
        %v839 = vld [vmem:[%s179 + $0x1220] sm:$0xff]
        %v840 = vld [vmem:[%s179 + $0x1228] sm:$0xff]
        %v841 = vld [vmem:[%s179 + $0x1230] sm:$0xff]
        %v842 = vld [vmem:[%s179 + $0x1238] sm:$0xff]
        %v843 = vld [vmem:[%s179 + $0x1240] sm:$0xff]
        %v844 = vld [vmem:[%s179 + $0x1248] sm:$0xff]
        %v845 = vld [vmem:[%s179 + $0x1250] sm:$0xff]
        %v846 = vld [vmem:[%s179 + $0x1258] sm:$0xff]
        %v847 = vld [vmem:[%s179 + $0x1260] sm:$0xff]
        %v848 = vld [vmem:[%s179 + $0x1268] sm:$0xff]
        %v849 = vld [vmem:[%s179 + $0x1270] sm:$0xff]
        %v850 = vld [vmem:[%s179 + $0x1278] sm:$0xff]
        %v851 = vld [vmem:[%s179 + $0x1280] sm:$0xff]
        %v852 = vld [vmem:[%s179 + $0x1288] sm:$0xff]
        %v853 = vld [vmem:[%s179 + $0x1290] sm:$0xff]
        %v854 = vld [vmem:[%s179 + $0x1298] sm:$0xff]
        %v855 = vld [vmem:[%s179 + $0x12a0] sm:$0xff]
        %v856 = vld [vmem:[%s179 + $0x12a8] sm:$0xff]
        %v857 = vld [vmem:[%s179 + $0x12b0] sm:$0xff]
        %v858 = vld [vmem:[%s179 + $0x12b8] sm:$0xff]
        %v859 = vld [vmem:[%s179 + $0x12c0] sm:$0xff]
        %v860 = vld [vmem:[%s179 + $0x12c8] sm:$0xff]
        %v861 = vld [vmem:[%s179 + $0x12d0] sm:$0xff]
        %v862 = vld [vmem:[%s179 + $0x12d8] sm:$0xff]
        %v863 = vld [vmem:[%s179 + $0x12e0] sm:$0xff]
        %v864 = vld [vmem:[%s179 + $0x12e8] sm:$0xff]
        %v865 = vld [vmem:[%s179 + $0x12f0] sm:$0xff]
        %v866 = vld [vmem:[%s179 + $0x12f8] sm:$0xff]
        %v867 = vld [vmem:[%s179 + $0x1300] sm:$0xff]
        %v868 = vld [vmem:[%s179 + $0x1308] sm:$0xff]
        %v869 = vld [vmem:[%s179 + $0x1310] sm:$0xff]
        %v870 = vld [vmem:[%s179 + $0x1318] sm:$0xff]
        %v871 = vld [vmem:[%s179 + $0x1320] sm:$0xff]
        %v872 = vld [vmem:[%s179 + $0x1328] sm:$0xff]
        %v873 = vld [vmem:[%s179 + $0x1330] sm:$0xff]
        %v874 = vld [vmem:[%s179 + $0x1338] sm:$0xff]
        %v875 = vld [vmem:[%s179 + $0x1340] sm:$0xff]
        %v876 = vld [vmem:[%s179 + $0x1348] sm:$0xff]
        %v877 = vld [vmem:[%s179 + $0x1350] sm:$0xff]
        %v878 = vld [vmem:[%s179 + $0x1358] sm:$0xff]
        %v879 = vld [vmem:[%s179 + $0x1360] sm:$0xff]
        %v880 = vld [vmem:[%s179 + $0x1368] sm:$0xff]
        %v881 = vld [vmem:[%s179 + $0x1370] sm:$0xff]
        %v882 = vld [vmem:[%s179 + $0x1378] sm:$0xff]
        %v883 = vld [vmem:[%s179 + $0x1380] sm:$0xff]
        %v884 = vld [vmem:[%s179 + $0x1388] sm:$0xff]
        %v885 = vld [vmem:[%s179 + $0x1390] sm:$0xff]
        %v886 = vld [vmem:[%s179 + $0x1398] sm:$0xff]
        %v887 = vld [vmem:[%s179 + $0x13a0] sm:$0xff]
        %v888 = vld [vmem:[%s179 + $0x13a8] sm:$0xff]
        %v889 = vld [vmem:[%s179 + $0x13b0] sm:$0xff]
        %v890 = vld [vmem:[%s179 + $0x13b8] sm:$0xff]
        %v891 = vld [vmem:[%s179 + $0x13c0] sm:$0xff]
        %v892 = vld [vmem:[%s179 + $0x13c8] sm:$0xff]
        %v893 = vld [vmem:[%s179 + $0x13d0] sm:$0xff]
        %v894 = vld [vmem:[%s179 + $0x13d8] sm:$0xff]
        %v895 = vld [vmem:[%s179 + $0x13e0] sm:$0xff]
        %v896 = vld [vmem:[%s179 + $0x13e8] sm:$0xff]
        %v897 = vld [vmem:[%s179 + $0x13f0] sm:$0xff]
        %v898 = vld [vmem:[%s179 + $0x13f8] sm:$0xff]
        %v899 = vld [vmem:[%s179 + $0x1400] sm:$0xff]
        %v900 = vld [vmem:[%s179 + $0x1408] sm:$0xff]
        %v901 = vld [vmem:[%s179 + $0x1410] sm:$0xff]
        %v902 = vld [vmem:[%s179 + $0x1418] sm:$0xff]
        %v903 = vld [vmem:[%s179 + $0x1420] sm:$0xff]
        %v904 = vld [vmem:[%s179 + $0x1428] sm:$0xff]
        %v905 = vld [vmem:[%s179 + $0x1430] sm:$0xff]
        %v906 = vld [vmem:[%s179 + $0x1438] sm:$0xff]
        %v907 = vld [vmem:[%s179 + $0x1440] sm:$0xff]
        %v908 = vld [vmem:[%s179 + $0x1448] sm:$0xff]
        %v909 = vld [vmem:[%s179 + $0x1450] sm:$0xff]
        %v910 = vld [vmem:[%s179 + $0x1458] sm:$0xff]
        %v911 = vld [vmem:[%s179 + $0x1460] sm:$0xff]
        %v912 = vld [vmem:[%s179 + $0x1468] sm:$0xff]
        %v913 = vld [vmem:[%s179 + $0x1470] sm:$0xff]
        %v914 = vld [vmem:[%s179 + $0x1478] sm:$0xff]
        %v915 = vld [vmem:[%s179 + $0x1480] sm:$0xff]
        %v916 = vld [vmem:[%s179 + $0x1488] sm:$0xff]
        %v917 = vld [vmem:[%s179 + $0x1490] sm:$0xff]
        %v918 = vld [vmem:[%s179 + $0x1498] sm:$0xff]
        %v919 = vld [vmem:[%s179 + $0x14a0] sm:$0xff]
        %v920 = vld [vmem:[%s179 + $0x14a8] sm:$0xff]
        %v921 = vld [vmem:[%s179 + $0x14b0] sm:$0xff]
        %v922 = vld [vmem:[%s179 + $0x14b8] sm:$0xff]
        %v923 = vld [vmem:[%s179 + $0x14c0] sm:$0xff]
        %v924 = vld [vmem:[%s179 + $0x14c8] sm:$0xff]
        %v925 = vld [vmem:[%s179 + $0x14d0] sm:$0xff]
        %v926 = vld [vmem:[%s179 + $0x14d8] sm:$0xff]
        %v927 = vld [vmem:[%s179 + $0x14e0] sm:$0xff]
        %v928 = vld [vmem:[%s179 + $0x14e8] sm:$0xff]
        %v929 = vld [vmem:[%s179 + $0x14f0] sm:$0xff]
        %v930 = vld [vmem:[%s179 + $0x14f8] sm:$0xff]
        %v931 = vld [vmem:[%s179 + $0x1500] sm:$0xff]
        %v932 = vld [vmem:[%s179 + $0x1508] sm:$0xff]
        %v933 = vld [vmem:[%s179 + $0x1510] sm:$0xff]
        %v934 = vld [vmem:[%s179 + $0x1518] sm:$0xff]
        %v935 = vld [vmem:[%s179 + $0x1520] sm:$0xff]
        %v936 = vld [vmem:[%s179 + $0x1528] sm:$0xff]
        %v937 = vld [vmem:[%s179 + $0x1530] sm:$0xff]
        %v938 = vld [vmem:[%s179 + $0x1538] sm:$0xff]
        %v939 = vld [vmem:[%s179 + $0x1540] sm:$0xff]
        %v940 = vld [vmem:[%s179 + $0x1548] sm:$0xff]
        %v941 = vld [vmem:[%s179 + $0x1550] sm:$0xff]
        %v942 = vld [vmem:[%s179 + $0x1558] sm:$0xff]
        %v943 = vld [vmem:[%s179 + $0x1560] sm:$0xff]
        %v944 = vld [vmem:[%s179 + $0x1568] sm:$0xff]
        %v945 = vld [vmem:[%s179 + $0x1570] sm:$0xff]
        %v946 = vld [vmem:[%s179 + $0x1578] sm:$0xff]
        %v947 = vld [vmem:[%s179 + $0x1580] sm:$0xff]
        %v948 = vld [vmem:[%s179 + $0x1588] sm:$0xff]
        %v949 = vld [vmem:[%s179 + $0x1590] sm:$0xff]
        %v950 = vld [vmem:[%s179 + $0x1598] sm:$0xff]
        %v951 = vld [vmem:[%s179 + $0x15a0] sm:$0xff]
        %v952 = vld [vmem:[%s179 + $0x15a8] sm:$0xff]
        %v953 = vld [vmem:[%s179 + $0x15b0] sm:$0xff]
        %v954 = vld [vmem:[%s179 + $0x15b8] sm:$0xff]
        %v955 = vld [vmem:[%s179 + $0x15c0] sm:$0xff]
        %v956 = vld [vmem:[%s179 + $0x15c8] sm:$0xff]
        %v957 = vld [vmem:[%s179 + $0x15d0] sm:$0xff]
        %v958 = vld [vmem:[%s179 + $0x15d8] sm:$0xff]
        %v959 = vld [vmem:[%s179 + $0x15e0] sm:$0xff]
        %v960 = vld [vmem:[%s179 + $0x15e8] sm:$0xff]
        %v961 = vld [vmem:[%s179 + $0x15f0] sm:$0xff]
        %v962 = vld [vmem:[%s179 + $0x15f8] sm:$0xff]
        %v963 = vld [vmem:[%s179 + $0x1600] sm:$0xff]
        %v964 = vld [vmem:[%s179 + $0x1608] sm:$0xff]
        %v965 = vld [vmem:[%s179 + $0x1610] sm:$0xff]
        %v966 = vld [vmem:[%s179 + $0x1618] sm:$0xff]
        %v967 = vld [vmem:[%s179 + $0x1620] sm:$0xff]
        %v968 = vld [vmem:[%s179 + $0x1628] sm:$0xff]
        %v969 = vld [vmem:[%s179 + $0x1630] sm:$0xff]
        %v970 = vld [vmem:[%s179 + $0x1638] sm:$0xff]
        %v971 = vld [vmem:[%s179 + $0x1640] sm:$0xff]
        %v972 = vld [vmem:[%s179 + $0x1648] sm:$0xff]
        %v973 = vld [vmem:[%s179 + $0x1650] sm:$0xff]
        %v974 = vld [vmem:[%s179 + $0x1658] sm:$0xff]
        %v975 = vld [vmem:[%s179 + $0x1660] sm:$0xff]
        %v976 = vld [vmem:[%s179 + $0x1668] sm:$0xff]
        %v977 = vld [vmem:[%s179 + $0x1670] sm:$0xff]
        %v978 = vld [vmem:[%s179 + $0x1678] sm:$0xff]
        %v979 = vld [vmem:[%s179 + $0x1680] sm:$0xff]
        %v980 = vld [vmem:[%s179 + $0x1688] sm:$0xff]
        %v981 = vld [vmem:[%s179 + $0x1690] sm:$0xff]
        %v982 = vld [vmem:[%s179 + $0x1698] sm:$0xff]
        %v983 = vld [vmem:[%s179 + $0x16a0] sm:$0xff]
        %v984 = vld [vmem:[%s179 + $0x16a8] sm:$0xff]
        %v985 = vld [vmem:[%s179 + $0x16b0] sm:$0xff]
        %v986 = vld [vmem:[%s179 + $0x16b8] sm:$0xff]
        %v987 = vld [vmem:[%s179 + $0x16c0] sm:$0xff]
        %v988 = vld [vmem:[%s179 + $0x16c8] sm:$0xff]
        %v989 = vld [vmem:[%s179 + $0x16d0] sm:$0xff]
        %v990 = vld [vmem:[%s179 + $0x16d8] sm:$0xff]
        %v991 = vld [vmem:[%s179 + $0x16e0] sm:$0xff]
        %v992 = vld [vmem:[%s179 + $0x16e8] sm:$0xff]
        %v993 = vld [vmem:[%s179 + $0x16f0] sm:$0xff]
        %v994 = vld [vmem:[%s179 + $0x16f8] sm:$0xff]
        %v995 = vld [vmem:[%s179 + $0x1700] sm:$0xff]
        %v996 = vld [vmem:[%s179 + $0x1708] sm:$0xff]
        %v997 = vld [vmem:[%s179 + $0x1710] sm:$0xff]
        %v998 = vld [vmem:[%s179 + $0x1718] sm:$0xff]
        %v999 = vld [vmem:[%s179 + $0x1720] sm:$0xff]
        %v1000 = vld [vmem:[%s179 + $0x1728] sm:$0xff]
        %v1001 = vld [vmem:[%s179 + $0x1730] sm:$0xff]
        %v1002 = vld [vmem:[%s179 + $0x1738] sm:$0xff]
        %v1003 = vld [vmem:[%s179 + $0x1740] sm:$0xff]
        %v1004 = vld [vmem:[%s179 + $0x1748] sm:$0xff]
        %v1005 = vld [vmem:[%s179 + $0x1750] sm:$0xff]
        %v1006 = vld [vmem:[%s179 + $0x1758] sm:$0xff]
        %v1007 = vld [vmem:[%s179 + $0x1760] sm:$0xff]
        %v1008 = vld [vmem:[%s179 + $0x1768] sm:$0xff]
        %v1009 = vld [vmem:[%s179 + $0x1770] sm:$0xff]
        %v1010 = vld [vmem:[%s179 + $0x1778] sm:$0xff]
        %v1011 = vld [vmem:[%s179 + $0x1780] sm:$0xff]
        %v1012 = vld [vmem:[%s179 + $0x1788] sm:$0xff]
        %v1013 = vld [vmem:[%s179 + $0x1790] sm:$0xff]
        %v1014 = vld [vmem:[%s179 + $0x1798] sm:$0xff]
        %v1015 = vld [vmem:[%s179 + $0x17a0] sm:$0xff]
        %v1016 = vld [vmem:[%s179 + $0x17a8] sm:$0xff]
        %v1017 = vld [vmem:[%s179 + $0x17b0] sm:$0xff]
        %v1018 = vld [vmem:[%s179 + $0x17b8] sm:$0xff]
        %v1019 = vld [vmem:[%s179 + $0x17c0] sm:$0xff]
        %v1020 = vld [vmem:[%s179 + $0x17c8] sm:$0xff]
        %v1021 = vld [vmem:[%s179 + $0x17d0] sm:$0xff]
        %v1022 = vld [vmem:[%s179 + $0x17d8] sm:$0xff]
        %v1023 = vld [vmem:[%s179 + $0x17e0] sm:$0xff]
        %v1024 = vld [vmem:[%s179 + $0x17e8] sm:$0xff]
        %v1025 = vld [vmem:[%s179 + $0x17f0] sm:$0xff]
        %v1026 = vld [vmem:[%s179 + $0x17f8] sm:$0xff]
        %v1027 = vld [vmem:[%s179 + $0x1800] sm:$0xff]
        %v1028 = vld [vmem:[%s179 + $0x1808] sm:$0xff]
        %v1029 = vld [vmem:[%s179 + $0x1810] sm:$0xff]
        %v1030 = vld [vmem:[%s179 + $0x1818] sm:$0xff]
        %v1031 = vld [vmem:[%s179 + $0x1820] sm:$0xff]
        %v1032 = vld [vmem:[%s179 + $0x1828] sm:$0xff]
        %v1033 = vld [vmem:[%s179 + $0x1830] sm:$0xff]
        %v1034 = vld [vmem:[%s179 + $0x1838] sm:$0xff]
        %v1035 = vld [vmem:[%s179 + $0x1840] sm:$0xff]
        %v1036 = vld [vmem:[%s179 + $0x1848] sm:$0xff]
        %v1037 = vld [vmem:[%s179 + $0x1850] sm:$0xff]
        %v1038 = vld [vmem:[%s179 + $0x1858] sm:$0xff]
        %v1039 = vld [vmem:[%s179 + $0x1860] sm:$0xff]
        %v1040 = vld [vmem:[%s179 + $0x1868] sm:$0xff]
        %v1041 = vld [vmem:[%s179 + $0x1870] sm:$0xff]
        %v1042 = vld [vmem:[%s179 + $0x1878] sm:$0xff]
        %v1043 = vld [vmem:[%s179 + $0x1880] sm:$0xff]
        %v1044 = vld [vmem:[%s179 + $0x1888] sm:$0xff]
        %v1045 = vld [vmem:[%s179 + $0x1890] sm:$0xff]
        %v1046 = vld [vmem:[%s179 + $0x1898] sm:$0xff]
        %v1047 = vld [vmem:[%s179 + $0x18a0] sm:$0xff]
        %v1048 = vld [vmem:[%s179 + $0x18a8] sm:$0xff]
        %v1049 = vld [vmem:[%s179 + $0x18b0] sm:$0xff]
        %v1050 = vld [vmem:[%s179 + $0x18b8] sm:$0xff]
        %v1051 = vld [vmem:[%s179 + $0x18c0] sm:$0xff]
        %v1052 = vld [vmem:[%s179 + $0x18c8] sm:$0xff]
        %v1053 = vld [vmem:[%s179 + $0x18d0] sm:$0xff]
        %v1054 = vld [vmem:[%s179 + $0x18d8] sm:$0xff]
        %v1055 = vld [vmem:[%s179 + $0x18e0] sm:$0xff]
        %v1056 = vld [vmem:[%s179 + $0x18e8] sm:$0xff]
        %v1057 = vld [vmem:[%s179 + $0x18f0] sm:$0xff]
        %v1058 = vld [vmem:[%s179 + $0x18f8] sm:$0xff]
        %v1059 = vld [vmem:[%s179 + $0x1900] sm:$0xff]
        %v1060 = vld [vmem:[%s179 + $0x1908] sm:$0xff]
        %v1061 = vld [vmem:[%s179 + $0x1910] sm:$0xff]
        %v1062 = vld [vmem:[%s179 + $0x1918] sm:$0xff]
        %v1063 = vld [vmem:[%s179 + $0x1920] sm:$0xff]
        %v1064 = vld [vmem:[%s179 + $0x1928] sm:$0xff]
        %v1065 = vld [vmem:[%s179 + $0x1930] sm:$0xff]
        %v1066 = vld [vmem:[%s179 + $0x1938] sm:$0xff]
        %v1067 = vld [vmem:[%s179 + $0x1940] sm:$0xff]
        %v1068 = vld [vmem:[%s179 + $0x1948] sm:$0xff]
        %v1069 = vld [vmem:[%s179 + $0x1950] sm:$0xff]
        %v1070 = vld [vmem:[%s179 + $0x1958] sm:$0xff]
        %v1071 = vld [vmem:[%s179 + $0x1960] sm:$0xff]
        %v1072 = vld [vmem:[%s179 + $0x1968] sm:$0xff]
        %v1073 = vld [vmem:[%s179 + $0x1970] sm:$0xff]
        %v1074 = vld [vmem:[%s179 + $0x1978] sm:$0xff]
        %v1075 = vld [vmem:[%s179 + $0x1980] sm:$0xff]
        %v1076 = vld [vmem:[%s179 + $0x1988] sm:$0xff]
        %v1077 = vld [vmem:[%s179 + $0x1990] sm:$0xff]
        %v1078 = vld [vmem:[%s179 + $0x1998] sm:$0xff]
        %v1079 = vld [vmem:[%s179 + $0x19a0] sm:$0xff]
        %v1080 = vld [vmem:[%s179 + $0x19a8] sm:$0xff]
        %v1081 = vld [vmem:[%s179 + $0x19b0] sm:$0xff]
        %v1082 = vld [vmem:[%s179 + $0x19b8] sm:$0xff]
        %v1083 = vld [vmem:[%s179 + $0x19c0] sm:$0xff]
        %v1084 = vld [vmem:[%s179 + $0x19c8] sm:$0xff]
        %v1085 = vld [vmem:[%s179 + $0x19d0] sm:$0xff]
        %v1086 = vld [vmem:[%s179 + $0x19d8] sm:$0xff]
        %v1087 = vld [vmem:[%s179 + $0x19e0] sm:$0xff]
        %v1088 = vld [vmem:[%s179 + $0x19e8] sm:$0xff]
        %v1089 = vld [vmem:[%s179 + $0x19f0] sm:$0xff]
        %v1090 = vld [vmem:[%s179 + $0x19f8] sm:$0xff]
        %v1091 = vld [vmem:[%s179 + $0x1a00] sm:$0xff]
        %v1092 = vld [vmem:[%s179 + $0x1a08] sm:$0xff]
        %v1093 = vld [vmem:[%s179 + $0x1a10] sm:$0xff]
        %v1094 = vld [vmem:[%s179 + $0x1a18] sm:$0xff]
        %v1095 = vld [vmem:[%s179 + $0x1a20] sm:$0xff]
        %v1096 = vld [vmem:[%s179 + $0x1a28] sm:$0xff]
        %v1097 = vld [vmem:[%s179 + $0x1a30] sm:$0xff]
        %v1098 = vld [vmem:[%s179 + $0x1a38] sm:$0xff]
        %v1099 = vld [vmem:[%s179 + $0x1a40] sm:$0xff]
        %v1100 = vld [vmem:[%s179 + $0x1a48] sm:$0xff]
        %v1101 = vld [vmem:[%s179 + $0x1a50] sm:$0xff]
        %v1102 = vld [vmem:[%s179 + $0x1a58] sm:$0xff]
        %v1103 = vld [vmem:[%s179 + $0x1a60] sm:$0xff]
        %v1104 = vld [vmem:[%s179 + $0x1a68] sm:$0xff]
        %v1105 = vld [vmem:[%s179 + $0x1a70] sm:$0xff]
        %v1106 = vld [vmem:[%s179 + $0x1a78] sm:$0xff]
        %v1107 = vld [vmem:[%s179 + $0x1a80] sm:$0xff]
        %v1108 = vld [vmem:[%s179 + $0x1a88] sm:$0xff]
        %v1109 = vld [vmem:[%s179 + $0x1a90] sm:$0xff]
        %v1110 = vld [vmem:[%s179 + $0x1a98] sm:$0xff]
        %v1111 = vld [vmem:[%s179 + $0x1aa0] sm:$0xff]
        %v1112 = vld [vmem:[%s179 + $0x1aa8] sm:$0xff]
        %v1113 = vld [vmem:[%s179 + $0x1ab0] sm:$0xff]
        %v1114 = vld [vmem:[%s179 + $0x1ab8] sm:$0xff]
        %v1115 = vld [vmem:[%s179 + $0x1ac0] sm:$0xff]
        %v1116 = vld [vmem:[%s179 + $0x1ac8] sm:$0xff]
        %v1117 = vld [vmem:[%s179 + $0x1ad0] sm:$0xff]
        %v1118 = vld [vmem:[%s179 + $0x1ad8] sm:$0xff]
        %v1119 = vld [vmem:[%s179 + $0x1ae0] sm:$0xff]
        %v1120 = vld [vmem:[%s179 + $0x1ae8] sm:$0xff]
        %v1121 = vld [vmem:[%s179 + $0x1af0] sm:$0xff]
        %v1122 = vld [vmem:[%s179 + $0x1af8] sm:$0xff]
        %v1123 = vld [vmem:[%s179 + $0x1b00] sm:$0xff]
        %v1124 = vld [vmem:[%s179 + $0x1b08] sm:$0xff]
        %v1125 = vld [vmem:[%s179 + $0x1b10] sm:$0xff]
        %v1126 = vld [vmem:[%s179 + $0x1b18] sm:$0xff]
        %v1127 = vld [vmem:[%s179 + $0x1b20] sm:$0xff]
        %v1128 = vld [vmem:[%s179 + $0x1b28] sm:$0xff]
        %v1129 = vld [vmem:[%s179 + $0x1b30] sm:$0xff]
        %v1130 = vld [vmem:[%s179 + $0x1b38] sm:$0xff]
        %v1131 = vld [vmem:[%s179 + $0x1b40] sm:$0xff]
        %v1132 = vld [vmem:[%s179 + $0x1b48] sm:$0xff]
        %v1133 = vld [vmem:[%s179 + $0x1b50] sm:$0xff]
        %v1134 = vld [vmem:[%s179 + $0x1b58] sm:$0xff]
        %v1135 = vld [vmem:[%s179 + $0x1b60] sm:$0xff]
        %v1136 = vld [vmem:[%s179 + $0x1b68] sm:$0xff]
        %v1137 = vld [vmem:[%s179 + $0x1b70] sm:$0xff]
        %v1138 = vld [vmem:[%s179 + $0x1b78] sm:$0xff]
        %v1139 = vld [vmem:[%s179 + $0x1b80] sm:$0xff]
        %v1140 = vld [vmem:[%s179 + $0x1b88] sm:$0xff]
        %v1141 = vld [vmem:[%s179 + $0x1b90] sm:$0xff]
        %v1142 = vld [vmem:[%s179 + $0x1b98] sm:$0xff]
        %v1143 = vld [vmem:[%s179 + $0x1ba0] sm:$0xff]
        %v1144 = vld [vmem:[%s179 + $0x1ba8] sm:$0xff]
        %v1145 = vld [vmem:[%s179 + $0x1bb0] sm:$0xff]
        %v1146 = vld [vmem:[%s179 + $0x1bb8] sm:$0xff]
        %v1147 = vld [vmem:[%s179 + $0x1bc0] sm:$0xff]
        %v1148 = vld [vmem:[%s179 + $0x1bc8] sm:$0xff]
        %v1149 = vld [vmem:[%s179 + $0x1bd0] sm:$0xff]
        %v1150 = vld [vmem:[%s179 + $0x1bd8] sm:$0xff]
        %v1151 = vld [vmem:[%s179 + $0x1be0] sm:$0xff]
        %v1152 = vld [vmem:[%s179 + $0x1be8] sm:$0xff]
        %v1153 = vld [vmem:[%s179 + $0x1bf0] sm:$0xff]
        %v1154 = vld [vmem:[%s179 + $0x1bf8] sm:$0xff]
        %v1155 = vld [vmem:[%s179 + $0x1c00] sm:$0xff]
        %v1156 = vld [vmem:[%s179 + $0x1c08] sm:$0xff]
        %v1157 = vld [vmem:[%s179 + $0x1c10] sm:$0xff]
        %v1158 = vld [vmem:[%s179 + $0x1c18] sm:$0xff]
        %v1159 = vld [vmem:[%s179 + $0x1c20] sm:$0xff]
        %v1160 = vld [vmem:[%s179 + $0x1c28] sm:$0xff]
        %v1161 = vld [vmem:[%s179 + $0x1c30] sm:$0xff]
        %v1162 = vld [vmem:[%s179 + $0x1c38] sm:$0xff]
        %v1163 = vld [vmem:[%s179 + $0x1c40] sm:$0xff]
        %v1164 = vld [vmem:[%s179 + $0x1c48] sm:$0xff]
        %v1165 = vld [vmem:[%s179 + $0x1c50] sm:$0xff]
        %v1166 = vld [vmem:[%s179 + $0x1c58] sm:$0xff]
        %v1167 = vld [vmem:[%s179 + $0x1c60] sm:$0xff]
        %v1168 = vld [vmem:[%s179 + $0x1c68] sm:$0xff]
        %v1169 = vld [vmem:[%s179 + $0x1c70] sm:$0xff]
        %v1170 = vld [vmem:[%s179 + $0x1c78] sm:$0xff]
        %v1171 = vld [vmem:[%s179 + $0x1c80] sm:$0xff]
        %v1172 = vld [vmem:[%s179 + $0x1c88] sm:$0xff]
        %v1173 = vld [vmem:[%s179 + $0x1c90] sm:$0xff]
        %v1174 = vld [vmem:[%s179 + $0x1c98] sm:$0xff]
        %v1175 = vld [vmem:[%s179 + $0x1ca0] sm:$0xff]
        %v1176 = vld [vmem:[%s179 + $0x1ca8] sm:$0xff]
        %v1177 = vld [vmem:[%s179 + $0x1cb0] sm:$0xff]
        %v1178 = vld [vmem:[%s179 + $0x1cb8] sm:$0xff]
        %v1179 = vld [vmem:[%s179 + $0x1cc0] sm:$0xff]
        %v1180 = vld [vmem:[%s179 + $0x1cc8] sm:$0xff]
        %v1181 = vld [vmem:[%s179 + $0x1cd0] sm:$0xff]
        %v1182 = vld [vmem:[%s179 + $0x1cd8] sm:$0xff]
        %v1183 = vld [vmem:[%s179 + $0x1ce0] sm:$0xff]
        %v1184 = vld [vmem:[%s179 + $0x1ce8] sm:$0xff]
        %v1185 = vld [vmem:[%s179 + $0x1cf0] sm:$0xff]
        %v1186 = vld [vmem:[%s179 + $0x1cf8] sm:$0xff]
        %v1187 = vld [vmem:[%s179 + $0x1d00] sm:$0xff]
        %v1188 = vld [vmem:[%s179 + $0x1d08] sm:$0xff]
        %v1189 = vld [vmem:[%s179 + $0x1d10] sm:$0xff]
        %v1190 = vld [vmem:[%s179 + $0x1d18] sm:$0xff]
        %v1191 = vld [vmem:[%s179 + $0x1d20] sm:$0xff]
        %v1192 = vld [vmem:[%s179 + $0x1d28] sm:$0xff]
        %v1193 = vld [vmem:[%s179 + $0x1d30] sm:$0xff]
        %v1194 = vld [vmem:[%s179 + $0x1d38] sm:$0xff]
        %v1195 = vld [vmem:[%s179 + $0x1d40] sm:$0xff]
        %v1196 = vld [vmem:[%s179 + $0x1d48] sm:$0xff]
        %v1197 = vld [vmem:[%s179 + $0x1d50] sm:$0xff]
        %v1198 = vld [vmem:[%s179 + $0x1d58] sm:$0xff]
        %v1199 = vld [vmem:[%s179 + $0x1d60] sm:$0xff]
        %v1200 = vld [vmem:[%s179 + $0x1d68] sm:$0xff]
        %v1201 = vld [vmem:[%s179 + $0x1d70] sm:$0xff]
        %v1202 = vld [vmem:[%s179 + $0x1d78] sm:$0xff]
        %v1203 = vld [vmem:[%s179 + $0x1d80] sm:$0xff]
        %v1204 = vld [vmem:[%s179 + $0x1d88] sm:$0xff]
        %v1205 = vld [vmem:[%s179 + $0x1d90] sm:$0xff]
        %v1206 = vld [vmem:[%s179 + $0x1d98] sm:$0xff]
        %v1207 = vld [vmem:[%s179 + $0x1da0] sm:$0xff]
        %v1208 = vld [vmem:[%s179 + $0x1da8] sm:$0xff]
        %v1209 = vld [vmem:[%s179 + $0x1db0] sm:$0xff]
        %v1210 = vld [vmem:[%s179 + $0x1db8] sm:$0xff]
        %v1211 = vld [vmem:[%s179 + $0x1dc0] sm:$0xff]
        %v1212 = vld [vmem:[%s179 + $0x1dc8] sm:$0xff]
        %v1213 = vld [vmem:[%s179 + $0x1dd0] sm:$0xff]
        %v1214 = vld [vmem:[%s179 + $0x1dd8] sm:$0xff]
        %v1215 = vld [vmem:[%s179 + $0x1de0] sm:$0xff]
        %v1216 = vld [vmem:[%s179 + $0x1de8] sm:$0xff]
        %v1217 = vld [vmem:[%s179 + $0x1df0] sm:$0xff]
        %v1218 = vld [vmem:[%s179 + $0x1df8] sm:$0xff]
        %v1219 = vld [vmem:[%s179 + $0x1e00] sm:$0xff]
        %v1220 = vld [vmem:[%s179 + $0x1e08] sm:$0xff]
        %v1221 = vld [vmem:[%s179 + $0x1e10] sm:$0xff]
        %v1222 = vld [vmem:[%s179 + $0x1e18] sm:$0xff]
        %v1223 = vld [vmem:[%s179 + $0x1e20] sm:$0xff]
        %v1224 = vld [vmem:[%s179 + $0x1e28] sm:$0xff]
        %v1225 = vld [vmem:[%s179 + $0x1e30] sm:$0xff]
        %v1226 = vld [vmem:[%s179 + $0x1e38] sm:$0xff]
        %v1227 = vld [vmem:[%s179 + $0x1e40] sm:$0xff]
        %v1228 = vld [vmem:[%s179 + $0x1e48] sm:$0xff]
        %v1229 = vld [vmem:[%s179 + $0x1e50] sm:$0xff]
        %v1230 = vld [vmem:[%s179 + $0x1e58] sm:$0xff]
        %v1231 = vld [vmem:[%s179 + $0x1e60] sm:$0xff]
        %v1232 = vld [vmem:[%s179 + $0x1e68] sm:$0xff]
        %v1233 = vld [vmem:[%s179 + $0x1e70] sm:$0xff]
        %v1234 = vld [vmem:[%s179 + $0x1e78] sm:$0xff]
        %v1235 = vld [vmem:[%s179 + $0x1e80] sm:$0xff]
        %v1236 = vld [vmem:[%s179 + $0x1e88] sm:$0xff]
        %v1237 = vld [vmem:[%s179 + $0x1e90] sm:$0xff]
        %v1238 = vld [vmem:[%s179 + $0x1e98] sm:$0xff]
        %v1239 = vld [vmem:[%s179 + $0x1ea0] sm:$0xff]
        %v1240 = vld [vmem:[%s179 + $0x1ea8] sm:$0xff]
        %v1241 = vld [vmem:[%s179 + $0x1eb0] sm:$0xff]
        %v1242 = vld [vmem:[%s179 + $0x1eb8] sm:$0xff]
        %v1243 = vld [vmem:[%s179 + $0x1ec0] sm:$0xff]
        %v1244 = vld [vmem:[%s179 + $0x1ec8] sm:$0xff]
        %v1245 = vld [vmem:[%s179 + $0x1ed0] sm:$0xff]
        %v1246 = vld [vmem:[%s179 + $0x1ed8] sm:$0xff]
        %v1247 = vld [vmem:[%s179 + $0x1ee0] sm:$0xff]
        %v1248 = vld [vmem:[%s179 + $0x1ee8] sm:$0xff]
        %v1249 = vld [vmem:[%s179 + $0x1ef0] sm:$0xff]
        %v1250 = vld [vmem:[%s179 + $0x1ef8] sm:$0xff]
        %v1251 = vld [vmem:[%s179 + $0x1f00] sm:$0xff]
        %v1252 = vld [vmem:[%s179 + $0x1f08] sm:$0xff]
        %v1253 = vld [vmem:[%s179 + $0x1f10] sm:$0xff]
        %v1254 = vld [vmem:[%s179 + $0x1f18] sm:$0xff]
        %v1255 = vld [vmem:[%s179 + $0x1f20] sm:$0xff]
        %v1256 = vld [vmem:[%s179 + $0x1f28] sm:$0xff]
        %v1257 = vld [vmem:[%s179 + $0x1f30] sm:$0xff]
        %v1258 = vld [vmem:[%s179 + $0x1f38] sm:$0xff]
        %v1259 = vld [vmem:[%s179 + $0x1f40] sm:$0xff]
        %v1260 = vld [vmem:[%s179 + $0x1f48] sm:$0xff]
        %v1261 = vld [vmem:[%s179 + $0x1f50] sm:$0xff]
        %v1262 = vld [vmem:[%s179 + $0x1f58] sm:$0xff]
        %v1263 = vld [vmem:[%s179 + $0x1f60] sm:$0xff]
        %v1264 = vld [vmem:[%s179 + $0x1f68] sm:$0xff]
        %v1265 = vld [vmem:[%s179 + $0x1f70] sm:$0xff]
        %v1266 = vld [vmem:[%s179 + $0x1f78] sm:$0xff]
        %v1267 = vld [vmem:[%s179 + $0x1f80] sm:$0xff]
        %v1268 = vld [vmem:[%s179 + $0x1f88] sm:$0xff]
        %v1269 = vld [vmem:[%s179 + $0x1f90] sm:$0xff]
        %v1270 = vld [vmem:[%s179 + $0x1f98] sm:$0xff]
        %v1271 = vld [vmem:[%s179 + $0x1fa0] sm:$0xff]
        %v1272 = vld [vmem:[%s179 + $0x1fa8] sm:$0xff]
        %v1273 = vld [vmem:[%s179 + $0x1fb0] sm:$0xff]
        %v1274 = vld [vmem:[%s179 + $0x1fb8] sm:$0xff]
        %v1275 = vld [vmem:[%s179 + $0x1fc0] sm:$0xff]
        %v1276 = vld [vmem:[%s179 + $0x1fc8] sm:$0xff]
        %v1277 = vld [vmem:[%s179 + $0x1fd0] sm:$0xff]
        %v1278 = vld [vmem:[%s179 + $0x1fd8] sm:$0xff]
        %v1279 = vld [vmem:[%s179 + $0x1fe0] sm:$0xff]
        %v1280 = vld [vmem:[%s179 + $0x1fe8] sm:$0xff]
        %v1281 = vld [vmem:[%s179 + $0x1ff0] sm:$0xff]
        %v1282 = vld [vmem:[%s179 + $0x1ff8] sm:$0xff]
        %1283 = vmatprep.subr.mxu0 0.0
        %1284 = vmatpush1.msra.mxu0 %v274
        %1285 = vmatprep.subr.mxu0 0.0
        %1286 = vmatpush1.msra.mxu0 %v273
        %1287 = vmatprep.subr.mxu0 0.0
        %1288 = vmatpush1.msra.mxu0 %v272
        %1289 = vmatprep.subr.mxu0 0.0
        %1290 = vmatpush1.msra.mxu0 %v271
        %1291 = vmatprep.subr.mxu0 0.0
        %1292 = vmatpush1.msra.mxu0 %v270
        %1293 = vmatprep.subr.mxu0 0.0
        %1294 = vmatpush1.msra.mxu0 %v269
        %1295 = vmatprep.subr.mxu0 0.0
        %1296 = vmatpush1.msra.mxu0 %v268
        %1297 = vmatprep.subr.mxu0 0.0
        %1298 = vmatpush1.msra.mxu0 %v267
        %1299 = vmatprep.subr.mxu0 0.0
        %1300 = vmatpush1.msra.mxu0 %v266
        %1301 = vmatprep.subr.mxu0 0.0
        %1302 = vmatpush1.msra.mxu0 %v265
        %1303 = vmatprep.subr.mxu0 0.0
        %1304 = vmatpush1.msra.mxu0 %v264
        %1305 = vmatprep.subr.mxu0 0.0
        %1306 = vmatpush1.msra.mxu0 %v263
        %1307 = vmatprep.subr.mxu0 0.0
        %1308 = vmatpush1.msra.mxu0 %v262
        %1309 = vmatprep.subr.mxu0 0.0
        %1310 = vmatpush1.msra.mxu0 %v261
        %1311 = vmatprep.subr.mxu0 0.0
        %1312 = vmatpush1.msra.mxu0 %v260
        %1313 = vmatprep.subr.mxu0 0.0
        %1314 = vmatpush1.msra.mxu0 %v259
        %1315 = vmatprep.subr.mxu0 0.0
        %1316 = vmatpush2.msra.mxu0 %v290
        %1317 = vmatprep.subr.mxu0 0.0
        %1318 = vmatpush2.msra.mxu0 %v289
        %1319 = vmatprep.subr.mxu0 0.0
        %1320 = vmatpush2.msra.mxu0 %v288
        %1321 = vmatprep.subr.mxu0 0.0
        %1322 = vmatpush2.msra.mxu0 %v287
        %1323 = vmatprep.subr.mxu0 0.0
        %1324 = vmatpush2.msra.mxu0 %v286
        %1325 = vmatprep.subr.mxu0 0.0
        %1326 = vmatpush2.msra.mxu0 %v285
        %1327 = vmatprep.subr.mxu0 0.0
        %1328 = vmatpush2.msra.mxu0 %v284
        %1329 = vmatprep.subr.mxu0 0.0
        %1330 = vmatpush2.msra.mxu0 %v283
        %1331 = vmatprep.subr.mxu0 0.0
        %1332 = vmatpush2.msra.mxu0 %v282
        %1333 = vmatprep.subr.mxu0 0.0
        %1334 = vmatpush2.msra.mxu0 %v281
        %1335 = vmatprep.subr.mxu0 0.0
        %1336 = vmatpush2.msra.mxu0 %v280
        %1337 = vmatprep.subr.mxu0 0.0
        %1338 = vmatpush2.msra.mxu0 %v279
        %1339 = vmatprep.subr.mxu0 0.0
        %1340 = vmatpush2.msra.mxu0 %v278
        %1341 = vmatprep.subr.mxu0 0.0
        %1342 = vmatpush2.msra.mxu0 %v277
        %1343 = vmatprep.subr.mxu0 0.0
        %1344 = vmatpush2.msra.mxu0 %v276
        %1345 = vmatprep.subr.mxu0 0.0
        %1346 = vmatpush2.msra.mxu0 %v275
        %1347 = vmatprep.mubr.f32.mxu0 %v196
        %1348 = vmatmul.mubr.f32.gmra.mxu0 %v195
        %v1349 = vpop.f32.mrf.mxu0
        %v1350 = vadd.f32 0.0, %v1349
        %v1351 = vpop.f32.mrf.mxu0
        %1352 = vdwg.mxu0
        %1353 = vmatprep.subr.mxu0 0.0
        %1354 = vmatpush1.msra.mxu0 %v306
        %1355 = vmatprep.subr.mxu0 0.0
        %1356 = vmatpush1.msra.mxu0 %v305
        %1357 = vmatprep.subr.mxu0 0.0
        %1358 = vmatpush1.msra.mxu0 %v304
        %1359 = vmatprep.subr.mxu0 0.0
        %1360 = vmatpush1.msra.mxu0 %v303
        %1361 = vmatprep.subr.mxu0 0.0
        %1362 = vmatpush1.msra.mxu0 %v302
        %1363 = vmatprep.subr.mxu0 0.0
        %1364 = vmatpush1.msra.mxu0 %v301
        %1365 = vmatprep.subr.mxu0 0.0
        %1366 = vmatpush1.msra.mxu0 %v300
        %1367 = vmatprep.subr.mxu0 0.0
        %1368 = vmatpush1.msra.mxu0 %v299
        %1369 = vmatprep.subr.mxu0 0.0
        %1370 = vmatpush1.msra.mxu0 %v298
        %1371 = vmatprep.subr.mxu0 0.0
        %1372 = vmatpush1.msra.mxu0 %v297
        %1373 = vmatprep.subr.mxu0 0.0
        %1374 = vmatpush1.msra.mxu0 %v296
        %1375 = vmatprep.subr.mxu0 0.0
        %1376 = vmatpush1.msra.mxu0 %v295
        %1377 = vmatprep.subr.mxu0 0.0
        %1378 = vmatpush1.msra.mxu0 %v294
        %1379 = vmatprep.subr.mxu0 0.0
        %1380 = vmatpush1.msra.mxu0 %v293
        %1381 = vmatprep.subr.mxu0 0.0
        %1382 = vmatpush1.msra.mxu0 %v292
        %1383 = vmatprep.subr.mxu0 0.0
        %1384 = vmatpush1.msra.mxu0 %v291
        %1385 = vmatprep.subr.mxu0 0.0
        %1386 = vmatpush2.msra.mxu0 %v322
        %1387 = vmatprep.subr.mxu0 0.0
        %1388 = vmatpush2.msra.mxu0 %v321
        %1389 = vmatprep.subr.mxu0 0.0
        %1390 = vmatpush2.msra.mxu0 %v320
        %1391 = vmatprep.subr.mxu0 0.0
        %1392 = vmatpush2.msra.mxu0 %v319
        %1393 = vmatprep.subr.mxu0 0.0
        %1394 = vmatpush2.msra.mxu0 %v318
        %1395 = vmatprep.subr.mxu0 0.0
        %1396 = vmatpush2.msra.mxu0 %v317
        %1397 = vmatprep.subr.mxu0 0.0
        %1398 = vmatpush2.msra.mxu0 %v316
        %1399 = vmatprep.subr.mxu0 0.0
        %1400 = vmatpush2.msra.mxu0 %v315
        %1401 = vmatprep.subr.mxu0 0.0
        %1402 = vmatpush2.msra.mxu0 %v314
        %1403 = vmatprep.subr.mxu0 0.0
        %1404 = vmatpush2.msra.mxu0 %v313
        %1405 = vmatprep.subr.mxu0 0.0
        %1406 = vmatpush2.msra.mxu0 %v312
        %1407 = vmatprep.subr.mxu0 0.0
        %1408 = vmatpush2.msra.mxu0 %v311
        %1409 = vmatprep.subr.mxu0 0.0
        %1410 = vmatpush2.msra.mxu0 %v310
        %1411 = vmatprep.subr.mxu0 0.0
        %1412 = vmatpush2.msra.mxu0 %v309
        %1413 = vmatprep.subr.mxu0 0.0
        %1414 = vmatpush2.msra.mxu0 %v308
        %1415 = vmatprep.subr.mxu0 0.0
        %1416 = vmatpush2.msra.mxu0 %v307
        %1417 = vmatprep.mubr.f32.mxu0 %v198
        %1418 = vmatmul.mubr.f32.gmra.mxu0 %v197
        %v1419 = vpop.f32.mrf.mxu0
        %v1420 = vadd.f32 %v1350, %v1419
        %v1421 = vpop.f32.mrf.mxu0
        %1422 = vdwg.mxu0
        %1423 = vmatprep.subr.mxu0 0.0
        %1424 = vmatpush1.msra.mxu0 %v338
        %1425 = vmatprep.subr.mxu0 0.0
        %1426 = vmatpush1.msra.mxu0 %v337
        %1427 = vmatprep.subr.mxu0 0.0
        %1428 = vmatpush1.msra.mxu0 %v336
        %1429 = vmatprep.subr.mxu0 0.0
        %1430 = vmatpush1.msra.mxu0 %v335
        %1431 = vmatprep.subr.mxu0 0.0
        %1432 = vmatpush1.msra.mxu0 %v334
        %1433 = vmatprep.subr.mxu0 0.0
        %1434 = vmatpush1.msra.mxu0 %v333
        %1435 = vmatprep.subr.mxu0 0.0
        %1436 = vmatpush1.msra.mxu0 %v332
        %1437 = vmatprep.subr.mxu0 0.0
        %1438 = vmatpush1.msra.mxu0 %v331
        %1439 = vmatprep.subr.mxu0 0.0
        %1440 = vmatpush1.msra.mxu0 %v330
        %1441 = vmatprep.subr.mxu0 0.0
        %1442 = vmatpush1.msra.mxu0 %v329
        %1443 = vmatprep.subr.mxu0 0.0
        %1444 = vmatpush1.msra.mxu0 %v328
        %1445 = vmatprep.subr.mxu0 0.0
        %1446 = vmatpush1.msra.mxu0 %v327
        %1447 = vmatprep.subr.mxu0 0.0
        %1448 = vmatpush1.msra.mxu0 %v326
        %1449 = vmatprep.subr.mxu0 0.0
        %1450 = vmatpush1.msra.mxu0 %v325
        %1451 = vmatprep.subr.mxu0 0.0
        %1452 = vmatpush1.msra.mxu0 %v324
        %1453 = vmatprep.subr.mxu0 0.0
        %1454 = vmatpush1.msra.mxu0 %v323
        %1455 = vmatprep.subr.mxu0 0.0
        %1456 = vmatpush2.msra.mxu0 %v354
        %1457 = vmatprep.subr.mxu0 0.0
        %1458 = vmatpush2.msra.mxu0 %v353
        %1459 = vmatprep.subr.mxu0 0.0
        %1460 = vmatpush2.msra.mxu0 %v352
        %1461 = vmatprep.subr.mxu0 0.0
        %1462 = vmatpush2.msra.mxu0 %v351
        %1463 = vmatprep.subr.mxu0 0.0
        %1464 = vmatpush2.msra.mxu0 %v350
        %1465 = vmatprep.subr.mxu0 0.0
        %1466 = vmatpush2.msra.mxu0 %v349
        %1467 = vmatprep.subr.mxu0 0.0
        %1468 = vmatpush2.msra.mxu0 %v348
        %1469 = vmatprep.subr.mxu0 0.0
        %1470 = vmatpush2.msra.mxu0 %v347
        %1471 = vmatprep.subr.mxu0 0.0
        %1472 = vmatpush2.msra.mxu0 %v346
        %1473 = vmatprep.subr.mxu0 0.0
        %1474 = vmatpush2.msra.mxu0 %v345
        %1475 = vmatprep.subr.mxu0 0.0
        %1476 = vmatpush2.msra.mxu0 %v344
        %1477 = vmatprep.subr.mxu0 0.0
        %1478 = vmatpush2.msra.mxu0 %v343
        %1479 = vmatprep.subr.mxu0 0.0
        %1480 = vmatpush2.msra.mxu0 %v342
        %1481 = vmatprep.subr.mxu0 0.0
        %1482 = vmatpush2.msra.mxu0 %v341
        %1483 = vmatprep.subr.mxu0 0.0
        %1484 = vmatpush2.msra.mxu0 %v340
        %1485 = vmatprep.subr.mxu0 0.0
        %1486 = vmatpush2.msra.mxu0 %v339
        %1487 = vmatprep.mubr.f32.mxu0 %v200
        %1488 = vmatmul.mubr.f32.gmra.mxu0 %v199
        %v1489 = vpop.f32.mrf.mxu0
        %v1490 = vadd.f32 %v1420, %v1489
        %v1491 = vpop.f32.mrf.mxu0
        %1492 = vdwg.mxu0
        %1493 = vmatprep.subr.mxu0 0.0
        %1494 = vmatpush1.msra.mxu0 %v370
        %1495 = vmatprep.subr.mxu0 0.0
        %1496 = vmatpush1.msra.mxu0 %v369
        %1497 = vmatprep.subr.mxu0 0.0
        %1498 = vmatpush1.msra.mxu0 %v368
        %1499 = vmatprep.subr.mxu0 0.0
        %1500 = vmatpush1.msra.mxu0 %v367
        %1501 = vmatprep.subr.mxu0 0.0
        %1502 = vmatpush1.msra.mxu0 %v366
        %1503 = vmatprep.subr.mxu0 0.0
        %1504 = vmatpush1.msra.mxu0 %v365
        %1505 = vmatprep.subr.mxu0 0.0
        %1506 = vmatpush1.msra.mxu0 %v364
        %1507 = vmatprep.subr.mxu0 0.0
        %1508 = vmatpush1.msra.mxu0 %v363
        %1509 = vmatprep.subr.mxu0 0.0
        %1510 = vmatpush1.msra.mxu0 %v362
        %1511 = vmatprep.subr.mxu0 0.0
        %1512 = vmatpush1.msra.mxu0 %v361
        %1513 = vmatprep.subr.mxu0 0.0
        %1514 = vmatpush1.msra.mxu0 %v360
        %1515 = vmatprep.subr.mxu0 0.0
        %1516 = vmatpush1.msra.mxu0 %v359
        %1517 = vmatprep.subr.mxu0 0.0
        %1518 = vmatpush1.msra.mxu0 %v358
        %1519 = vmatprep.subr.mxu0 0.0
        %1520 = vmatpush1.msra.mxu0 %v357
        %1521 = vmatprep.subr.mxu0 0.0
        %1522 = vmatpush1.msra.mxu0 %v356
        %1523 = vmatprep.subr.mxu0 0.0
        %1524 = vmatpush1.msra.mxu0 %v355
        %1525 = vmatprep.subr.mxu0 0.0
        %1526 = vmatpush2.msra.mxu0 %v386
        %1527 = vmatprep.subr.mxu0 0.0
        %1528 = vmatpush2.msra.mxu0 %v385
        %1529 = vmatprep.subr.mxu0 0.0
        %1530 = vmatpush2.msra.mxu0 %v384
        %1531 = vmatprep.subr.mxu0 0.0
        %1532 = vmatpush2.msra.mxu0 %v383
        %1533 = vmatprep.subr.mxu0 0.0
        %1534 = vmatpush2.msra.mxu0 %v382
        %1535 = vmatprep.subr.mxu0 0.0
        %1536 = vmatpush2.msra.mxu0 %v381
        %1537 = vmatprep.subr.mxu0 0.0
        %1538 = vmatpush2.msra.mxu0 %v380
        %1539 = vmatprep.subr.mxu0 0.0
        %1540 = vmatpush2.msra.mxu0 %v379
        %1541 = vmatprep.subr.mxu0 0.0
        %1542 = vmatpush2.msra.mxu0 %v378
        %1543 = vmatprep.subr.mxu0 0.0
        %1544 = vmatpush2.msra.mxu0 %v377
        %1545 = vmatprep.subr.mxu0 0.0
        %1546 = vmatpush2.msra.mxu0 %v376
        %1547 = vmatprep.subr.mxu0 0.0
        %1548 = vmatpush2.msra.mxu0 %v375
        %1549 = vmatprep.subr.mxu0 0.0
        %1550 = vmatpush2.msra.mxu0 %v374
        %1551 = vmatprep.subr.mxu0 0.0
        %1552 = vmatpush2.msra.mxu0 %v373
        %1553 = vmatprep.subr.mxu0 0.0
        %1554 = vmatpush2.msra.mxu0 %v372
        %1555 = vmatprep.subr.mxu0 0.0
        %1556 = vmatpush2.msra.mxu0 %v371
        %1557 = vmatprep.mubr.f32.mxu0 %v202
        %1558 = vmatmul.mubr.f32.gmra.mxu0 %v201
        %v1559 = vpop.f32.mrf.mxu0
        %v1560 = vadd.f32 %v1490, %v1559
        %v1561 = vpop.f32.mrf.mxu0
        %1562 = vdwg.mxu0
        %1563 = vmatprep.subr.mxu0 0.0
        %1564 = vmatpush1.msra.mxu0 %v402
        %1565 = vmatprep.subr.mxu0 0.0
        %1566 = vmatpush1.msra.mxu0 %v401
        %1567 = vmatprep.subr.mxu0 0.0
        %1568 = vmatpush1.msra.mxu0 %v400
        %1569 = vmatprep.subr.mxu0 0.0
        %1570 = vmatpush1.msra.mxu0 %v399
        %1571 = vmatprep.subr.mxu0 0.0
        %1572 = vmatpush1.msra.mxu0 %v398
        %1573 = vmatprep.subr.mxu0 0.0
        %1574 = vmatpush1.msra.mxu0 %v397
        %1575 = vmatprep.subr.mxu0 0.0
        %1576 = vmatpush1.msra.mxu0 %v396
        %1577 = vmatprep.subr.mxu0 0.0
        %1578 = vmatpush1.msra.mxu0 %v395
        %1579 = vmatprep.subr.mxu0 0.0
        %1580 = vmatpush1.msra.mxu0 %v394
        %1581 = vmatprep.subr.mxu0 0.0
        %1582 = vmatpush1.msra.mxu0 %v393
        %1583 = vmatprep.subr.mxu0 0.0
        %1584 = vmatpush1.msra.mxu0 %v392
        %1585 = vmatprep.subr.mxu0 0.0
        %1586 = vmatpush1.msra.mxu0 %v391
        %1587 = vmatprep.subr.mxu0 0.0
        %1588 = vmatpush1.msra.mxu0 %v390
        %1589 = vmatprep.subr.mxu0 0.0
        %1590 = vmatpush1.msra.mxu0 %v389
        %1591 = vmatprep.subr.mxu0 0.0
        %1592 = vmatpush1.msra.mxu0 %v388
        %1593 = vmatprep.subr.mxu0 0.0
        %1594 = vmatpush1.msra.mxu0 %v387
        %1595 = vmatprep.subr.mxu0 0.0
        %1596 = vmatpush2.msra.mxu0 %v418
        %1597 = vmatprep.subr.mxu0 0.0
        %1598 = vmatpush2.msra.mxu0 %v417
        %1599 = vmatprep.subr.mxu0 0.0
        %1600 = vmatpush2.msra.mxu0 %v416
        %1601 = vmatprep.subr.mxu0 0.0
        %1602 = vmatpush2.msra.mxu0 %v415
        %1603 = vmatprep.subr.mxu0 0.0
        %1604 = vmatpush2.msra.mxu0 %v414
        %1605 = vmatprep.subr.mxu0 0.0
        %1606 = vmatpush2.msra.mxu0 %v413
        %1607 = vmatprep.subr.mxu0 0.0
        %1608 = vmatpush2.msra.mxu0 %v412
        %1609 = vmatprep.subr.mxu0 0.0
        %1610 = vmatpush2.msra.mxu0 %v411
        %1611 = vmatprep.subr.mxu0 0.0
        %1612 = vmatpush2.msra.mxu0 %v410
        %1613 = vmatprep.subr.mxu0 0.0
        %1614 = vmatpush2.msra.mxu0 %v409
        %1615 = vmatprep.subr.mxu0 0.0
        %1616 = vmatpush2.msra.mxu0 %v408
        %1617 = vmatprep.subr.mxu0 0.0
        %1618 = vmatpush2.msra.mxu0 %v407
        %1619 = vmatprep.subr.mxu0 0.0
        %1620 = vmatpush2.msra.mxu0 %v406
        %1621 = vmatprep.subr.mxu0 0.0
        %1622 = vmatpush2.msra.mxu0 %v405
        %1623 = vmatprep.subr.mxu0 0.0
        %1624 = vmatpush2.msra.mxu0 %v404
        %1625 = vmatprep.subr.mxu0 0.0
        %1626 = vmatpush2.msra.mxu0 %v403
        %1627 = vmatprep.mubr.f32.mxu0 %v204
        %1628 = vmatmul.mubr.f32.gmra.mxu0 %v203
        %v1629 = vpop.f32.mrf.mxu0
        %v1630 = vadd.f32 %v1560, %v1629
        %v1631 = vpop.f32.mrf.mxu0
        %1632 = vdwg.mxu0
        %1633 = vmatprep.subr.mxu0 0.0
        %1634 = vmatpush1.msra.mxu0 %v434
        %1635 = vmatprep.subr.mxu0 0.0
        %1636 = vmatpush1.msra.mxu0 %v433
        %1637 = vmatprep.subr.mxu0 0.0
        %1638 = vmatpush1.msra.mxu0 %v432
        %1639 = vmatprep.subr.mxu0 0.0
        %1640 = vmatpush1.msra.mxu0 %v431
        %1641 = vmatprep.subr.mxu0 0.0
        %1642 = vmatpush1.msra.mxu0 %v430
        %1643 = vmatprep.subr.mxu0 0.0
        %1644 = vmatpush1.msra.mxu0 %v429
        %1645 = vmatprep.subr.mxu0 0.0
        %1646 = vmatpush1.msra.mxu0 %v428
        %1647 = vmatprep.subr.mxu0 0.0
        %1648 = vmatpush1.msra.mxu0 %v427
        %1649 = vmatprep.subr.mxu0 0.0
        %1650 = vmatpush1.msra.mxu0 %v426
        %1651 = vmatprep.subr.mxu0 0.0
        %1652 = vmatpush1.msra.mxu0 %v425
        %1653 = vmatprep.subr.mxu0 0.0
        %1654 = vmatpush1.msra.mxu0 %v424
        %1655 = vmatprep.subr.mxu0 0.0
        %1656 = vmatpush1.msra.mxu0 %v423
        %1657 = vmatprep.subr.mxu0 0.0
        %1658 = vmatpush1.msra.mxu0 %v422
        %1659 = vmatprep.subr.mxu0 0.0
        %1660 = vmatpush1.msra.mxu0 %v421
        %1661 = vmatprep.subr.mxu0 0.0
        %1662 = vmatpush1.msra.mxu0 %v420
        %1663 = vmatprep.subr.mxu0 0.0
        %1664 = vmatpush1.msra.mxu0 %v419
        %1665 = vmatprep.subr.mxu0 0.0
        %1666 = vmatpush2.msra.mxu0 %v450
        %1667 = vmatprep.subr.mxu0 0.0
        %1668 = vmatpush2.msra.mxu0 %v449
        %1669 = vmatprep.subr.mxu0 0.0
        %1670 = vmatpush2.msra.mxu0 %v448
        %1671 = vmatprep.subr.mxu0 0.0
        %1672 = vmatpush2.msra.mxu0 %v447
        %1673 = vmatprep.subr.mxu0 0.0
        %1674 = vmatpush2.msra.mxu0 %v446
        %1675 = vmatprep.subr.mxu0 0.0
        %1676 = vmatpush2.msra.mxu0 %v445
        %1677 = vmatprep.subr.mxu0 0.0
        %1678 = vmatpush2.msra.mxu0 %v444
        %1679 = vmatprep.subr.mxu0 0.0
        %1680 = vmatpush2.msra.mxu0 %v443
        %1681 = vmatprep.subr.mxu0 0.0
        %1682 = vmatpush2.msra.mxu0 %v442
        %1683 = vmatprep.subr.mxu0 0.0
        %1684 = vmatpush2.msra.mxu0 %v441
        %1685 = vmatprep.subr.mxu0 0.0
        %1686 = vmatpush2.msra.mxu0 %v440
        %1687 = vmatprep.subr.mxu0 0.0
        %1688 = vmatpush2.msra.mxu0 %v439
        %1689 = vmatprep.subr.mxu0 0.0
        %1690 = vmatpush2.msra.mxu0 %v438
        %1691 = vmatprep.subr.mxu0 0.0
        %1692 = vmatpush2.msra.mxu0 %v437
        %1693 = vmatprep.subr.mxu0 0.0
        %1694 = vmatpush2.msra.mxu0 %v436
        %1695 = vmatprep.subr.mxu0 0.0
        %1696 = vmatpush2.msra.mxu0 %v435
        %1697 = vmatprep.mubr.f32.mxu0 %v206
        %1698 = vmatmul.mubr.f32.gmra.mxu0 %v205
        %v1699 = vpop.f32.mrf.mxu0
        %v1700 = vadd.f32 %v1630, %v1699
        %v1701 = vpop.f32.mrf.mxu0
        %1702 = vdwg.mxu0
        %1703 = vmatprep.subr.mxu0 0.0
        %1704 = vmatpush1.msra.mxu0 %v466
        %1705 = vmatprep.subr.mxu0 0.0
        %1706 = vmatpush1.msra.mxu0 %v465
        %1707 = vmatprep.subr.mxu0 0.0
        %1708 = vmatpush1.msra.mxu0 %v464
        %1709 = vmatprep.subr.mxu0 0.0
        %1710 = vmatpush1.msra.mxu0 %v463
        %1711 = vmatprep.subr.mxu0 0.0
        %1712 = vmatpush1.msra.mxu0 %v462
        %1713 = vmatprep.subr.mxu0 0.0
        %1714 = vmatpush1.msra.mxu0 %v461
        %1715 = vmatprep.subr.mxu0 0.0
        %1716 = vmatpush1.msra.mxu0 %v460
        %1717 = vmatprep.subr.mxu0 0.0
        %1718 = vmatpush1.msra.mxu0 %v459
        %1719 = vmatprep.subr.mxu0 0.0
        %1720 = vmatpush1.msra.mxu0 %v458
        %1721 = vmatprep.subr.mxu0 0.0
        %1722 = vmatpush1.msra.mxu0 %v457
        %1723 = vmatprep.subr.mxu0 0.0
        %1724 = vmatpush1.msra.mxu0 %v456
        %1725 = vmatprep.subr.mxu0 0.0
        %1726 = vmatpush1.msra.mxu0 %v455
        %1727 = vmatprep.subr.mxu0 0.0
        %1728 = vmatpush1.msra.mxu0 %v454
        %1729 = vmatprep.subr.mxu0 0.0
        %1730 = vmatpush1.msra.mxu0 %v453
        %1731 = vmatprep.subr.mxu0 0.0
        %1732 = vmatpush1.msra.mxu0 %v452
        %1733 = vmatprep.subr.mxu0 0.0
        %1734 = vmatpush1.msra.mxu0 %v451
        %1735 = vmatprep.subr.mxu0 0.0
        %1736 = vmatpush2.msra.mxu0 %v482
        %1737 = vmatprep.subr.mxu0 0.0
        %1738 = vmatpush2.msra.mxu0 %v481
        %1739 = vmatprep.subr.mxu0 0.0
        %1740 = vmatpush2.msra.mxu0 %v480
        %1741 = vmatprep.subr.mxu0 0.0
        %1742 = vmatpush2.msra.mxu0 %v479
        %1743 = vmatprep.subr.mxu0 0.0
        %1744 = vmatpush2.msra.mxu0 %v478
        %1745 = vmatprep.subr.mxu0 0.0
        %1746 = vmatpush2.msra.mxu0 %v477
        %1747 = vmatprep.subr.mxu0 0.0
        %1748 = vmatpush2.msra.mxu0 %v476
        %1749 = vmatprep.subr.mxu0 0.0
        %1750 = vmatpush2.msra.mxu0 %v475
        %1751 = vmatprep.subr.mxu0 0.0
        %1752 = vmatpush2.msra.mxu0 %v474
        %1753 = vmatprep.subr.mxu0 0.0
        %1754 = vmatpush2.msra.mxu0 %v473
        %1755 = vmatprep.subr.mxu0 0.0
        %1756 = vmatpush2.msra.mxu0 %v472
        %1757 = vmatprep.subr.mxu0 0.0
        %1758 = vmatpush2.msra.mxu0 %v471
        %1759 = vmatprep.subr.mxu0 0.0
        %1760 = vmatpush2.msra.mxu0 %v470
        %1761 = vmatprep.subr.mxu0 0.0
        %1762 = vmatpush2.msra.mxu0 %v469
        %1763 = vmatprep.subr.mxu0 0.0
        %1764 = vmatpush2.msra.mxu0 %v468
        %1765 = vmatprep.subr.mxu0 0.0
        %1766 = vmatpush2.msra.mxu0 %v467
        %1767 = vmatprep.mubr.f32.mxu0 %v208
        %1768 = vmatmul.mubr.f32.gmra.mxu0 %v207
        %v1769 = vpop.f32.mrf.mxu0
        %v1770 = vadd.f32 %v1700, %v1769
        %v1771 = vpop.f32.mrf.mxu0
        %1772 = vdwg.mxu0
        %1773 = vmatprep.subr.mxu0 0.0
        %1774 = vmatpush1.msra.mxu0 %v498
        %1775 = vmatprep.subr.mxu0 0.0
        %1776 = vmatpush1.msra.mxu0 %v497
        %1777 = vmatprep.subr.mxu0 0.0
        %1778 = vmatpush1.msra.mxu0 %v496
        %1779 = vmatprep.subr.mxu0 0.0
        %1780 = vmatpush1.msra.mxu0 %v495
        %1781 = vmatprep.subr.mxu0 0.0
        %1782 = vmatpush1.msra.mxu0 %v494
        %1783 = vmatprep.subr.mxu0 0.0
        %1784 = vmatpush1.msra.mxu0 %v493
        %1785 = vmatprep.subr.mxu0 0.0
        %1786 = vmatpush1.msra.mxu0 %v492
        %1787 = vmatprep.subr.mxu0 0.0
        %1788 = vmatpush1.msra.mxu0 %v491
        %1789 = vmatprep.subr.mxu0 0.0
        %1790 = vmatpush1.msra.mxu0 %v490
        %1791 = vmatprep.subr.mxu0 0.0
        %1792 = vmatpush1.msra.mxu0 %v489
        %1793 = vmatprep.subr.mxu0 0.0
        %1794 = vmatpush1.msra.mxu0 %v488
        %1795 = vmatprep.subr.mxu0 0.0
        %1796 = vmatpush1.msra.mxu0 %v487
        %1797 = vmatprep.subr.mxu0 0.0
        %1798 = vmatpush1.msra.mxu0 %v486
        %1799 = vmatprep.subr.mxu0 0.0
        %1800 = vmatpush1.msra.mxu0 %v485
        %1801 = vmatprep.subr.mxu0 0.0
        %1802 = vmatpush1.msra.mxu0 %v484
        %1803 = vmatprep.subr.mxu0 0.0
        %1804 = vmatpush1.msra.mxu0 %v483
        %1805 = vmatprep.subr.mxu0 0.0
        %1806 = vmatpush2.msra.mxu0 %v514
        %1807 = vmatprep.subr.mxu0 0.0
        %1808 = vmatpush2.msra.mxu0 %v513
        %1809 = vmatprep.subr.mxu0 0.0
        %1810 = vmatpush2.msra.mxu0 %v512
        %1811 = vmatprep.subr.mxu0 0.0
        %1812 = vmatpush2.msra.mxu0 %v511
        %1813 = vmatprep.subr.mxu0 0.0
        %1814 = vmatpush2.msra.mxu0 %v510
        %1815 = vmatprep.subr.mxu0 0.0
        %1816 = vmatpush2.msra.mxu0 %v509
        %1817 = vmatprep.subr.mxu0 0.0
        %1818 = vmatpush2.msra.mxu0 %v508
        %1819 = vmatprep.subr.mxu0 0.0
        %1820 = vmatpush2.msra.mxu0 %v507
        %1821 = vmatprep.subr.mxu0 0.0
        %1822 = vmatpush2.msra.mxu0 %v506
        %1823 = vmatprep.subr.mxu0 0.0
        %1824 = vmatpush2.msra.mxu0 %v505
        %1825 = vmatprep.subr.mxu0 0.0
        %1826 = vmatpush2.msra.mxu0 %v504
        %1827 = vmatprep.subr.mxu0 0.0
        %1828 = vmatpush2.msra.mxu0 %v503
        %1829 = vmatprep.subr.mxu0 0.0
        %1830 = vmatpush2.msra.mxu0 %v502
        %1831 = vmatprep.subr.mxu0 0.0
        %1832 = vmatpush2.msra.mxu0 %v501
        %1833 = vmatprep.subr.mxu0 0.0
        %1834 = vmatpush2.msra.mxu0 %v500
        %1835 = vmatprep.subr.mxu0 0.0
        %1836 = vmatpush2.msra.mxu0 %v499
        %1837 = vmatprep.mubr.f32.mxu0 %v210
        %1838 = vmatmul.mubr.f32.gmra.mxu0 %v209
        %v1839 = vpop.f32.mrf.mxu0
        %v1840 = vadd.f32 %v1770, %v1839
        %v1841 = vpop.f32.mrf.mxu0
        %1842 = vdwg.mxu0
        %1843 = vmatprep.subr.mxu0 0.0
        %1844 = vmatpush1.msra.mxu0 %v530
        %1845 = vmatprep.subr.mxu0 0.0
        %1846 = vmatpush1.msra.mxu0 %v529
        %1847 = vmatprep.subr.mxu0 0.0
        %1848 = vmatpush1.msra.mxu0 %v528
        %1849 = vmatprep.subr.mxu0 0.0
        %1850 = vmatpush1.msra.mxu0 %v527
        %1851 = vmatprep.subr.mxu0 0.0
        %1852 = vmatpush1.msra.mxu0 %v526
        %1853 = vmatprep.subr.mxu0 0.0
        %1854 = vmatpush1.msra.mxu0 %v525
        %1855 = vmatprep.subr.mxu0 0.0
        %1856 = vmatpush1.msra.mxu0 %v524
        %1857 = vmatprep.subr.mxu0 0.0
        %1858 = vmatpush1.msra.mxu0 %v523
        %1859 = vmatprep.subr.mxu0 0.0
        %1860 = vmatpush1.msra.mxu0 %v522
        %1861 = vmatprep.subr.mxu0 0.0
        %1862 = vmatpush1.msra.mxu0 %v521
        %1863 = vmatprep.subr.mxu0 0.0
        %1864 = vmatpush1.msra.mxu0 %v520
        %1865 = vmatprep.subr.mxu0 0.0
        %1866 = vmatpush1.msra.mxu0 %v519
        %1867 = vmatprep.subr.mxu0 0.0
        %1868 = vmatpush1.msra.mxu0 %v518
        %1869 = vmatprep.subr.mxu0 0.0
        %1870 = vmatpush1.msra.mxu0 %v517
        %1871 = vmatprep.subr.mxu0 0.0
        %1872 = vmatpush1.msra.mxu0 %v516
        %1873 = vmatprep.subr.mxu0 0.0
        %1874 = vmatpush1.msra.mxu0 %v515
        %1875 = vmatprep.subr.mxu0 0.0
        %1876 = vmatpush2.msra.mxu0 %v546
        %1877 = vmatprep.subr.mxu0 0.0
        %1878 = vmatpush2.msra.mxu0 %v545
        %1879 = vmatprep.subr.mxu0 0.0
        %1880 = vmatpush2.msra.mxu0 %v544
        %1881 = vmatprep.subr.mxu0 0.0
        %1882 = vmatpush2.msra.mxu0 %v543
        %1883 = vmatprep.subr.mxu0 0.0
        %1884 = vmatpush2.msra.mxu0 %v542
        %1885 = vmatprep.subr.mxu0 0.0
        %1886 = vmatpush2.msra.mxu0 %v541
        %1887 = vmatprep.subr.mxu0 0.0
        %1888 = vmatpush2.msra.mxu0 %v540
        %1889 = vmatprep.subr.mxu0 0.0
        %1890 = vmatpush2.msra.mxu0 %v539
        %1891 = vmatprep.subr.mxu0 0.0
        %1892 = vmatpush2.msra.mxu0 %v538
        %1893 = vmatprep.subr.mxu0 0.0
        %1894 = vmatpush2.msra.mxu0 %v537
        %1895 = vmatprep.subr.mxu0 0.0
        %1896 = vmatpush2.msra.mxu0 %v536
        %1897 = vmatprep.subr.mxu0 0.0
        %1898 = vmatpush2.msra.mxu0 %v535
        %1899 = vmatprep.subr.mxu0 0.0
        %1900 = vmatpush2.msra.mxu0 %v534
        %1901 = vmatprep.subr.mxu0 0.0
        %1902 = vmatpush2.msra.mxu0 %v533
        %1903 = vmatprep.subr.mxu0 0.0
        %1904 = vmatpush2.msra.mxu0 %v532
        %1905 = vmatprep.subr.mxu0 0.0
        %1906 = vmatpush2.msra.mxu0 %v531
        %1907 = vmatprep.mubr.f32.mxu0 %v212
        %1908 = vmatmul.mubr.f32.gmra.mxu0 %v211
        %v1909 = vpop.f32.mrf.mxu0
        %v1910 = vadd.f32 %v1840, %v1909
        %v1911 = vpop.f32.mrf.mxu0
        %1912 = vdwg.mxu0
        %1913 = vmatprep.subr.mxu0 0.0
        %1914 = vmatpush1.msra.mxu0 %v562
        %1915 = vmatprep.subr.mxu0 0.0
        %1916 = vmatpush1.msra.mxu0 %v561
        %1917 = vmatprep.subr.mxu0 0.0
        %1918 = vmatpush1.msra.mxu0 %v560
        %1919 = vmatprep.subr.mxu0 0.0
        %1920 = vmatpush1.msra.mxu0 %v559
        %1921 = vmatprep.subr.mxu0 0.0
        %1922 = vmatpush1.msra.mxu0 %v558
        %1923 = vmatprep.subr.mxu0 0.0
        %1924 = vmatpush1.msra.mxu0 %v557
        %1925 = vmatprep.subr.mxu0 0.0
        %1926 = vmatpush1.msra.mxu0 %v556
        %1927 = vmatprep.subr.mxu0 0.0
        %1928 = vmatpush1.msra.mxu0 %v555
        %1929 = vmatprep.subr.mxu0 0.0
        %1930 = vmatpush1.msra.mxu0 %v554
        %1931 = vmatprep.subr.mxu0 0.0
        %1932 = vmatpush1.msra.mxu0 %v553
        %1933 = vmatprep.subr.mxu0 0.0
        %1934 = vmatpush1.msra.mxu0 %v552
        %1935 = vmatprep.subr.mxu0 0.0
        %1936 = vmatpush1.msra.mxu0 %v551
        %1937 = vmatprep.subr.mxu0 0.0
        %1938 = vmatpush1.msra.mxu0 %v550
        %1939 = vmatprep.subr.mxu0 0.0
        %1940 = vmatpush1.msra.mxu0 %v549
        %1941 = vmatprep.subr.mxu0 0.0
        %1942 = vmatpush1.msra.mxu0 %v548
        %1943 = vmatprep.subr.mxu0 0.0
        %1944 = vmatpush1.msra.mxu0 %v547
        %1945 = vmatprep.subr.mxu0 0.0
        %1946 = vmatpush2.msra.mxu0 %v578
        %1947 = vmatprep.subr.mxu0 0.0
        %1948 = vmatpush2.msra.mxu0 %v577
        %1949 = vmatprep.subr.mxu0 0.0
        %1950 = vmatpush2.msra.mxu0 %v576
        %1951 = vmatprep.subr.mxu0 0.0
        %1952 = vmatpush2.msra.mxu0 %v575
        %1953 = vmatprep.subr.mxu0 0.0
        %1954 = vmatpush2.msra.mxu0 %v574
        %1955 = vmatprep.subr.mxu0 0.0
        %1956 = vmatpush2.msra.mxu0 %v573
        %1957 = vmatprep.subr.mxu0 0.0
        %1958 = vmatpush2.msra.mxu0 %v572
        %1959 = vmatprep.subr.mxu0 0.0
        %1960 = vmatpush2.msra.mxu0 %v571
        %1961 = vmatprep.subr.mxu0 0.0
        %1962 = vmatpush2.msra.mxu0 %v570
        %1963 = vmatprep.subr.mxu0 0.0
        %1964 = vmatpush2.msra.mxu0 %v569
        %1965 = vmatprep.subr.mxu0 0.0
        %1966 = vmatpush2.msra.mxu0 %v568
        %1967 = vmatprep.subr.mxu0 0.0
        %1968 = vmatpush2.msra.mxu0 %v567
        %1969 = vmatprep.subr.mxu0 0.0
        %1970 = vmatpush2.msra.mxu0 %v566
        %1971 = vmatprep.subr.mxu0 0.0
        %1972 = vmatpush2.msra.mxu0 %v565
        %1973 = vmatprep.subr.mxu0 0.0
        %1974 = vmatpush2.msra.mxu0 %v564
        %1975 = vmatprep.subr.mxu0 0.0
        %1976 = vmatpush2.msra.mxu0 %v563
        %1977 = vmatprep.mubr.f32.mxu0 %v214
        %1978 = vmatmul.mubr.f32.gmra.mxu0 %v213
        %v1979 = vpop.f32.mrf.mxu0
        %v1980 = vadd.f32 %v1910, %v1979
        %v1981 = vpop.f32.mrf.mxu0
        %1982 = vdwg.mxu0
        %1983 = vmatprep.subr.mxu0 0.0
        %1984 = vmatpush1.msra.mxu0 %v594
        %1985 = vmatprep.subr.mxu0 0.0
        %1986 = vmatpush1.msra.mxu0 %v593
        %1987 = vmatprep.subr.mxu0 0.0
        %1988 = vmatpush1.msra.mxu0 %v592
        %1989 = vmatprep.subr.mxu0 0.0
        %1990 = vmatpush1.msra.mxu0 %v591
        %1991 = vmatprep.subr.mxu0 0.0
        %1992 = vmatpush1.msra.mxu0 %v590
        %1993 = vmatprep.subr.mxu0 0.0
        %1994 = vmatpush1.msra.mxu0 %v589
        %1995 = vmatprep.subr.mxu0 0.0
        %1996 = vmatpush1.msra.mxu0 %v588
        %1997 = vmatprep.subr.mxu0 0.0
        %1998 = vmatpush1.msra.mxu0 %v587
        %1999 = vmatprep.subr.mxu0 0.0
        %2000 = vmatpush1.msra.mxu0 %v586
        %2001 = vmatprep.subr.mxu0 0.0
        %2002 = vmatpush1.msra.mxu0 %v585
        %2003 = vmatprep.subr.mxu0 0.0
        %2004 = vmatpush1.msra.mxu0 %v584
        %2005 = vmatprep.subr.mxu0 0.0
        %2006 = vmatpush1.msra.mxu0 %v583
        %2007 = vmatprep.subr.mxu0 0.0
        %2008 = vmatpush1.msra.mxu0 %v582
        %2009 = vmatprep.subr.mxu0 0.0
        %2010 = vmatpush1.msra.mxu0 %v581
        %2011 = vmatprep.subr.mxu0 0.0
        %2012 = vmatpush1.msra.mxu0 %v580
        %2013 = vmatprep.subr.mxu0 0.0
        %2014 = vmatpush1.msra.mxu0 %v579
        %2015 = vmatprep.subr.mxu0 0.0
        %2016 = vmatpush2.msra.mxu0 %v610
        %2017 = vmatprep.subr.mxu0 0.0
        %2018 = vmatpush2.msra.mxu0 %v609
        %2019 = vmatprep.subr.mxu0 0.0
        %2020 = vmatpush2.msra.mxu0 %v608
        %2021 = vmatprep.subr.mxu0 0.0
        %2022 = vmatpush2.msra.mxu0 %v607
        %2023 = vmatprep.subr.mxu0 0.0
        %2024 = vmatpush2.msra.mxu0 %v606
        %2025 = vmatprep.subr.mxu0 0.0
        %2026 = vmatpush2.msra.mxu0 %v605
        %2027 = vmatprep.subr.mxu0 0.0
        %2028 = vmatpush2.msra.mxu0 %v604
        %2029 = vmatprep.subr.mxu0 0.0
        %2030 = vmatpush2.msra.mxu0 %v603
        %2031 = vmatprep.subr.mxu0 0.0
        %2032 = vmatpush2.msra.mxu0 %v602
        %2033 = vmatprep.subr.mxu0 0.0
        %2034 = vmatpush2.msra.mxu0 %v601
        %2035 = vmatprep.subr.mxu0 0.0
        %2036 = vmatpush2.msra.mxu0 %v600
        %2037 = vmatprep.subr.mxu0 0.0
        %2038 = vmatpush2.msra.mxu0 %v599
        %2039 = vmatprep.subr.mxu0 0.0
        %2040 = vmatpush2.msra.mxu0 %v598
        %2041 = vmatprep.subr.mxu0 0.0
        %2042 = vmatpush2.msra.mxu0 %v597
        %2043 = vmatprep.subr.mxu0 0.0
        %2044 = vmatpush2.msra.mxu0 %v596
        %2045 = vmatprep.subr.mxu0 0.0
        %2046 = vmatpush2.msra.mxu0 %v595
        %2047 = vmatprep.mubr.f32.mxu0 %v216
        %2048 = vmatmul.mubr.f32.gmra.mxu0 %v215
        %v2049 = vpop.f32.mrf.mxu0
        %v2050 = vadd.f32 %v1980, %v2049
        %v2051 = vpop.f32.mrf.mxu0
        %2052 = vdwg.mxu0
        %2053 = vmatprep.subr.mxu0 0.0
        %2054 = vmatpush1.msra.mxu0 %v626
        %2055 = vmatprep.subr.mxu0 0.0
        %2056 = vmatpush1.msra.mxu0 %v625
        %2057 = vmatprep.subr.mxu0 0.0
        %2058 = vmatpush1.msra.mxu0 %v624
        %2059 = vmatprep.subr.mxu0 0.0
        %2060 = vmatpush1.msra.mxu0 %v623
        %2061 = vmatprep.subr.mxu0 0.0
        %2062 = vmatpush1.msra.mxu0 %v622
        %2063 = vmatprep.subr.mxu0 0.0
        %2064 = vmatpush1.msra.mxu0 %v621
        %2065 = vmatprep.subr.mxu0 0.0
        %2066 = vmatpush1.msra.mxu0 %v620
        %2067 = vmatprep.subr.mxu0 0.0
        %2068 = vmatpush1.msra.mxu0 %v619
        %2069 = vmatprep.subr.mxu0 0.0
        %2070 = vmatpush1.msra.mxu0 %v618
        %2071 = vmatprep.subr.mxu0 0.0
        %2072 = vmatpush1.msra.mxu0 %v617
        %2073 = vmatprep.subr.mxu0 0.0
        %2074 = vmatpush1.msra.mxu0 %v616
        %2075 = vmatprep.subr.mxu0 0.0
        %2076 = vmatpush1.msra.mxu0 %v615
        %2077 = vmatprep.subr.mxu0 0.0
        %2078 = vmatpush1.msra.mxu0 %v614
        %2079 = vmatprep.subr.mxu0 0.0
        %2080 = vmatpush1.msra.mxu0 %v613
        %2081 = vmatprep.subr.mxu0 0.0
        %2082 = vmatpush1.msra.mxu0 %v612
        %2083 = vmatprep.subr.mxu0 0.0
        %2084 = vmatpush1.msra.mxu0 %v611
        %2085 = vmatprep.subr.mxu0 0.0
        %2086 = vmatpush2.msra.mxu0 %v642
        %2087 = vmatprep.subr.mxu0 0.0
        %2088 = vmatpush2.msra.mxu0 %v641
        %2089 = vmatprep.subr.mxu0 0.0
        %2090 = vmatpush2.msra.mxu0 %v640
        %2091 = vmatprep.subr.mxu0 0.0
        %2092 = vmatpush2.msra.mxu0 %v639
        %2093 = vmatprep.subr.mxu0 0.0
        %2094 = vmatpush2.msra.mxu0 %v638
        %2095 = vmatprep.subr.mxu0 0.0
        %2096 = vmatpush2.msra.mxu0 %v637
        %2097 = vmatprep.subr.mxu0 0.0
        %2098 = vmatpush2.msra.mxu0 %v636
        %2099 = vmatprep.subr.mxu0 0.0
        %2100 = vmatpush2.msra.mxu0 %v635
        %2101 = vmatprep.subr.mxu0 0.0
        %2102 = vmatpush2.msra.mxu0 %v634
        %2103 = vmatprep.subr.mxu0 0.0
        %2104 = vmatpush2.msra.mxu0 %v633
        %2105 = vmatprep.subr.mxu0 0.0
        %2106 = vmatpush2.msra.mxu0 %v632
        %2107 = vmatprep.subr.mxu0 0.0
        %2108 = vmatpush2.msra.mxu0 %v631
        %2109 = vmatprep.subr.mxu0 0.0
        %2110 = vmatpush2.msra.mxu0 %v630
        %2111 = vmatprep.subr.mxu0 0.0
        %2112 = vmatpush2.msra.mxu0 %v629
        %2113 = vmatprep.subr.mxu0 0.0
        %2114 = vmatpush2.msra.mxu0 %v628
        %2115 = vmatprep.subr.mxu0 0.0
        %2116 = vmatpush2.msra.mxu0 %v627
        %2117 = vmatprep.mubr.f32.mxu0 %v218
        %2118 = vmatmul.mubr.f32.gmra.mxu0 %v217
        %v2119 = vpop.f32.mrf.mxu0
        %v2120 = vadd.f32 %v2050, %v2119
        %v2121 = vpop.f32.mrf.mxu0
        %2122 = vdwg.mxu0
        %2123 = vmatprep.subr.mxu0 0.0
        %2124 = vmatpush1.msra.mxu0 %v658
        %2125 = vmatprep.subr.mxu0 0.0
        %2126 = vmatpush1.msra.mxu0 %v657
        %2127 = vmatprep.subr.mxu0 0.0
        %2128 = vmatpush1.msra.mxu0 %v656
        %2129 = vmatprep.subr.mxu0 0.0
        %2130 = vmatpush1.msra.mxu0 %v655
        %2131 = vmatprep.subr.mxu0 0.0
        %2132 = vmatpush1.msra.mxu0 %v654
        %2133 = vmatprep.subr.mxu0 0.0
        %2134 = vmatpush1.msra.mxu0 %v653
        %2135 = vmatprep.subr.mxu0 0.0
        %2136 = vmatpush1.msra.mxu0 %v652
        %2137 = vmatprep.subr.mxu0 0.0
        %2138 = vmatpush1.msra.mxu0 %v651
        %2139 = vmatprep.subr.mxu0 0.0
        %2140 = vmatpush1.msra.mxu0 %v650
        %2141 = vmatprep.subr.mxu0 0.0
        %2142 = vmatpush1.msra.mxu0 %v649
        %2143 = vmatprep.subr.mxu0 0.0
        %2144 = vmatpush1.msra.mxu0 %v648
        %2145 = vmatprep.subr.mxu0 0.0
        %2146 = vmatpush1.msra.mxu0 %v647
        %2147 = vmatprep.subr.mxu0 0.0
        %2148 = vmatpush1.msra.mxu0 %v646
        %2149 = vmatprep.subr.mxu0 0.0
        %2150 = vmatpush1.msra.mxu0 %v645
        %2151 = vmatprep.subr.mxu0 0.0
        %2152 = vmatpush1.msra.mxu0 %v644
        %2153 = vmatprep.subr.mxu0 0.0
        %2154 = vmatpush1.msra.mxu0 %v643
        %2155 = vmatprep.subr.mxu0 0.0
        %2156 = vmatpush2.msra.mxu0 %v674
        %2157 = vmatprep.subr.mxu0 0.0
        %2158 = vmatpush2.msra.mxu0 %v673
        %2159 = vmatprep.subr.mxu0 0.0
        %2160 = vmatpush2.msra.mxu0 %v672
        %2161 = vmatprep.subr.mxu0 0.0
        %2162 = vmatpush2.msra.mxu0 %v671
        %2163 = vmatprep.subr.mxu0 0.0
        %2164 = vmatpush2.msra.mxu0 %v670
        %2165 = vmatprep.subr.mxu0 0.0
        %2166 = vmatpush2.msra.mxu0 %v669
        %2167 = vmatprep.subr.mxu0 0.0
        %2168 = vmatpush2.msra.mxu0 %v668
        %2169 = vmatprep.subr.mxu0 0.0
        %2170 = vmatpush2.msra.mxu0 %v667
        %2171 = vmatprep.subr.mxu0 0.0
        %2172 = vmatpush2.msra.mxu0 %v666
        %2173 = vmatprep.subr.mxu0 0.0
        %2174 = vmatpush2.msra.mxu0 %v665
        %2175 = vmatprep.subr.mxu0 0.0
        %2176 = vmatpush2.msra.mxu0 %v664
        %2177 = vmatprep.subr.mxu0 0.0
        %2178 = vmatpush2.msra.mxu0 %v663
        %2179 = vmatprep.subr.mxu0 0.0
        %2180 = vmatpush2.msra.mxu0 %v662
        %2181 = vmatprep.subr.mxu0 0.0
        %2182 = vmatpush2.msra.mxu0 %v661
        %2183 = vmatprep.subr.mxu0 0.0
        %2184 = vmatpush2.msra.mxu0 %v660
        %2185 = vmatprep.subr.mxu0 0.0
        %2186 = vmatpush2.msra.mxu0 %v659
        %2187 = vmatprep.mubr.f32.mxu0 %v220
        %2188 = vmatmul.mubr.f32.gmra.mxu0 %v219
        %v2189 = vpop.f32.mrf.mxu0
        %v2190 = vadd.f32 %v2120, %v2189
        %v2191 = vpop.f32.mrf.mxu0
        %2192 = vdwg.mxu0
        %2193 = vmatprep.subr.mxu0 0.0
        %2194 = vmatpush1.msra.mxu0 %v690
        %2195 = vmatprep.subr.mxu0 0.0
        %2196 = vmatpush1.msra.mxu0 %v689
        %2197 = vmatprep.subr.mxu0 0.0
        %2198 = vmatpush1.msra.mxu0 %v688
        %2199 = vmatprep.subr.mxu0 0.0
        %2200 = vmatpush1.msra.mxu0 %v687
        %2201 = vmatprep.subr.mxu0 0.0
        %2202 = vmatpush1.msra.mxu0 %v686
        %2203 = vmatprep.subr.mxu0 0.0
        %2204 = vmatpush1.msra.mxu0 %v685
        %2205 = vmatprep.subr.mxu0 0.0
        %2206 = vmatpush1.msra.mxu0 %v684
        %2207 = vmatprep.subr.mxu0 0.0
        %2208 = vmatpush1.msra.mxu0 %v683
        %2209 = vmatprep.subr.mxu0 0.0
        %2210 = vmatpush1.msra.mxu0 %v682
        %2211 = vmatprep.subr.mxu0 0.0
        %2212 = vmatpush1.msra.mxu0 %v681
        %2213 = vmatprep.subr.mxu0 0.0
        %2214 = vmatpush1.msra.mxu0 %v680
        %2215 = vmatprep.subr.mxu0 0.0
        %2216 = vmatpush1.msra.mxu0 %v679
        %2217 = vmatprep.subr.mxu0 0.0
        %2218 = vmatpush1.msra.mxu0 %v678
        %2219 = vmatprep.subr.mxu0 0.0
        %2220 = vmatpush1.msra.mxu0 %v677
        %2221 = vmatprep.subr.mxu0 0.0
        %2222 = vmatpush1.msra.mxu0 %v676
        %2223 = vmatprep.subr.mxu0 0.0
        %2224 = vmatpush1.msra.mxu0 %v675
        %2225 = vmatprep.subr.mxu0 0.0
        %2226 = vmatpush2.msra.mxu0 %v706
        %2227 = vmatprep.subr.mxu0 0.0
        %2228 = vmatpush2.msra.mxu0 %v705
        %2229 = vmatprep.subr.mxu0 0.0
        %2230 = vmatpush2.msra.mxu0 %v704
        %2231 = vmatprep.subr.mxu0 0.0
        %2232 = vmatpush2.msra.mxu0 %v703
        %2233 = vmatprep.subr.mxu0 0.0
        %2234 = vmatpush2.msra.mxu0 %v702
        %2235 = vmatprep.subr.mxu0 0.0
        %2236 = vmatpush2.msra.mxu0 %v701
        %2237 = vmatprep.subr.mxu0 0.0
        %2238 = vmatpush2.msra.mxu0 %v700
        %2239 = vmatprep.subr.mxu0 0.0
        %2240 = vmatpush2.msra.mxu0 %v699
        %2241 = vmatprep.subr.mxu0 0.0
        %2242 = vmatpush2.msra.mxu0 %v698
        %2243 = vmatprep.subr.mxu0 0.0
        %2244 = vmatpush2.msra.mxu0 %v697
        %2245 = vmatprep.subr.mxu0 0.0
        %2246 = vmatpush2.msra.mxu0 %v696
        %2247 = vmatprep.subr.mxu0 0.0
        %2248 = vmatpush2.msra.mxu0 %v695
        %2249 = vmatprep.subr.mxu0 0.0
        %2250 = vmatpush2.msra.mxu0 %v694
        %2251 = vmatprep.subr.mxu0 0.0
        %2252 = vmatpush2.msra.mxu0 %v693
        %2253 = vmatprep.subr.mxu0 0.0
        %2254 = vmatpush2.msra.mxu0 %v692
        %2255 = vmatprep.subr.mxu0 0.0
        %2256 = vmatpush2.msra.mxu0 %v691
        %2257 = vmatprep.mubr.f32.mxu0 %v222
        %2258 = vmatmul.mubr.f32.gmra.mxu0 %v221
        %v2259 = vpop.f32.mrf.mxu0
        %v2260 = vadd.f32 %v2190, %v2259
        %v2261 = vpop.f32.mrf.mxu0
        %2262 = vdwg.mxu0
        %2263 = vmatprep.subr.mxu0 0.0
        %2264 = vmatpush1.msra.mxu0 %v722
        %2265 = vmatprep.subr.mxu0 0.0
        %2266 = vmatpush1.msra.mxu0 %v721
        %2267 = vmatprep.subr.mxu0 0.0
        %2268 = vmatpush1.msra.mxu0 %v720
        %2269 = vmatprep.subr.mxu0 0.0
        %2270 = vmatpush1.msra.mxu0 %v719
        %2271 = vmatprep.subr.mxu0 0.0
        %2272 = vmatpush1.msra.mxu0 %v718
        %2273 = vmatprep.subr.mxu0 0.0
        %2274 = vmatpush1.msra.mxu0 %v717
        %2275 = vmatprep.subr.mxu0 0.0
        %2276 = vmatpush1.msra.mxu0 %v716
        %2277 = vmatprep.subr.mxu0 0.0
        %2278 = vmatpush1.msra.mxu0 %v715
        %2279 = vmatprep.subr.mxu0 0.0
        %2280 = vmatpush1.msra.mxu0 %v714
        %2281 = vmatprep.subr.mxu0 0.0
        %2282 = vmatpush1.msra.mxu0 %v713
        %2283 = vmatprep.subr.mxu0 0.0
        %2284 = vmatpush1.msra.mxu0 %v712
        %2285 = vmatprep.subr.mxu0 0.0
        %2286 = vmatpush1.msra.mxu0 %v711
        %2287 = vmatprep.subr.mxu0 0.0
        %2288 = vmatpush1.msra.mxu0 %v710
        %2289 = vmatprep.subr.mxu0 0.0
        %2290 = vmatpush1.msra.mxu0 %v709
        %2291 = vmatprep.subr.mxu0 0.0
        %2292 = vmatpush1.msra.mxu0 %v708
        %2293 = vmatprep.subr.mxu0 0.0
        %2294 = vmatpush1.msra.mxu0 %v707
        %2295 = vmatprep.subr.mxu0 0.0
        %2296 = vmatpush2.msra.mxu0 %v738
        %2297 = vmatprep.subr.mxu0 0.0
        %2298 = vmatpush2.msra.mxu0 %v737
        %2299 = vmatprep.subr.mxu0 0.0
        %2300 = vmatpush2.msra.mxu0 %v736
        %2301 = vmatprep.subr.mxu0 0.0
        %2302 = vmatpush2.msra.mxu0 %v735
        %2303 = vmatprep.subr.mxu0 0.0
        %2304 = vmatpush2.msra.mxu0 %v734
        %2305 = vmatprep.subr.mxu0 0.0
        %2306 = vmatpush2.msra.mxu0 %v733
        %2307 = vmatprep.subr.mxu0 0.0
        %2308 = vmatpush2.msra.mxu0 %v732
        %2309 = vmatprep.subr.mxu0 0.0
        %2310 = vmatpush2.msra.mxu0 %v731
        %2311 = vmatprep.subr.mxu0 0.0
        %2312 = vmatpush2.msra.mxu0 %v730
        %2313 = vmatprep.subr.mxu0 0.0
        %2314 = vmatpush2.msra.mxu0 %v729
        %2315 = vmatprep.subr.mxu0 0.0
        %2316 = vmatpush2.msra.mxu0 %v728
        %2317 = vmatprep.subr.mxu0 0.0
        %2318 = vmatpush2.msra.mxu0 %v727
        %2319 = vmatprep.subr.mxu0 0.0
        %2320 = vmatpush2.msra.mxu0 %v726
        %2321 = vmatprep.subr.mxu0 0.0
        %2322 = vmatpush2.msra.mxu0 %v725
        %2323 = vmatprep.subr.mxu0 0.0
        %2324 = vmatpush2.msra.mxu0 %v724
        %2325 = vmatprep.subr.mxu0 0.0
        %2326 = vmatpush2.msra.mxu0 %v723
        %2327 = vmatprep.mubr.f32.mxu0 %v224
        %2328 = vmatmul.mubr.f32.gmra.mxu0 %v223
        %v2329 = vpop.f32.mrf.mxu0
        %v2330 = vadd.f32 %v2260, %v2329
        %v2331 = vpop.f32.mrf.mxu0
        %2332 = vdwg.mxu0
        %2333 = vmatprep.subr.mxu0 0.0
        %2334 = vmatpush1.msra.mxu0 %v754
        %2335 = vmatprep.subr.mxu0 0.0
        %2336 = vmatpush1.msra.mxu0 %v753
        %2337 = vmatprep.subr.mxu0 0.0
        %2338 = vmatpush1.msra.mxu0 %v752
        %2339 = vmatprep.subr.mxu0 0.0
        %2340 = vmatpush1.msra.mxu0 %v751
        %2341 = vmatprep.subr.mxu0 0.0
        %2342 = vmatpush1.msra.mxu0 %v750
        %2343 = vmatprep.subr.mxu0 0.0
        %2344 = vmatpush1.msra.mxu0 %v749
        %2345 = vmatprep.subr.mxu0 0.0
        %2346 = vmatpush1.msra.mxu0 %v748
        %2347 = vmatprep.subr.mxu0 0.0
        %2348 = vmatpush1.msra.mxu0 %v747
        %2349 = vmatprep.subr.mxu0 0.0
        %2350 = vmatpush1.msra.mxu0 %v746
        %2351 = vmatprep.subr.mxu0 0.0
        %2352 = vmatpush1.msra.mxu0 %v745
        %2353 = vmatprep.subr.mxu0 0.0
        %2354 = vmatpush1.msra.mxu0 %v744
        %2355 = vmatprep.subr.mxu0 0.0
        %2356 = vmatpush1.msra.mxu0 %v743
        %2357 = vmatprep.subr.mxu0 0.0
        %2358 = vmatpush1.msra.mxu0 %v742
        %2359 = vmatprep.subr.mxu0 0.0
        %2360 = vmatpush1.msra.mxu0 %v741
        %2361 = vmatprep.subr.mxu0 0.0
        %2362 = vmatpush1.msra.mxu0 %v740
        %2363 = vmatprep.subr.mxu0 0.0
        %2364 = vmatpush1.msra.mxu0 %v739
        %2365 = vmatprep.subr.mxu0 0.0
        %2366 = vmatpush2.msra.mxu0 %v770
        %2367 = vmatprep.subr.mxu0 0.0
        %2368 = vmatpush2.msra.mxu0 %v769
        %2369 = vmatprep.subr.mxu0 0.0
        %2370 = vmatpush2.msra.mxu0 %v768
        %2371 = vmatprep.subr.mxu0 0.0
        %2372 = vmatpush2.msra.mxu0 %v767
        %2373 = vmatprep.subr.mxu0 0.0
        %2374 = vmatpush2.msra.mxu0 %v766
        %2375 = vmatprep.subr.mxu0 0.0
        %2376 = vmatpush2.msra.mxu0 %v765
        %2377 = vmatprep.subr.mxu0 0.0
        %2378 = vmatpush2.msra.mxu0 %v764
        %2379 = vmatprep.subr.mxu0 0.0
        %2380 = vmatpush2.msra.mxu0 %v763
        %2381 = vmatprep.subr.mxu0 0.0
        %2382 = vmatpush2.msra.mxu0 %v762
        %2383 = vmatprep.subr.mxu0 0.0
        %2384 = vmatpush2.msra.mxu0 %v761
        %2385 = vmatprep.subr.mxu0 0.0
        %2386 = vmatpush2.msra.mxu0 %v760
        %2387 = vmatprep.subr.mxu0 0.0
        %2388 = vmatpush2.msra.mxu0 %v759
        %2389 = vmatprep.subr.mxu0 0.0
        %2390 = vmatpush2.msra.mxu0 %v758
        %2391 = vmatprep.subr.mxu0 0.0
        %2392 = vmatpush2.msra.mxu0 %v757
        %2393 = vmatprep.subr.mxu0 0.0
        %2394 = vmatpush2.msra.mxu0 %v756
        %2395 = vmatprep.subr.mxu0 0.0
        %2396 = vmatpush2.msra.mxu0 %v755
        %2397 = vmatprep.mubr.f32.mxu0 %v226
        %2398 = vmatmul.mubr.f32.gmra.mxu0 %v225
        %v2399 = vpop.f32.mrf.mxu0
        %v2400 = vadd.f32 %v2330, %v2399
        %v2401 = vpop.f32.mrf.mxu0
        %2402 = vdwg.mxu0
        %2403 = vmatprep.subr.mxu0 0.0
        %2404 = vmatpush1.msra.mxu0 %v786
        %2405 = vmatprep.subr.mxu0 0.0
        %2406 = vmatpush1.msra.mxu0 %v785
        %2407 = vmatprep.subr.mxu0 0.0
        %2408 = vmatpush1.msra.mxu0 %v784
        %2409 = vmatprep.subr.mxu0 0.0
        %2410 = vmatpush1.msra.mxu0 %v783
        %2411 = vmatprep.subr.mxu0 0.0
        %2412 = vmatpush1.msra.mxu0 %v782
        %2413 = vmatprep.subr.mxu0 0.0
        %2414 = vmatpush1.msra.mxu0 %v781
        %2415 = vmatprep.subr.mxu0 0.0
        %2416 = vmatpush1.msra.mxu0 %v780
        %2417 = vmatprep.subr.mxu0 0.0
        %2418 = vmatpush1.msra.mxu0 %v779
        %2419 = vmatprep.subr.mxu0 0.0
        %2420 = vmatpush1.msra.mxu0 %v778
        %2421 = vmatprep.subr.mxu0 0.0
        %2422 = vmatpush1.msra.mxu0 %v777
        %2423 = vmatprep.subr.mxu0 0.0
        %2424 = vmatpush1.msra.mxu0 %v776
        %2425 = vmatprep.subr.mxu0 0.0
        %2426 = vmatpush1.msra.mxu0 %v775
        %2427 = vmatprep.subr.mxu0 0.0
        %2428 = vmatpush1.msra.mxu0 %v774
        %2429 = vmatprep.subr.mxu0 0.0
        %2430 = vmatpush1.msra.mxu0 %v773
        %2431 = vmatprep.subr.mxu0 0.0
        %2432 = vmatpush1.msra.mxu0 %v772
        %2433 = vmatprep.subr.mxu0 0.0
        %2434 = vmatpush1.msra.mxu0 %v771
        %2435 = vmatprep.subr.mxu0 0.0
        %2436 = vmatpush2.msra.mxu0 %v802
        %2437 = vmatprep.subr.mxu0 0.0
        %2438 = vmatpush2.msra.mxu0 %v801
        %2439 = vmatprep.subr.mxu0 0.0
        %2440 = vmatpush2.msra.mxu0 %v800
        %2441 = vmatprep.subr.mxu0 0.0
        %2442 = vmatpush2.msra.mxu0 %v799
        %2443 = vmatprep.subr.mxu0 0.0
        %2444 = vmatpush2.msra.mxu0 %v798
        %2445 = vmatprep.subr.mxu0 0.0
        %2446 = vmatpush2.msra.mxu0 %v797
        %2447 = vmatprep.subr.mxu0 0.0
        %2448 = vmatpush2.msra.mxu0 %v796
        %2449 = vmatprep.subr.mxu0 0.0
        %2450 = vmatpush2.msra.mxu0 %v795
        %2451 = vmatprep.subr.mxu0 0.0
        %2452 = vmatpush2.msra.mxu0 %v794
        %2453 = vmatprep.subr.mxu0 0.0
        %2454 = vmatpush2.msra.mxu0 %v793
        %2455 = vmatprep.subr.mxu0 0.0
        %2456 = vmatpush2.msra.mxu0 %v792
        %2457 = vmatprep.subr.mxu0 0.0
        %2458 = vmatpush2.msra.mxu0 %v791
        %2459 = vmatprep.subr.mxu0 0.0
        %2460 = vmatpush2.msra.mxu0 %v790
        %2461 = vmatprep.subr.mxu0 0.0
        %2462 = vmatpush2.msra.mxu0 %v789
        %2463 = vmatprep.subr.mxu0 0.0
        %2464 = vmatpush2.msra.mxu0 %v788
        %2465 = vmatprep.subr.mxu0 0.0
        %2466 = vmatpush2.msra.mxu0 %v787
        %2467 = vmatprep.mubr.f32.mxu0 %v228
        %2468 = vmatmul.mubr.f32.gmra.mxu0 %v227
        %v2469 = vpop.f32.mrf.mxu0
        %v2470 = vadd.f32 %v2400, %v2469
        %v2471 = vpop.f32.mrf.mxu0
        %2472 = vdwg.mxu0
        %2473 = vmatprep.subr.mxu0 0.0
        %2474 = vmatpush1.msra.mxu0 %v818
        %2475 = vmatprep.subr.mxu0 0.0
        %2476 = vmatpush1.msra.mxu0 %v817
        %2477 = vmatprep.subr.mxu0 0.0
        %2478 = vmatpush1.msra.mxu0 %v816
        %2479 = vmatprep.subr.mxu0 0.0
        %2480 = vmatpush1.msra.mxu0 %v815
        %2481 = vmatprep.subr.mxu0 0.0
        %2482 = vmatpush1.msra.mxu0 %v814
        %2483 = vmatprep.subr.mxu0 0.0
        %2484 = vmatpush1.msra.mxu0 %v813
        %2485 = vmatprep.subr.mxu0 0.0
        %2486 = vmatpush1.msra.mxu0 %v812
        %2487 = vmatprep.subr.mxu0 0.0
        %2488 = vmatpush1.msra.mxu0 %v811
        %2489 = vmatprep.subr.mxu0 0.0
        %2490 = vmatpush1.msra.mxu0 %v810
        %2491 = vmatprep.subr.mxu0 0.0
        %2492 = vmatpush1.msra.mxu0 %v809
        %2493 = vmatprep.subr.mxu0 0.0
        %2494 = vmatpush1.msra.mxu0 %v808
        %2495 = vmatprep.subr.mxu0 0.0
        %2496 = vmatpush1.msra.mxu0 %v807
        %2497 = vmatprep.subr.mxu0 0.0
        %2498 = vmatpush1.msra.mxu0 %v806
        %2499 = vmatprep.subr.mxu0 0.0
        %2500 = vmatpush1.msra.mxu0 %v805
        %2501 = vmatprep.subr.mxu0 0.0
        %2502 = vmatpush1.msra.mxu0 %v804
        %2503 = vmatprep.subr.mxu0 0.0
        %2504 = vmatpush1.msra.mxu0 %v803
        %2505 = vmatprep.subr.mxu0 0.0
        %2506 = vmatpush2.msra.mxu0 %v834
        %2507 = vmatprep.subr.mxu0 0.0
        %2508 = vmatpush2.msra.mxu0 %v833
        %2509 = vmatprep.subr.mxu0 0.0
        %2510 = vmatpush2.msra.mxu0 %v832
        %2511 = vmatprep.subr.mxu0 0.0
        %2512 = vmatpush2.msra.mxu0 %v831
        %2513 = vmatprep.subr.mxu0 0.0
        %2514 = vmatpush2.msra.mxu0 %v830
        %2515 = vmatprep.subr.mxu0 0.0
        %2516 = vmatpush2.msra.mxu0 %v829
        %2517 = vmatprep.subr.mxu0 0.0
        %2518 = vmatpush2.msra.mxu0 %v828
        %2519 = vmatprep.subr.mxu0 0.0
        %2520 = vmatpush2.msra.mxu0 %v827
        %2521 = vmatprep.subr.mxu0 0.0
        %2522 = vmatpush2.msra.mxu0 %v826
        %2523 = vmatprep.subr.mxu0 0.0
        %2524 = vmatpush2.msra.mxu0 %v825
        %2525 = vmatprep.subr.mxu0 0.0
        %2526 = vmatpush2.msra.mxu0 %v824
        %2527 = vmatprep.subr.mxu0 0.0
        %2528 = vmatpush2.msra.mxu0 %v823
        %2529 = vmatprep.subr.mxu0 0.0
        %2530 = vmatpush2.msra.mxu0 %v822
        %2531 = vmatprep.subr.mxu0 0.0
        %2532 = vmatpush2.msra.mxu0 %v821
        %2533 = vmatprep.subr.mxu0 0.0
        %2534 = vmatpush2.msra.mxu0 %v820
        %2535 = vmatprep.subr.mxu0 0.0
        %2536 = vmatpush2.msra.mxu0 %v819
        %2537 = vmatprep.mubr.f32.mxu0 %v230
        %2538 = vmatmul.mubr.f32.gmra.mxu0 %v229
        %v2539 = vpop.f32.mrf.mxu0
        %v2540 = vadd.f32 %v2470, %v2539
        %v2541 = vpop.f32.mrf.mxu0
        %2542 = vdwg.mxu0
        %2543 = vmatprep.subr.mxu0 0.0
        %2544 = vmatpush1.msra.mxu0 %v850
        %2545 = vmatprep.subr.mxu0 0.0
        %2546 = vmatpush1.msra.mxu0 %v849
        %2547 = vmatprep.subr.mxu0 0.0
        %2548 = vmatpush1.msra.mxu0 %v848
        %2549 = vmatprep.subr.mxu0 0.0
        %2550 = vmatpush1.msra.mxu0 %v847
        %2551 = vmatprep.subr.mxu0 0.0
        %2552 = vmatpush1.msra.mxu0 %v846
        %2553 = vmatprep.subr.mxu0 0.0
        %2554 = vmatpush1.msra.mxu0 %v845
        %2555 = vmatprep.subr.mxu0 0.0
        %2556 = vmatpush1.msra.mxu0 %v844
        %2557 = vmatprep.subr.mxu0 0.0
        %2558 = vmatpush1.msra.mxu0 %v843
        %2559 = vmatprep.subr.mxu0 0.0
        %2560 = vmatpush1.msra.mxu0 %v842
        %2561 = vmatprep.subr.mxu0 0.0
        %2562 = vmatpush1.msra.mxu0 %v841
        %2563 = vmatprep.subr.mxu0 0.0
        %2564 = vmatpush1.msra.mxu0 %v840
        %2565 = vmatprep.subr.mxu0 0.0
        %2566 = vmatpush1.msra.mxu0 %v839
        %2567 = vmatprep.subr.mxu0 0.0
        %2568 = vmatpush1.msra.mxu0 %v838
        %2569 = vmatprep.subr.mxu0 0.0
        %2570 = vmatpush1.msra.mxu0 %v837
        %2571 = vmatprep.subr.mxu0 0.0
        %2572 = vmatpush1.msra.mxu0 %v836
        %2573 = vmatprep.subr.mxu0 0.0
        %2574 = vmatpush1.msra.mxu0 %v835
        %2575 = vmatprep.subr.mxu0 0.0
        %2576 = vmatpush2.msra.mxu0 %v866
        %2577 = vmatprep.subr.mxu0 0.0
        %2578 = vmatpush2.msra.mxu0 %v865
        %2579 = vmatprep.subr.mxu0 0.0
        %2580 = vmatpush2.msra.mxu0 %v864
        %2581 = vmatprep.subr.mxu0 0.0
        %2582 = vmatpush2.msra.mxu0 %v863
        %2583 = vmatprep.subr.mxu0 0.0
        %2584 = vmatpush2.msra.mxu0 %v862
        %2585 = vmatprep.subr.mxu0 0.0
        %2586 = vmatpush2.msra.mxu0 %v861
        %2587 = vmatprep.subr.mxu0 0.0
        %2588 = vmatpush2.msra.mxu0 %v860
        %2589 = vmatprep.subr.mxu0 0.0
        %2590 = vmatpush2.msra.mxu0 %v859
        %2591 = vmatprep.subr.mxu0 0.0
        %2592 = vmatpush2.msra.mxu0 %v858
        %2593 = vmatprep.subr.mxu0 0.0
        %2594 = vmatpush2.msra.mxu0 %v857
        %2595 = vmatprep.subr.mxu0 0.0
        %2596 = vmatpush2.msra.mxu0 %v856
        %2597 = vmatprep.subr.mxu0 0.0
        %2598 = vmatpush2.msra.mxu0 %v855
        %2599 = vmatprep.subr.mxu0 0.0
        %2600 = vmatpush2.msra.mxu0 %v854
        %2601 = vmatprep.subr.mxu0 0.0
        %2602 = vmatpush2.msra.mxu0 %v853
        %2603 = vmatprep.subr.mxu0 0.0
        %2604 = vmatpush2.msra.mxu0 %v852
        %2605 = vmatprep.subr.mxu0 0.0
        %2606 = vmatpush2.msra.mxu0 %v851
        %2607 = vmatprep.mubr.f32.mxu0 %v232
        %2608 = vmatmul.mubr.f32.gmra.mxu0 %v231
        %v2609 = vpop.f32.mrf.mxu0
        %v2610 = vadd.f32 %v2540, %v2609
        %v2611 = vpop.f32.mrf.mxu0
        %2612 = vdwg.mxu0
        %2613 = vmatprep.subr.mxu0 0.0
        %2614 = vmatpush1.msra.mxu0 %v882
        %2615 = vmatprep.subr.mxu0 0.0
        %2616 = vmatpush1.msra.mxu0 %v881
        %2617 = vmatprep.subr.mxu0 0.0
        %2618 = vmatpush1.msra.mxu0 %v880
        %2619 = vmatprep.subr.mxu0 0.0
        %2620 = vmatpush1.msra.mxu0 %v879
        %2621 = vmatprep.subr.mxu0 0.0
        %2622 = vmatpush1.msra.mxu0 %v878
        %2623 = vmatprep.subr.mxu0 0.0
        %2624 = vmatpush1.msra.mxu0 %v877
        %2625 = vmatprep.subr.mxu0 0.0
        %2626 = vmatpush1.msra.mxu0 %v876
        %2627 = vmatprep.subr.mxu0 0.0
        %2628 = vmatpush1.msra.mxu0 %v875
        %2629 = vmatprep.subr.mxu0 0.0
        %2630 = vmatpush1.msra.mxu0 %v874
        %2631 = vmatprep.subr.mxu0 0.0
        %2632 = vmatpush1.msra.mxu0 %v873
        %2633 = vmatprep.subr.mxu0 0.0
        %2634 = vmatpush1.msra.mxu0 %v872
        %2635 = vmatprep.subr.mxu0 0.0
        %2636 = vmatpush1.msra.mxu0 %v871
        %2637 = vmatprep.subr.mxu0 0.0
        %2638 = vmatpush1.msra.mxu0 %v870
        %2639 = vmatprep.subr.mxu0 0.0
        %2640 = vmatpush1.msra.mxu0 %v869
        %2641 = vmatprep.subr.mxu0 0.0
        %2642 = vmatpush1.msra.mxu0 %v868
        %2643 = vmatprep.subr.mxu0 0.0
        %2644 = vmatpush1.msra.mxu0 %v867
        %2645 = vmatprep.subr.mxu0 0.0
        %2646 = vmatpush2.msra.mxu0 %v898
        %2647 = vmatprep.subr.mxu0 0.0
        %2648 = vmatpush2.msra.mxu0 %v897
        %2649 = vmatprep.subr.mxu0 0.0
        %2650 = vmatpush2.msra.mxu0 %v896
        %2651 = vmatprep.subr.mxu0 0.0
        %2652 = vmatpush2.msra.mxu0 %v895
        %2653 = vmatprep.subr.mxu0 0.0
        %2654 = vmatpush2.msra.mxu0 %v894
        %2655 = vmatprep.subr.mxu0 0.0
        %2656 = vmatpush2.msra.mxu0 %v893
        %2657 = vmatprep.subr.mxu0 0.0
        %2658 = vmatpush2.msra.mxu0 %v892
        %2659 = vmatprep.subr.mxu0 0.0
        %2660 = vmatpush2.msra.mxu0 %v891
        %2661 = vmatprep.subr.mxu0 0.0
        %2662 = vmatpush2.msra.mxu0 %v890
        %2663 = vmatprep.subr.mxu0 0.0
        %2664 = vmatpush2.msra.mxu0 %v889
        %2665 = vmatprep.subr.mxu0 0.0
        %2666 = vmatpush2.msra.mxu0 %v888
        %2667 = vmatprep.subr.mxu0 0.0
        %2668 = vmatpush2.msra.mxu0 %v887
        %2669 = vmatprep.subr.mxu0 0.0
        %2670 = vmatpush2.msra.mxu0 %v886
        %2671 = vmatprep.subr.mxu0 0.0
        %2672 = vmatpush2.msra.mxu0 %v885
        %2673 = vmatprep.subr.mxu0 0.0
        %2674 = vmatpush2.msra.mxu0 %v884
        %2675 = vmatprep.subr.mxu0 0.0
        %2676 = vmatpush2.msra.mxu0 %v883
        %2677 = vmatprep.mubr.f32.mxu0 %v234
        %2678 = vmatmul.mubr.f32.gmra.mxu0 %v233
        %v2679 = vpop.f32.mrf.mxu0
        %v2680 = vadd.f32 %v2610, %v2679
        %v2681 = vpop.f32.mrf.mxu0
        %2682 = vdwg.mxu0
        %2683 = vmatprep.subr.mxu0 0.0
        %2684 = vmatpush1.msra.mxu0 %v914
        %2685 = vmatprep.subr.mxu0 0.0
        %2686 = vmatpush1.msra.mxu0 %v913
        %2687 = vmatprep.subr.mxu0 0.0
        %2688 = vmatpush1.msra.mxu0 %v912
        %2689 = vmatprep.subr.mxu0 0.0
        %2690 = vmatpush1.msra.mxu0 %v911
        %2691 = vmatprep.subr.mxu0 0.0
        %2692 = vmatpush1.msra.mxu0 %v910
        %2693 = vmatprep.subr.mxu0 0.0
        %2694 = vmatpush1.msra.mxu0 %v909
        %2695 = vmatprep.subr.mxu0 0.0
        %2696 = vmatpush1.msra.mxu0 %v908
        %2697 = vmatprep.subr.mxu0 0.0
        %2698 = vmatpush1.msra.mxu0 %v907
        %2699 = vmatprep.subr.mxu0 0.0
        %2700 = vmatpush1.msra.mxu0 %v906
        %2701 = vmatprep.subr.mxu0 0.0
        %2702 = vmatpush1.msra.mxu0 %v905
        %2703 = vmatprep.subr.mxu0 0.0
        %2704 = vmatpush1.msra.mxu0 %v904
        %2705 = vmatprep.subr.mxu0 0.0
        %2706 = vmatpush1.msra.mxu0 %v903
        %2707 = vmatprep.subr.mxu0 0.0
        %2708 = vmatpush1.msra.mxu0 %v902
        %2709 = vmatprep.subr.mxu0 0.0
        %2710 = vmatpush1.msra.mxu0 %v901
        %2711 = vmatprep.subr.mxu0 0.0
        %2712 = vmatpush1.msra.mxu0 %v900
        %2713 = vmatprep.subr.mxu0 0.0
        %2714 = vmatpush1.msra.mxu0 %v899
        %2715 = vmatprep.subr.mxu0 0.0
        %2716 = vmatpush2.msra.mxu0 %v930
        %2717 = vmatprep.subr.mxu0 0.0
        %2718 = vmatpush2.msra.mxu0 %v929
        %2719 = vmatprep.subr.mxu0 0.0
        %2720 = vmatpush2.msra.mxu0 %v928
        %2721 = vmatprep.subr.mxu0 0.0
        %2722 = vmatpush2.msra.mxu0 %v927
        %2723 = vmatprep.subr.mxu0 0.0
        %2724 = vmatpush2.msra.mxu0 %v926
        %2725 = vmatprep.subr.mxu0 0.0
        %2726 = vmatpush2.msra.mxu0 %v925
        %2727 = vmatprep.subr.mxu0 0.0
        %2728 = vmatpush2.msra.mxu0 %v924
        %2729 = vmatprep.subr.mxu0 0.0
        %2730 = vmatpush2.msra.mxu0 %v923
        %2731 = vmatprep.subr.mxu0 0.0
        %2732 = vmatpush2.msra.mxu0 %v922
        %2733 = vmatprep.subr.mxu0 0.0
        %2734 = vmatpush2.msra.mxu0 %v921
        %2735 = vmatprep.subr.mxu0 0.0
        %2736 = vmatpush2.msra.mxu0 %v920
        %2737 = vmatprep.subr.mxu0 0.0
        %2738 = vmatpush2.msra.mxu0 %v919
        %2739 = vmatprep.subr.mxu0 0.0
        %2740 = vmatpush2.msra.mxu0 %v918
        %2741 = vmatprep.subr.mxu0 0.0
        %2742 = vmatpush2.msra.mxu0 %v917
        %2743 = vmatprep.subr.mxu0 0.0
        %2744 = vmatpush2.msra.mxu0 %v916
        %2745 = vmatprep.subr.mxu0 0.0
        %2746 = vmatpush2.msra.mxu0 %v915
        %2747 = vmatprep.mubr.f32.mxu0 %v236
        %2748 = vmatmul.mubr.f32.gmra.mxu0 %v235
        %v2749 = vpop.f32.mrf.mxu0
        %v2750 = vadd.f32 %v2680, %v2749
        %v2751 = vpop.f32.mrf.mxu0
        %2752 = vdwg.mxu0
        %2753 = vmatprep.subr.mxu0 0.0
        %2754 = vmatpush1.msra.mxu0 %v946
        %2755 = vmatprep.subr.mxu0 0.0
        %2756 = vmatpush1.msra.mxu0 %v945
        %2757 = vmatprep.subr.mxu0 0.0
        %2758 = vmatpush1.msra.mxu0 %v944
        %2759 = vmatprep.subr.mxu0 0.0
        %2760 = vmatpush1.msra.mxu0 %v943
        %2761 = vmatprep.subr.mxu0 0.0
        %2762 = vmatpush1.msra.mxu0 %v942
        %2763 = vmatprep.subr.mxu0 0.0
        %2764 = vmatpush1.msra.mxu0 %v941
        %2765 = vmatprep.subr.mxu0 0.0
        %2766 = vmatpush1.msra.mxu0 %v940
        %2767 = vmatprep.subr.mxu0 0.0
        %2768 = vmatpush1.msra.mxu0 %v939
        %2769 = vmatprep.subr.mxu0 0.0
        %2770 = vmatpush1.msra.mxu0 %v938
        %2771 = vmatprep.subr.mxu0 0.0
        %2772 = vmatpush1.msra.mxu0 %v937
        %2773 = vmatprep.subr.mxu0 0.0
        %2774 = vmatpush1.msra.mxu0 %v936
        %2775 = vmatprep.subr.mxu0 0.0
        %2776 = vmatpush1.msra.mxu0 %v935
        %2777 = vmatprep.subr.mxu0 0.0
        %2778 = vmatpush1.msra.mxu0 %v934
        %2779 = vmatprep.subr.mxu0 0.0
        %2780 = vmatpush1.msra.mxu0 %v933
        %2781 = vmatprep.subr.mxu0 0.0
        %2782 = vmatpush1.msra.mxu0 %v932
        %2783 = vmatprep.subr.mxu0 0.0
        %2784 = vmatpush1.msra.mxu0 %v931
        %2785 = vmatprep.subr.mxu0 0.0
        %2786 = vmatpush2.msra.mxu0 %v962
        %2787 = vmatprep.subr.mxu0 0.0
        %2788 = vmatpush2.msra.mxu0 %v961
        %2789 = vmatprep.subr.mxu0 0.0
        %2790 = vmatpush2.msra.mxu0 %v960
        %2791 = vmatprep.subr.mxu0 0.0
        %2792 = vmatpush2.msra.mxu0 %v959
        %2793 = vmatprep.subr.mxu0 0.0
        %2794 = vmatpush2.msra.mxu0 %v958
        %2795 = vmatprep.subr.mxu0 0.0
        %2796 = vmatpush2.msra.mxu0 %v957
        %2797 = vmatprep.subr.mxu0 0.0
        %2798 = vmatpush2.msra.mxu0 %v956
        %2799 = vmatprep.subr.mxu0 0.0
        %2800 = vmatpush2.msra.mxu0 %v955
        %2801 = vmatprep.subr.mxu0 0.0
        %2802 = vmatpush2.msra.mxu0 %v954
        %2803 = vmatprep.subr.mxu0 0.0
        %2804 = vmatpush2.msra.mxu0 %v953
        %2805 = vmatprep.subr.mxu0 0.0
        %2806 = vmatpush2.msra.mxu0 %v952
        %2807 = vmatprep.subr.mxu0 0.0
        %2808 = vmatpush2.msra.mxu0 %v951
        %2809 = vmatprep.subr.mxu0 0.0
        %2810 = vmatpush2.msra.mxu0 %v950
        %2811 = vmatprep.subr.mxu0 0.0
        %2812 = vmatpush2.msra.mxu0 %v949
        %2813 = vmatprep.subr.mxu0 0.0
        %2814 = vmatpush2.msra.mxu0 %v948
        %2815 = vmatprep.subr.mxu0 0.0
        %2816 = vmatpush2.msra.mxu0 %v947
        %2817 = vmatprep.mubr.f32.mxu0 %v238
        %2818 = vmatmul.mubr.f32.gmra.mxu0 %v237
        %v2819 = vpop.f32.mrf.mxu0
        %v2820 = vadd.f32 %v2750, %v2819
        %v2821 = vpop.f32.mrf.mxu0
        %2822 = vdwg.mxu0
        %2823 = vmatprep.subr.mxu0 0.0
        %2824 = vmatpush1.msra.mxu0 %v978
        %2825 = vmatprep.subr.mxu0 0.0
        %2826 = vmatpush1.msra.mxu0 %v977
        %2827 = vmatprep.subr.mxu0 0.0
        %2828 = vmatpush1.msra.mxu0 %v976
        %2829 = vmatprep.subr.mxu0 0.0
        %2830 = vmatpush1.msra.mxu0 %v975
        %2831 = vmatprep.subr.mxu0 0.0
        %2832 = vmatpush1.msra.mxu0 %v974
        %2833 = vmatprep.subr.mxu0 0.0
        %2834 = vmatpush1.msra.mxu0 %v973
        %2835 = vmatprep.subr.mxu0 0.0
        %2836 = vmatpush1.msra.mxu0 %v972
        %2837 = vmatprep.subr.mxu0 0.0
        %2838 = vmatpush1.msra.mxu0 %v971
        %2839 = vmatprep.subr.mxu0 0.0
        %2840 = vmatpush1.msra.mxu0 %v970
        %2841 = vmatprep.subr.mxu0 0.0
        %2842 = vmatpush1.msra.mxu0 %v969
        %2843 = vmatprep.subr.mxu0 0.0
        %2844 = vmatpush1.msra.mxu0 %v968
        %2845 = vmatprep.subr.mxu0 0.0
        %2846 = vmatpush1.msra.mxu0 %v967
        %2847 = vmatprep.subr.mxu0 0.0
        %2848 = vmatpush1.msra.mxu0 %v966
        %2849 = vmatprep.subr.mxu0 0.0
        %2850 = vmatpush1.msra.mxu0 %v965
        %2851 = vmatprep.subr.mxu0 0.0
        %2852 = vmatpush1.msra.mxu0 %v964
        %2853 = vmatprep.subr.mxu0 0.0
        %2854 = vmatpush1.msra.mxu0 %v963
        %2855 = vmatprep.subr.mxu0 0.0
        %2856 = vmatpush2.msra.mxu0 %v994
        %2857 = vmatprep.subr.mxu0 0.0
        %2858 = vmatpush2.msra.mxu0 %v993
        %2859 = vmatprep.subr.mxu0 0.0
        %2860 = vmatpush2.msra.mxu0 %v992
        %2861 = vmatprep.subr.mxu0 0.0
        %2862 = vmatpush2.msra.mxu0 %v991
        %2863 = vmatprep.subr.mxu0 0.0
        %2864 = vmatpush2.msra.mxu0 %v990
        %2865 = vmatprep.subr.mxu0 0.0
        %2866 = vmatpush2.msra.mxu0 %v989
        %2867 = vmatprep.subr.mxu0 0.0
        %2868 = vmatpush2.msra.mxu0 %v988
        %2869 = vmatprep.subr.mxu0 0.0
        %2870 = vmatpush2.msra.mxu0 %v987
        %2871 = vmatprep.subr.mxu0 0.0
        %2872 = vmatpush2.msra.mxu0 %v986
        %2873 = vmatprep.subr.mxu0 0.0
        %2874 = vmatpush2.msra.mxu0 %v985
        %2875 = vmatprep.subr.mxu0 0.0
        %2876 = vmatpush2.msra.mxu0 %v984
        %2877 = vmatprep.subr.mxu0 0.0
        %2878 = vmatpush2.msra.mxu0 %v983
        %2879 = vmatprep.subr.mxu0 0.0
        %2880 = vmatpush2.msra.mxu0 %v982
        %2881 = vmatprep.subr.mxu0 0.0
        %2882 = vmatpush2.msra.mxu0 %v981
        %2883 = vmatprep.subr.mxu0 0.0
        %2884 = vmatpush2.msra.mxu0 %v980
        %2885 = vmatprep.subr.mxu0 0.0
        %2886 = vmatpush2.msra.mxu0 %v979
        %2887 = vmatprep.mubr.f32.mxu0 %v240
        %2888 = vmatmul.mubr.f32.gmra.mxu0 %v239
        %v2889 = vpop.f32.mrf.mxu0
        %v2890 = vadd.f32 %v2820, %v2889
        %v2891 = vpop.f32.mrf.mxu0
        %2892 = vdwg.mxu0
        %2893 = vmatprep.subr.mxu0 0.0
        %2894 = vmatpush1.msra.mxu0 %v1010
        %2895 = vmatprep.subr.mxu0 0.0
        %2896 = vmatpush1.msra.mxu0 %v1009
        %2897 = vmatprep.subr.mxu0 0.0
        %2898 = vmatpush1.msra.mxu0 %v1008
        %2899 = vmatprep.subr.mxu0 0.0
        %2900 = vmatpush1.msra.mxu0 %v1007
        %2901 = vmatprep.subr.mxu0 0.0
        %2902 = vmatpush1.msra.mxu0 %v1006
        %2903 = vmatprep.subr.mxu0 0.0
        %2904 = vmatpush1.msra.mxu0 %v1005
        %2905 = vmatprep.subr.mxu0 0.0
        %2906 = vmatpush1.msra.mxu0 %v1004
        %2907 = vmatprep.subr.mxu0 0.0
        %2908 = vmatpush1.msra.mxu0 %v1003
        %2909 = vmatprep.subr.mxu0 0.0
        %2910 = vmatpush1.msra.mxu0 %v1002
        %2911 = vmatprep.subr.mxu0 0.0
        %2912 = vmatpush1.msra.mxu0 %v1001
        %2913 = vmatprep.subr.mxu0 0.0
        %2914 = vmatpush1.msra.mxu0 %v1000
        %2915 = vmatprep.subr.mxu0 0.0
        %2916 = vmatpush1.msra.mxu0 %v999
        %2917 = vmatprep.subr.mxu0 0.0
        %2918 = vmatpush1.msra.mxu0 %v998
        %2919 = vmatprep.subr.mxu0 0.0
        %2920 = vmatpush1.msra.mxu0 %v997
        %2921 = vmatprep.subr.mxu0 0.0
        %2922 = vmatpush1.msra.mxu0 %v996
        %2923 = vmatprep.subr.mxu0 0.0
        %2924 = vmatpush1.msra.mxu0 %v995
        %2925 = vmatprep.subr.mxu0 0.0
        %2926 = vmatpush2.msra.mxu0 %v1026
        %2927 = vmatprep.subr.mxu0 0.0
        %2928 = vmatpush2.msra.mxu0 %v1025
        %2929 = vmatprep.subr.mxu0 0.0
        %2930 = vmatpush2.msra.mxu0 %v1024
        %2931 = vmatprep.subr.mxu0 0.0
        %2932 = vmatpush2.msra.mxu0 %v1023
        %2933 = vmatprep.subr.mxu0 0.0
        %2934 = vmatpush2.msra.mxu0 %v1022
        %2935 = vmatprep.subr.mxu0 0.0
        %2936 = vmatpush2.msra.mxu0 %v1021
        %2937 = vmatprep.subr.mxu0 0.0
        %2938 = vmatpush2.msra.mxu0 %v1020
        %2939 = vmatprep.subr.mxu0 0.0
        %2940 = vmatpush2.msra.mxu0 %v1019
        %2941 = vmatprep.subr.mxu0 0.0
        %2942 = vmatpush2.msra.mxu0 %v1018
        %2943 = vmatprep.subr.mxu0 0.0
        %2944 = vmatpush2.msra.mxu0 %v1017
        %2945 = vmatprep.subr.mxu0 0.0
        %2946 = vmatpush2.msra.mxu0 %v1016
        %2947 = vmatprep.subr.mxu0 0.0
        %2948 = vmatpush2.msra.mxu0 %v1015
        %2949 = vmatprep.subr.mxu0 0.0
        %2950 = vmatpush2.msra.mxu0 %v1014
        %2951 = vmatprep.subr.mxu0 0.0
        %2952 = vmatpush2.msra.mxu0 %v1013
        %2953 = vmatprep.subr.mxu0 0.0
        %2954 = vmatpush2.msra.mxu0 %v1012
        %2955 = vmatprep.subr.mxu0 0.0
        %2956 = vmatpush2.msra.mxu0 %v1011
        %2957 = vmatprep.mubr.f32.mxu0 %v242
        %2958 = vmatmul.mubr.f32.gmra.mxu0 %v241
        %v2959 = vpop.f32.mrf.mxu0
        %v2960 = vadd.f32 %v2890, %v2959
        %v2961 = vpop.f32.mrf.mxu0
        %2962 = vdwg.mxu0
        %2963 = vmatprep.subr.mxu0 0.0
        %2964 = vmatpush1.msra.mxu0 %v1042
        %2965 = vmatprep.subr.mxu0 0.0
        %2966 = vmatpush1.msra.mxu0 %v1041
        %2967 = vmatprep.subr.mxu0 0.0
        %2968 = vmatpush1.msra.mxu0 %v1040
        %2969 = vmatprep.subr.mxu0 0.0
        %2970 = vmatpush1.msra.mxu0 %v1039
        %2971 = vmatprep.subr.mxu0 0.0
        %2972 = vmatpush1.msra.mxu0 %v1038
        %2973 = vmatprep.subr.mxu0 0.0
        %2974 = vmatpush1.msra.mxu0 %v1037
        %2975 = vmatprep.subr.mxu0 0.0
        %2976 = vmatpush1.msra.mxu0 %v1036
        %2977 = vmatprep.subr.mxu0 0.0
        %2978 = vmatpush1.msra.mxu0 %v1035
        %2979 = vmatprep.subr.mxu0 0.0
        %2980 = vmatpush1.msra.mxu0 %v1034
        %2981 = vmatprep.subr.mxu0 0.0
        %2982 = vmatpush1.msra.mxu0 %v1033
        %2983 = vmatprep.subr.mxu0 0.0
        %2984 = vmatpush1.msra.mxu0 %v1032
        %2985 = vmatprep.subr.mxu0 0.0
        %2986 = vmatpush1.msra.mxu0 %v1031
        %2987 = vmatprep.subr.mxu0 0.0
        %2988 = vmatpush1.msra.mxu0 %v1030
        %2989 = vmatprep.subr.mxu0 0.0
        %2990 = vmatpush1.msra.mxu0 %v1029
        %2991 = vmatprep.subr.mxu0 0.0
        %2992 = vmatpush1.msra.mxu0 %v1028
        %2993 = vmatprep.subr.mxu0 0.0
        %2994 = vmatpush1.msra.mxu0 %v1027
        %2995 = vmatprep.subr.mxu0 0.0
        %2996 = vmatpush2.msra.mxu0 %v1058
        %2997 = vmatprep.subr.mxu0 0.0
        %2998 = vmatpush2.msra.mxu0 %v1057
        %2999 = vmatprep.subr.mxu0 0.0
        %3000 = vmatpush2.msra.mxu0 %v1056
        %3001 = vmatprep.subr.mxu0 0.0
        %3002 = vmatpush2.msra.mxu0 %v1055
        %3003 = vmatprep.subr.mxu0 0.0
        %3004 = vmatpush2.msra.mxu0 %v1054
        %3005 = vmatprep.subr.mxu0 0.0
        %3006 = vmatpush2.msra.mxu0 %v1053
        %3007 = vmatprep.subr.mxu0 0.0
        %3008 = vmatpush2.msra.mxu0 %v1052
        %3009 = vmatprep.subr.mxu0 0.0
        %3010 = vmatpush2.msra.mxu0 %v1051
        %3011 = vmatprep.subr.mxu0 0.0
        %3012 = vmatpush2.msra.mxu0 %v1050
        %3013 = vmatprep.subr.mxu0 0.0
        %3014 = vmatpush2.msra.mxu0 %v1049
        %3015 = vmatprep.subr.mxu0 0.0
        %3016 = vmatpush2.msra.mxu0 %v1048
        %3017 = vmatprep.subr.mxu0 0.0
        %3018 = vmatpush2.msra.mxu0 %v1047
        %3019 = vmatprep.subr.mxu0 0.0
        %3020 = vmatpush2.msra.mxu0 %v1046
        %3021 = vmatprep.subr.mxu0 0.0
        %3022 = vmatpush2.msra.mxu0 %v1045
        %3023 = vmatprep.subr.mxu0 0.0
        %3024 = vmatpush2.msra.mxu0 %v1044
        %3025 = vmatprep.subr.mxu0 0.0
        %3026 = vmatpush2.msra.mxu0 %v1043
        %3027 = vmatprep.mubr.f32.mxu0 %v244
        %3028 = vmatmul.mubr.f32.gmra.mxu0 %v243
        %v3029 = vpop.f32.mrf.mxu0
        %v3030 = vadd.f32 %v2960, %v3029
        %v3031 = vpop.f32.mrf.mxu0
        %3032 = vdwg.mxu0
        %3033 = vmatprep.subr.mxu0 0.0
        %3034 = vmatpush1.msra.mxu0 %v1074
        %3035 = vmatprep.subr.mxu0 0.0
        %3036 = vmatpush1.msra.mxu0 %v1073
        %3037 = vmatprep.subr.mxu0 0.0
        %3038 = vmatpush1.msra.mxu0 %v1072
        %3039 = vmatprep.subr.mxu0 0.0
        %3040 = vmatpush1.msra.mxu0 %v1071
        %3041 = vmatprep.subr.mxu0 0.0
        %3042 = vmatpush1.msra.mxu0 %v1070
        %3043 = vmatprep.subr.mxu0 0.0
        %3044 = vmatpush1.msra.mxu0 %v1069
        %3045 = vmatprep.subr.mxu0 0.0
        %3046 = vmatpush1.msra.mxu0 %v1068
        %3047 = vmatprep.subr.mxu0 0.0
        %3048 = vmatpush1.msra.mxu0 %v1067
        %3049 = vmatprep.subr.mxu0 0.0
        %3050 = vmatpush1.msra.mxu0 %v1066
        %3051 = vmatprep.subr.mxu0 0.0
        %3052 = vmatpush1.msra.mxu0 %v1065
        %3053 = vmatprep.subr.mxu0 0.0
        %3054 = vmatpush1.msra.mxu0 %v1064
        %3055 = vmatprep.subr.mxu0 0.0
        %3056 = vmatpush1.msra.mxu0 %v1063
        %3057 = vmatprep.subr.mxu0 0.0
        %3058 = vmatpush1.msra.mxu0 %v1062
        %3059 = vmatprep.subr.mxu0 0.0
        %3060 = vmatpush1.msra.mxu0 %v1061
        %3061 = vmatprep.subr.mxu0 0.0
        %3062 = vmatpush1.msra.mxu0 %v1060
        %3063 = vmatprep.subr.mxu0 0.0
        %3064 = vmatpush1.msra.mxu0 %v1059
        %3065 = vmatprep.subr.mxu0 0.0
        %3066 = vmatpush2.msra.mxu0 %v1090
        %3067 = vmatprep.subr.mxu0 0.0
        %3068 = vmatpush2.msra.mxu0 %v1089
        %3069 = vmatprep.subr.mxu0 0.0
        %3070 = vmatpush2.msra.mxu0 %v1088
        %3071 = vmatprep.subr.mxu0 0.0
        %3072 = vmatpush2.msra.mxu0 %v1087
        %3073 = vmatprep.subr.mxu0 0.0
        %3074 = vmatpush2.msra.mxu0 %v1086
        %3075 = vmatprep.subr.mxu0 0.0
        %3076 = vmatpush2.msra.mxu0 %v1085
        %3077 = vmatprep.subr.mxu0 0.0
        %3078 = vmatpush2.msra.mxu0 %v1084
        %3079 = vmatprep.subr.mxu0 0.0
        %3080 = vmatpush2.msra.mxu0 %v1083
        %3081 = vmatprep.subr.mxu0 0.0
        %3082 = vmatpush2.msra.mxu0 %v1082
        %3083 = vmatprep.subr.mxu0 0.0
        %3084 = vmatpush2.msra.mxu0 %v1081
        %3085 = vmatprep.subr.mxu0 0.0
        %3086 = vmatpush2.msra.mxu0 %v1080
        %3087 = vmatprep.subr.mxu0 0.0
        %3088 = vmatpush2.msra.mxu0 %v1079
        %3089 = vmatprep.subr.mxu0 0.0
        %3090 = vmatpush2.msra.mxu0 %v1078
        %3091 = vmatprep.subr.mxu0 0.0
        %3092 = vmatpush2.msra.mxu0 %v1077
        %3093 = vmatprep.subr.mxu0 0.0
        %3094 = vmatpush2.msra.mxu0 %v1076
        %3095 = vmatprep.subr.mxu0 0.0
        %3096 = vmatpush2.msra.mxu0 %v1075
        %3097 = vmatprep.mubr.f32.mxu0 %v246
        %3098 = vmatmul.mubr.f32.gmra.mxu0 %v245
        %v3099 = vpop.f32.mrf.mxu0
        %v3100 = vadd.f32 %v3030, %v3099
        %v3101 = vpop.f32.mrf.mxu0
        %3102 = vdwg.mxu0
        %3103 = vmatprep.subr.mxu0 0.0
        %3104 = vmatpush1.msra.mxu0 %v1106
        %3105 = vmatprep.subr.mxu0 0.0
        %3106 = vmatpush1.msra.mxu0 %v1105
        %3107 = vmatprep.subr.mxu0 0.0
        %3108 = vmatpush1.msra.mxu0 %v1104
        %3109 = vmatprep.subr.mxu0 0.0
        %3110 = vmatpush1.msra.mxu0 %v1103
        %3111 = vmatprep.subr.mxu0 0.0
        %3112 = vmatpush1.msra.mxu0 %v1102
        %3113 = vmatprep.subr.mxu0 0.0
        %3114 = vmatpush1.msra.mxu0 %v1101
        %3115 = vmatprep.subr.mxu0 0.0
        %3116 = vmatpush1.msra.mxu0 %v1100
        %3117 = vmatprep.subr.mxu0 0.0
        %3118 = vmatpush1.msra.mxu0 %v1099
        %3119 = vmatprep.subr.mxu0 0.0
        %3120 = vmatpush1.msra.mxu0 %v1098
        %3121 = vmatprep.subr.mxu0 0.0
        %3122 = vmatpush1.msra.mxu0 %v1097
        %3123 = vmatprep.subr.mxu0 0.0
        %3124 = vmatpush1.msra.mxu0 %v1096
        %3125 = vmatprep.subr.mxu0 0.0
        %3126 = vmatpush1.msra.mxu0 %v1095
        %3127 = vmatprep.subr.mxu0 0.0
        %3128 = vmatpush1.msra.mxu0 %v1094
        %3129 = vmatprep.subr.mxu0 0.0
        %3130 = vmatpush1.msra.mxu0 %v1093
        %3131 = vmatprep.subr.mxu0 0.0
        %3132 = vmatpush1.msra.mxu0 %v1092
        %3133 = vmatprep.subr.mxu0 0.0
        %3134 = vmatpush1.msra.mxu0 %v1091
        %3135 = vmatprep.subr.mxu0 0.0
        %3136 = vmatpush2.msra.mxu0 %v1122
        %3137 = vmatprep.subr.mxu0 0.0
        %3138 = vmatpush2.msra.mxu0 %v1121
        %3139 = vmatprep.subr.mxu0 0.0
        %3140 = vmatpush2.msra.mxu0 %v1120
        %3141 = vmatprep.subr.mxu0 0.0
        %3142 = vmatpush2.msra.mxu0 %v1119
        %3143 = vmatprep.subr.mxu0 0.0
        %3144 = vmatpush2.msra.mxu0 %v1118
        %3145 = vmatprep.subr.mxu0 0.0
        %3146 = vmatpush2.msra.mxu0 %v1117
        %3147 = vmatprep.subr.mxu0 0.0
        %3148 = vmatpush2.msra.mxu0 %v1116
        %3149 = vmatprep.subr.mxu0 0.0
        %3150 = vmatpush2.msra.mxu0 %v1115
        %3151 = vmatprep.subr.mxu0 0.0
        %3152 = vmatpush2.msra.mxu0 %v1114
        %3153 = vmatprep.subr.mxu0 0.0
        %3154 = vmatpush2.msra.mxu0 %v1113
        %3155 = vmatprep.subr.mxu0 0.0
        %3156 = vmatpush2.msra.mxu0 %v1112
        %3157 = vmatprep.subr.mxu0 0.0
        %3158 = vmatpush2.msra.mxu0 %v1111
        %3159 = vmatprep.subr.mxu0 0.0
        %3160 = vmatpush2.msra.mxu0 %v1110
        %3161 = vmatprep.subr.mxu0 0.0
        %3162 = vmatpush2.msra.mxu0 %v1109
        %3163 = vmatprep.subr.mxu0 0.0
        %3164 = vmatpush2.msra.mxu0 %v1108
        %3165 = vmatprep.subr.mxu0 0.0
        %3166 = vmatpush2.msra.mxu0 %v1107
        %3167 = vmatprep.mubr.f32.mxu0 %v248
        %3168 = vmatmul.mubr.f32.gmra.mxu0 %v247
        %v3169 = vpop.f32.mrf.mxu0
        %v3170 = vadd.f32 %v3100, %v3169
        %v3171 = vpop.f32.mrf.mxu0
        %3172 = vdwg.mxu0
        %3173 = vmatprep.subr.mxu0 0.0
        %3174 = vmatpush1.msra.mxu0 %v1138
        %3175 = vmatprep.subr.mxu0 0.0
        %3176 = vmatpush1.msra.mxu0 %v1137
        %3177 = vmatprep.subr.mxu0 0.0
        %3178 = vmatpush1.msra.mxu0 %v1136
        %3179 = vmatprep.subr.mxu0 0.0
        %3180 = vmatpush1.msra.mxu0 %v1135
        %3181 = vmatprep.subr.mxu0 0.0
        %3182 = vmatpush1.msra.mxu0 %v1134
        %3183 = vmatprep.subr.mxu0 0.0
        %3184 = vmatpush1.msra.mxu0 %v1133
        %3185 = vmatprep.subr.mxu0 0.0
        %3186 = vmatpush1.msra.mxu0 %v1132
        %3187 = vmatprep.subr.mxu0 0.0
        %3188 = vmatpush1.msra.mxu0 %v1131
        %3189 = vmatprep.subr.mxu0 0.0
        %3190 = vmatpush1.msra.mxu0 %v1130
        %3191 = vmatprep.subr.mxu0 0.0
        %3192 = vmatpush1.msra.mxu0 %v1129
        %3193 = vmatprep.subr.mxu0 0.0
        %3194 = vmatpush1.msra.mxu0 %v1128
        %3195 = vmatprep.subr.mxu0 0.0
        %3196 = vmatpush1.msra.mxu0 %v1127
        %3197 = vmatprep.subr.mxu0 0.0
        %3198 = vmatpush1.msra.mxu0 %v1126
        %3199 = vmatprep.subr.mxu0 0.0
        %3200 = vmatpush1.msra.mxu0 %v1125
        %3201 = vmatprep.subr.mxu0 0.0
        %3202 = vmatpush1.msra.mxu0 %v1124
        %3203 = vmatprep.subr.mxu0 0.0
        %3204 = vmatpush1.msra.mxu0 %v1123
        %3205 = vmatprep.subr.mxu0 0.0
        %3206 = vmatpush2.msra.mxu0 %v1154
        %3207 = vmatprep.subr.mxu0 0.0
        %3208 = vmatpush2.msra.mxu0 %v1153
        %3209 = vmatprep.subr.mxu0 0.0
        %3210 = vmatpush2.msra.mxu0 %v1152
        %3211 = vmatprep.subr.mxu0 0.0
        %3212 = vmatpush2.msra.mxu0 %v1151
        %3213 = vmatprep.subr.mxu0 0.0
        %3214 = vmatpush2.msra.mxu0 %v1150
        %3215 = vmatprep.subr.mxu0 0.0
        %3216 = vmatpush2.msra.mxu0 %v1149
        %3217 = vmatprep.subr.mxu0 0.0
        %3218 = vmatpush2.msra.mxu0 %v1148
        %3219 = vmatprep.subr.mxu0 0.0
        %3220 = vmatpush2.msra.mxu0 %v1147
        %3221 = vmatprep.subr.mxu0 0.0
        %3222 = vmatpush2.msra.mxu0 %v1146
        %3223 = vmatprep.subr.mxu0 0.0
        %3224 = vmatpush2.msra.mxu0 %v1145
        %3225 = vmatprep.subr.mxu0 0.0
        %3226 = vmatpush2.msra.mxu0 %v1144
        %3227 = vmatprep.subr.mxu0 0.0
        %3228 = vmatpush2.msra.mxu0 %v1143
        %3229 = vmatprep.subr.mxu0 0.0
        %3230 = vmatpush2.msra.mxu0 %v1142
        %3231 = vmatprep.subr.mxu0 0.0
        %3232 = vmatpush2.msra.mxu0 %v1141
        %3233 = vmatprep.subr.mxu0 0.0
        %3234 = vmatpush2.msra.mxu0 %v1140
        %3235 = vmatprep.subr.mxu0 0.0
        %3236 = vmatpush2.msra.mxu0 %v1139
        %3237 = vmatprep.mubr.f32.mxu0 %v250
        %3238 = vmatmul.mubr.f32.gmra.mxu0 %v249
        %v3239 = vpop.f32.mrf.mxu0
        %v3240 = vadd.f32 %v3170, %v3239
        %v3241 = vpop.f32.mrf.mxu0
        %3242 = vdwg.mxu0
        %3243 = vmatprep.subr.mxu0 0.0
        %3244 = vmatpush1.msra.mxu0 %v1170
        %3245 = vmatprep.subr.mxu0 0.0
        %3246 = vmatpush1.msra.mxu0 %v1169
        %3247 = vmatprep.subr.mxu0 0.0
        %3248 = vmatpush1.msra.mxu0 %v1168
        %3249 = vmatprep.subr.mxu0 0.0
        %3250 = vmatpush1.msra.mxu0 %v1167
        %3251 = vmatprep.subr.mxu0 0.0
        %3252 = vmatpush1.msra.mxu0 %v1166
        %3253 = vmatprep.subr.mxu0 0.0
        %3254 = vmatpush1.msra.mxu0 %v1165
        %3255 = vmatprep.subr.mxu0 0.0
        %3256 = vmatpush1.msra.mxu0 %v1164
        %3257 = vmatprep.subr.mxu0 0.0
        %3258 = vmatpush1.msra.mxu0 %v1163
        %3259 = vmatprep.subr.mxu0 0.0
        %3260 = vmatpush1.msra.mxu0 %v1162
        %3261 = vmatprep.subr.mxu0 0.0
        %3262 = vmatpush1.msra.mxu0 %v1161
        %3263 = vmatprep.subr.mxu0 0.0
        %3264 = vmatpush1.msra.mxu0 %v1160
        %3265 = vmatprep.subr.mxu0 0.0
        %3266 = vmatpush1.msra.mxu0 %v1159
        %3267 = vmatprep.subr.mxu0 0.0
        %3268 = vmatpush1.msra.mxu0 %v1158
        %3269 = vmatprep.subr.mxu0 0.0
        %3270 = vmatpush1.msra.mxu0 %v1157
        %3271 = vmatprep.subr.mxu0 0.0
        %3272 = vmatpush1.msra.mxu0 %v1156
        %3273 = vmatprep.subr.mxu0 0.0
        %3274 = vmatpush1.msra.mxu0 %v1155
        %3275 = vmatprep.subr.mxu0 0.0
        %3276 = vmatpush2.msra.mxu0 %v1186
        %3277 = vmatprep.subr.mxu0 0.0
        %3278 = vmatpush2.msra.mxu0 %v1185
        %3279 = vmatprep.subr.mxu0 0.0
        %3280 = vmatpush2.msra.mxu0 %v1184
        %3281 = vmatprep.subr.mxu0 0.0
        %3282 = vmatpush2.msra.mxu0 %v1183
        %3283 = vmatprep.subr.mxu0 0.0
        %3284 = vmatpush2.msra.mxu0 %v1182
        %3285 = vmatprep.subr.mxu0 0.0
        %3286 = vmatpush2.msra.mxu0 %v1181
        %3287 = vmatprep.subr.mxu0 0.0
        %3288 = vmatpush2.msra.mxu0 %v1180
        %3289 = vmatprep.subr.mxu0 0.0
        %3290 = vmatpush2.msra.mxu0 %v1179
        %3291 = vmatprep.subr.mxu0 0.0
        %3292 = vmatpush2.msra.mxu0 %v1178
        %3293 = vmatprep.subr.mxu0 0.0
        %3294 = vmatpush2.msra.mxu0 %v1177
        %3295 = vmatprep.subr.mxu0 0.0
        %3296 = vmatpush2.msra.mxu0 %v1176
        %3297 = vmatprep.subr.mxu0 0.0
        %3298 = vmatpush2.msra.mxu0 %v1175
        %3299 = vmatprep.subr.mxu0 0.0
        %3300 = vmatpush2.msra.mxu0 %v1174
        %3301 = vmatprep.subr.mxu0 0.0
        %3302 = vmatpush2.msra.mxu0 %v1173
        %3303 = vmatprep.subr.mxu0 0.0
        %3304 = vmatpush2.msra.mxu0 %v1172
        %3305 = vmatprep.subr.mxu0 0.0
        %3306 = vmatpush2.msra.mxu0 %v1171
        %3307 = vmatprep.mubr.f32.mxu0 %v252
        %3308 = vmatmul.mubr.f32.gmra.mxu0 %v251
        %v3309 = vpop.f32.mrf.mxu0
        %v3310 = vadd.f32 %v3240, %v3309
        %v3311 = vpop.f32.mrf.mxu0
        %3312 = vdwg.mxu0
        %3313 = vmatprep.subr.mxu0 0.0
        %3314 = vmatpush1.msra.mxu0 %v1202
        %3315 = vmatprep.subr.mxu0 0.0
        %3316 = vmatpush1.msra.mxu0 %v1201
        %3317 = vmatprep.subr.mxu0 0.0
        %3318 = vmatpush1.msra.mxu0 %v1200
        %3319 = vmatprep.subr.mxu0 0.0
        %3320 = vmatpush1.msra.mxu0 %v1199
        %3321 = vmatprep.subr.mxu0 0.0
        %3322 = vmatpush1.msra.mxu0 %v1198
        %3323 = vmatprep.subr.mxu0 0.0
        %3324 = vmatpush1.msra.mxu0 %v1197
        %3325 = vmatprep.subr.mxu0 0.0
        %3326 = vmatpush1.msra.mxu0 %v1196
        %3327 = vmatprep.subr.mxu0 0.0
        %3328 = vmatpush1.msra.mxu0 %v1195
        %3329 = vmatprep.subr.mxu0 0.0
        %3330 = vmatpush1.msra.mxu0 %v1194
        %3331 = vmatprep.subr.mxu0 0.0
        %3332 = vmatpush1.msra.mxu0 %v1193
        %3333 = vmatprep.subr.mxu0 0.0
        %3334 = vmatpush1.msra.mxu0 %v1192
        %3335 = vmatprep.subr.mxu0 0.0
        %3336 = vmatpush1.msra.mxu0 %v1191
        %3337 = vmatprep.subr.mxu0 0.0
        %3338 = vmatpush1.msra.mxu0 %v1190
        %3339 = vmatprep.subr.mxu0 0.0
        %3340 = vmatpush1.msra.mxu0 %v1189
        %3341 = vmatprep.subr.mxu0 0.0
        %3342 = vmatpush1.msra.mxu0 %v1188
        %3343 = vmatprep.subr.mxu0 0.0
        %3344 = vmatpush1.msra.mxu0 %v1187
        %3345 = vmatprep.subr.mxu0 0.0
        %3346 = vmatpush2.msra.mxu0 %v1218
        %3347 = vmatprep.subr.mxu0 0.0
        %3348 = vmatpush2.msra.mxu0 %v1217
        %3349 = vmatprep.subr.mxu0 0.0
        %3350 = vmatpush2.msra.mxu0 %v1216
        %3351 = vmatprep.subr.mxu0 0.0
        %3352 = vmatpush2.msra.mxu0 %v1215
        %3353 = vmatprep.subr.mxu0 0.0
        %3354 = vmatpush2.msra.mxu0 %v1214
        %3355 = vmatprep.subr.mxu0 0.0
        %3356 = vmatpush2.msra.mxu0 %v1213
        %3357 = vmatprep.subr.mxu0 0.0
        %3358 = vmatpush2.msra.mxu0 %v1212
        %3359 = vmatprep.subr.mxu0 0.0
        %3360 = vmatpush2.msra.mxu0 %v1211
        %3361 = vmatprep.subr.mxu0 0.0
        %3362 = vmatpush2.msra.mxu0 %v1210
        %3363 = vmatprep.subr.mxu0 0.0
        %3364 = vmatpush2.msra.mxu0 %v1209
        %3365 = vmatprep.subr.mxu0 0.0
        %3366 = vmatpush2.msra.mxu0 %v1208
        %3367 = vmatprep.subr.mxu0 0.0
        %3368 = vmatpush2.msra.mxu0 %v1207
        %3369 = vmatprep.subr.mxu0 0.0
        %3370 = vmatpush2.msra.mxu0 %v1206
        %3371 = vmatprep.subr.mxu0 0.0
        %3372 = vmatpush2.msra.mxu0 %v1205
        %3373 = vmatprep.subr.mxu0 0.0
        %3374 = vmatpush2.msra.mxu0 %v1204
        %3375 = vmatprep.subr.mxu0 0.0
        %3376 = vmatpush2.msra.mxu0 %v1203
        %3377 = vmatprep.mubr.f32.mxu0 %v254
        %3378 = vmatmul.mubr.f32.gmra.mxu0 %v253
        %v3379 = vpop.f32.mrf.mxu0
        %v3380 = vadd.f32 %v3310, %v3379
        %v3381 = vpop.f32.mrf.mxu0
        %3382 = vdwg.mxu0
        %3383 = vmatprep.subr.mxu0 0.0
        %3384 = vmatpush1.msra.mxu0 %v1234
        %3385 = vmatprep.subr.mxu0 0.0
        %3386 = vmatpush1.msra.mxu0 %v1233
        %3387 = vmatprep.subr.mxu0 0.0
        %3388 = vmatpush1.msra.mxu0 %v1232
        %3389 = vmatprep.subr.mxu0 0.0
        %3390 = vmatpush1.msra.mxu0 %v1231
        %3391 = vmatprep.subr.mxu0 0.0
        %3392 = vmatpush1.msra.mxu0 %v1230
        %3393 = vmatprep.subr.mxu0 0.0
        %3394 = vmatpush1.msra.mxu0 %v1229
        %3395 = vmatprep.subr.mxu0 0.0
        %3396 = vmatpush1.msra.mxu0 %v1228
        %3397 = vmatprep.subr.mxu0 0.0
        %3398 = vmatpush1.msra.mxu0 %v1227
        %3399 = vmatprep.subr.mxu0 0.0
        %3400 = vmatpush1.msra.mxu0 %v1226
        %3401 = vmatprep.subr.mxu0 0.0
        %3402 = vmatpush1.msra.mxu0 %v1225
        %3403 = vmatprep.subr.mxu0 0.0
        %3404 = vmatpush1.msra.mxu0 %v1224
        %3405 = vmatprep.subr.mxu0 0.0
        %3406 = vmatpush1.msra.mxu0 %v1223
        %3407 = vmatprep.subr.mxu0 0.0
        %3408 = vmatpush1.msra.mxu0 %v1222
        %3409 = vmatprep.subr.mxu0 0.0
        %3410 = vmatpush1.msra.mxu0 %v1221
        %3411 = vmatprep.subr.mxu0 0.0
        %3412 = vmatpush1.msra.mxu0 %v1220
        %3413 = vmatprep.subr.mxu0 0.0
        %3414 = vmatpush1.msra.mxu0 %v1219
        %3415 = vmatprep.subr.mxu0 0.0
        %3416 = vmatpush2.msra.mxu0 %v1250
        %3417 = vmatprep.subr.mxu0 0.0
        %3418 = vmatpush2.msra.mxu0 %v1249
        %3419 = vmatprep.subr.mxu0 0.0
        %3420 = vmatpush2.msra.mxu0 %v1248
        %3421 = vmatprep.subr.mxu0 0.0
        %3422 = vmatpush2.msra.mxu0 %v1247
        %3423 = vmatprep.subr.mxu0 0.0
        %3424 = vmatpush2.msra.mxu0 %v1246
        %3425 = vmatprep.subr.mxu0 0.0
        %3426 = vmatpush2.msra.mxu0 %v1245
        %3427 = vmatprep.subr.mxu0 0.0
        %3428 = vmatpush2.msra.mxu0 %v1244
        %3429 = vmatprep.subr.mxu0 0.0
        %3430 = vmatpush2.msra.mxu0 %v1243
        %3431 = vmatprep.subr.mxu0 0.0
        %3432 = vmatpush2.msra.mxu0 %v1242
        %3433 = vmatprep.subr.mxu0 0.0
        %3434 = vmatpush2.msra.mxu0 %v1241
        %3435 = vmatprep.subr.mxu0 0.0
        %3436 = vmatpush2.msra.mxu0 %v1240
        %3437 = vmatprep.subr.mxu0 0.0
        %3438 = vmatpush2.msra.mxu0 %v1239
        %3439 = vmatprep.subr.mxu0 0.0
        %3440 = vmatpush2.msra.mxu0 %v1238
        %3441 = vmatprep.subr.mxu0 0.0
        %3442 = vmatpush2.msra.mxu0 %v1237
        %3443 = vmatprep.subr.mxu0 0.0
        %3444 = vmatpush2.msra.mxu0 %v1236
        %3445 = vmatprep.subr.mxu0 0.0
        %3446 = vmatpush2.msra.mxu0 %v1235
        %3447 = vmatprep.mubr.f32.mxu0 %v256
        %3448 = vmatmul.mubr.f32.gmra.mxu0 %v255
        %v3449 = vpop.f32.mrf.mxu0
        %v3450 = vadd.f32 %v3380, %v3449
        %v3451 = vpop.f32.mrf.mxu0
        %3452 = vdwg.mxu0
        %3453 = vmatprep.subr.mxu0 0.0
        %3454 = vmatpush1.msra.mxu0 %v1266
        %3455 = vmatprep.subr.mxu0 0.0
        %3456 = vmatpush1.msra.mxu0 %v1265
        %3457 = vmatprep.subr.mxu0 0.0
        %3458 = vmatpush1.msra.mxu0 %v1264
        %3459 = vmatprep.subr.mxu0 0.0
        %3460 = vmatpush1.msra.mxu0 %v1263
        %3461 = vmatprep.subr.mxu0 0.0
        %3462 = vmatpush1.msra.mxu0 %v1262
        %3463 = vmatprep.subr.mxu0 0.0
        %3464 = vmatpush1.msra.mxu0 %v1261
        %3465 = vmatprep.subr.mxu0 0.0
        %3466 = vmatpush1.msra.mxu0 %v1260
        %3467 = vmatprep.subr.mxu0 0.0
        %3468 = vmatpush1.msra.mxu0 %v1259
        %3469 = vmatprep.subr.mxu0 0.0
        %3470 = vmatpush1.msra.mxu0 %v1258
        %3471 = vmatprep.subr.mxu0 0.0
        %3472 = vmatpush1.msra.mxu0 %v1257
        %3473 = vmatprep.subr.mxu0 0.0
        %3474 = vmatpush1.msra.mxu0 %v1256
        %3475 = vmatprep.subr.mxu0 0.0
        %3476 = vmatpush1.msra.mxu0 %v1255
        %3477 = vmatprep.subr.mxu0 0.0
        %3478 = vmatpush1.msra.mxu0 %v1254
        %3479 = vmatprep.subr.mxu0 0.0
        %3480 = vmatpush1.msra.mxu0 %v1253
        %3481 = vmatprep.subr.mxu0 0.0
        %3482 = vmatpush1.msra.mxu0 %v1252
        %3483 = vmatprep.subr.mxu0 0.0
        %3484 = vmatpush1.msra.mxu0 %v1251
        %3485 = vmatprep.subr.mxu0 0.0
        %3486 = vmatpush2.msra.mxu0 %v1282
        %3487 = vmatprep.subr.mxu0 0.0
        %3488 = vmatpush2.msra.mxu0 %v1281
        %3489 = vmatprep.subr.mxu0 0.0
        %3490 = vmatpush2.msra.mxu0 %v1280
        %3491 = vmatprep.subr.mxu0 0.0
        %3492 = vmatpush2.msra.mxu0 %v1279
        %3493 = vmatprep.subr.mxu0 0.0
        %3494 = vmatpush2.msra.mxu0 %v1278
        %3495 = vmatprep.subr.mxu0 0.0
        %3496 = vmatpush2.msra.mxu0 %v1277
        %3497 = vmatprep.subr.mxu0 0.0
        %3498 = vmatpush2.msra.mxu0 %v1276
        %3499 = vmatprep.subr.mxu0 0.0
        %3500 = vmatpush2.msra.mxu0 %v1275
        %3501 = vmatprep.subr.mxu0 0.0
        %3502 = vmatpush2.msra.mxu0 %v1274
        %3503 = vmatprep.subr.mxu0 0.0
        %3504 = vmatpush2.msra.mxu0 %v1273
        %3505 = vmatprep.subr.mxu0 0.0
        %3506 = vmatpush2.msra.mxu0 %v1272
        %3507 = vmatprep.subr.mxu0 0.0
        %3508 = vmatpush2.msra.mxu0 %v1271
        %3509 = vmatprep.subr.mxu0 0.0
        %3510 = vmatpush2.msra.mxu0 %v1270
        %3511 = vmatprep.subr.mxu0 0.0
        %3512 = vmatpush2.msra.mxu0 %v1269
        %3513 = vmatprep.subr.mxu0 0.0
        %3514 = vmatpush2.msra.mxu0 %v1268
        %3515 = vmatprep.subr.mxu0 0.0
        %3516 = vmatpush2.msra.mxu0 %v1267
        %3517 = vmatprep.mubr.f32.mxu0 %v258
        %3518 = vmatmul.mubr.f32.gmra.mxu0 %v257
        %v3519 = vpop.f32.mrf.mxu0
        %v3520 = vadd.f32 %v3450, %v3519
        %v3521 = vpop.f32.mrf.mxu0
        %3522 = vdwg.mxu0
        %v3523 = vadd.f32 %v194, %v3520
        %vm3524 = vcmask 818176
        %3525 = vst.msk [vmem:[#allocation2] sm:$0xff] %vm3524, %v3523
        // Predicated region
        $region37: #{linear_forward.1} parent=31 // pred_check
          %p3526 = pneg %p101
        $region38: #{linear_forward.1} parent=31 // pred_check_branch
          %3528 = sbr.rel (%p3526) target = $region40
        $region39: #{linear_forward.1} parent=31 // pred_region
          %s3530 = ssub.s32 128, 128
          %3531 = vsyncadd [#allocation3], %s3530
          %s3533 = sshll.u32 [#allocation2], 4
          %s3534 = int_to_ptr.vmem [resolvable:$true] %s3533
          %3536 = dma.vmem_to_hbm [thread:$0]  %s3534, 128, %s3, [#allocation3]
        $region40: #{linear_forward.1} parent=31 // pred_fallthru
          _
        // Predicated region
        $region41: #{linear_forward.1} parent=31 // pred_check
          %p3537 = pneg %p101
        $region42: #{linear_forward.1} parent=31 // pred_check_branch
          %3539 = sbr.rel (%p3537) target = $region44
        $region43: #{linear_forward.1} parent=31 // pred_region
          %3540 = dma.done [#allocation3], 128
        $region44: #{linear_forward.1} parent=31 // pred_fallthru
          _
      $region32: #{linear_forward.1} parent=5 // pred_fallthru
        _
      %p3541 = scmp.le.s32.totalorder 2, %s10
      // Predicated region
      $region45: #{linear_forward.1} parent=5 // pred_check
        %p3542 = pneg %p3541
      $region46: #{linear_forward.1} parent=5 // pred_check_branch
        %3544 = sbr.rel (%p3542) target = $region48
      $region47: #{linear_forward.1} parent=5 // pred_region
        %s3545 = ssub.s32 %s10, 2
      $region48: #{linear_forward.1} parent=5 // pred_fallthru
        _
    $region6: #{linear_forward.1} parent=1 // loop_footer
      %s14 = sadd.s32 1, %s10
    $region7: #{linear_forward.1} parent=1 // loop_footer_branch
      %9 = sbr.rel target = $region3
    $region8: #{linear_forward.1} parent=1 // loop_exit
      _
    %3546 = vsyncpa [#allocation3], 1
    %s3547 = scalar_lea.sflag [#allocation3], 1
    %3548 = vsyncpa %s3547, 1

</llo_original>
